<compile_context>
chip_gen: v5e
topology: v5e:2x2
jax: 0.10.0
libtpu: 0.0.40
codegen_flags: <defaults>
</compile_context>

<pallas_src>
import functools

import jax
import jax.numpy as jnp
from jax.experimental import pallas as pl
from jax.experimental.pallas import tpu as pltpu


def _resblock_kernel(x_ref, w1_ref, w2_ref, b1_ref, b2_ref, o_ref, y_ref,
                     *, H, W, C, TH):
    """One (image, row-tile) step of the fused residual block.

    x_ref  : (1, H+4, W+2, C) bf16  zero-padded input (2-row / 1-col halo),
                                    resident across the row-tile grid axis
    w*_ref : (9, C, C)        bf16  tap-leading conv weights, BN scale folded
    b*_ref : (1, C)           f32   folded conv-bias + BN bias
    o_ref  : (1, TH, W, C)    f32   output row tile
    y_ref  : (TH+2, W+2, C)   bf16  VMEM scratch: conv1 output + 1-px halo
    """
    t = pl.program_id(1)
    r0 = pl.multiple_of(t * TH, TH)          # first output row of this tile

    def conv3x3(window, rows, w_ref):
        # Per-tap accumulation: 9 small matmuls into one f32 accumulator
        # (no im2col buffer, no lane-misaligned tap writes).
        acc = None
        for k in range(9):
            dy, dx = k // 3, k % 3
            patch = window(dy, dx).reshape(rows * W, C)          # bf16
            part = jnp.dot(patch, w_ref[k],
                           preferred_element_type=jnp.float32)   # MXU bf16
            acc = part if acc is None else acc + part
        return acc                                               # (rows*W, C) f32

    # ---- conv1 + BN1 (folded) + ReLU over TH+2 rows (1-row halo for conv2).
    def x_win(dy, dx):
        return x_ref[0, pl.ds(r0 + dy, TH + 2), dx:dx + W, :]

    y = jnp.maximum(conv3x3(x_win, TH + 2, w1_ref) + b1_ref[...], 0.0)
    y_ref[:, 1:W + 1, :] = y.reshape(TH + 2, W, C).astype(jnp.bfloat16)

    # ---- zero the scratch halo every step (scratch persists per-core; do NOT
    # guard with program_id==0 -- breaks under megacore grid sharding).
    zcol = jnp.zeros((TH + 2, 1, C), jnp.bfloat16)
    y_ref[:, 0:1, :] = zcol
    y_ref[:, W + 1:W + 2, :] = zcol
    zrow = jnp.zeros((1, W + 2, C), jnp.bfloat16)

    @pl.when(t == 0)                          # conv2 zero-padding row above image
    def _():
        y_ref[0:1, :, :] = zrow

    @pl.when(t == pl.num_programs(1) - 1)     # conv2 zero-padding row below image
    def _():
        y_ref[TH + 1:TH + 2, :, :] = zrow

    # ---- conv2 + BN2 (folded) + residual + ReLU over the TH output rows.
    def y_win(dy, dx):
        return y_ref[dy:dy + TH, dx:dx + W, :]

    res = x_ref[0, pl.ds(r0 + 2, TH), 1:W + 1, :].astype(jnp.float32)
    out = conv3x3(y_win, TH, w2_ref) + b2_ref[...] + res.reshape(TH * W, C)
    o_ref[0] = jnp.maximum(out, 0.0).reshape(TH, W, C)


def residual_block(x_nchw, w1, b1c, g1, be1, rm1, rv1,
                   w2, b2c, g2, be2, rm2, rv2, eps=1e-5, tile_h=8):
    # NCHW (PyTorch) -> NHWC (channel = lane dim)
    x = jnp.transpose(x_nchw, (0, 2, 3, 1)).astype(jnp.float32)
    N, H, W, C = x.shape

    tile_h = min(tile_h, H)
    if H % tile_h != 0:
        tile_h = H                      # fallback: single row-tile per image
    n_tiles = H // tile_h

    # Fold BatchNorm (eval mode) + conv bias:
    #   scale s goes into the conv weights' output-channel axis,
    #   bias  b = (conv_bias - running_mean) * s + beta  is added in-kernel.
    s1 = (g1 / jnp.sqrt(rv1 + eps)).astype(jnp.float32)
    s2 = (g2 / jnp.sqrt(rv2 + eps)).astype(jnp.float32)
    bb1 = ((b1c - rm1) * s1 + be1).reshape(1, C).astype(jnp.float32)
    bb2 = ((b2c - rm2) * s2 + be2).reshape(1, C).astype(jnp.float32)

    # PyTorch OIHW -> (tap, Cin, Cout), BN scale folded, bf16 for the MXU.
    def fold(w, s):
        wt = (jnp.transpose(w, (2, 3, 1, 0)).astype(jnp.float32)
              * s[None, None, None, :])
        return wt.reshape(9, C, C).astype(jnp.bfloat16)

    w1m, w2m = fold(w1, s1), fold(w2, s2)

    # Single bf16 input stream with a 2-row / 1-col zero halo so both convs
    # (and the residual read) slice windows directly from the resident block.
    x_pad = jnp.pad(x, ((0, 0), (2, 2), (1, 1), (0, 0))).astype(jnp.bfloat16)

    kernel = functools.partial(_resblock_kernel, H=H, W=W, C=C, TH=tile_h)

    flops = 2 * 2 * N * H * W * (9 * C) * C          # two 3x3 convs, MAC = 2 flops
    bytes_accessed = (x_pad.size * 2 + N * H * W * C * 4
                      + (w1m.size + w2m.size) * 2 + (bb1.size + bb2.size) * 4)

    out_nhwc = pl.pallas_call(
        kernel,
        out_shape=jax.ShapeDtypeStruct((N, H, W, C), jnp.float32),
        grid_spec=pltpu.PrefetchScalarGridSpec(
            num_scalar_prefetch=0,
            grid=(N, n_tiles),
            in_specs=[
                # same block index across the tile axis -> DMA'd once per image
                pl.BlockSpec((1, H + 4, W + 2, C), lambda n, t: (n, 0, 0, 0)),
                pl.BlockSpec((9, C, C), lambda n, t: (0, 0, 0)),   # w1 (scaled)
                pl.BlockSpec((9, C, C), lambda n, t: (0, 0, 0)),   # w2 (scaled)
                pl.BlockSpec((1, C), lambda n, t: (0, 0)),         # b1
                pl.BlockSpec((1, C), lambda n, t: (0, 0)),         # b2
            ],
            out_specs=pl.BlockSpec((1, tile_h, W, C), lambda n, t: (n, t, 0, 0)),
            scratch_shapes=[
                pltpu.VMEM((tile_h + 2, W + 2, C), jnp.bfloat16),  # conv1 out
            ],
        ),
        compiler_params=pltpu.CompilerParams(
            dimension_semantics=("parallel", "parallel"),
            # above the 16/32 MiB scoped defaults (v5e/v6e), under v7x's
            # 64 MiB physical; pick tile_h per generation against this budget.
            vmem_limit_bytes=48 * 1024 * 1024),
        cost_estimate=pl.CostEstimate(flops=flops, transcendentals=0,
                                      bytes_accessed=bytes_accessed),
    )(x_pad, w1m, w2m, bb1, bb2)

    # NHWC -> NCHW
    return jnp.transpose(out_nhwc, (0, 3, 1, 2))


def _reference(x, w1, b1c, g1, be1, rm1, rv1, w2, b2c, g2, be2, rm2, rv2,
               eps=1e-5):
    """Pure-JAX f32 NCHW reference matching PyTorch (BN in eval mode)."""
    def conv(v, w, b):
        y = jax.lax.conv_general_dilated(
            v, w, window_strides=(1, 1), padding=((1, 1), (1, 1)),
            dimension_numbers=("NCHW", "OIHW", "NCHW"))
        return y + b[None, :, None, None]

    def bn(v, g, be, rm, rv):
        return (v - rm[None, :, None, None]) / jnp.sqrt(
            rv[None, :, None, None] + eps) * g[None, :, None, None] \
            + be[None, :, None, None]

    out = jax.nn.relu(bn(conv(x, w1, b1c), g1, be1, rm1, rv1))
    out = bn(conv(out, w2, b2c), g2, be2, rm2, rv2)
    return jax.nn.relu(out + x)


if __name__ == "__main__":
    key = jax.random.PRNGKey(0)
    N, C, H, W = 2, 4, 16, 16   # in_channels == out_channels (residual add)
    ks = jax.random.split(key, 12)

    x = jax.random.normal(ks[0], (N, C, H, W), jnp.float32)

    # conv1 + BN1 params
    w1 = jax.random.normal(ks[1], (C, C, 3, 3), jnp.float32) * 0.1
    b1c = jax.random.normal(ks[2], (C,), jnp.float32) * 0.1
    g1 = 1.0 + 0.1 * jax.random.normal(ks[3], (C,), jnp.float32)
    be1 = 0.1 * jax.random.normal(ks[4], (C,), jnp.float32)
    rm1 = 0.1 * jax.random.normal(ks[5], (C,), jnp.float32)
    rv1 = 1.0 + 0.1 * jax.random.uniform(ks[6], (C,), jnp.float32)

    # conv2 + BN2 params
    w2 = jax.random.normal(ks[7], (C, C, 3, 3), jnp.float32) * 0.1
    b2c = jax.random.normal(ks[8], (C,), jnp.float32) * 0.1
    g2 = 1.0 + 0.1 * jax.random.normal(ks[9], (C,), jnp.float32)
    be2 = 0.1 * jax.random.normal(ks[10], (C,), jnp.float32)
    rm2 = 0.1 * jax.random.normal(ks[11], (C,), jnp.float32)
    rv2 = 1.0 + 0.1 * jax.random.uniform(ks[0], (C,), jnp.float32)

    out = residual_block(x, w1, b1c, g1, be1, rm1, rv1,
                         w2, b2c, g2, be2, rm2, rv2)
    out = jax.block_until_ready(out)

    ref = _reference(x, w1, b1c, g1, be1, rm1, rv1,
                     w2, b2c, g2, be2, rm2, rv2)

    assert out.shape == (N, C, H, W)
    # bf16 matmul operands (x, weights, conv1 intermediate) vs. a pure-f32
    # reference: tolerance loosened per review (1e-4 would fail).
    assert jnp.allclose(out, ref, atol=5e-2, rtol=5e-2), \
        f"max err {jnp.max(jnp.abs(out - ref))}"
    print("KERNEL_OK")
</pallas_src>

<mosaic_0001>
module attributes {stable_mosaic.version = 11 : i64} {
  func.func @_resblock_kernel(%arg0: i32, %arg1: i32, %arg2: memref<1x20x18x4xbf16, #tpu.memory_space<vmem>>, %arg3: memref<9x4x4xbf16, #tpu.memory_space<vmem>>, %arg4: memref<9x4x4xbf16, #tpu.memory_space<vmem>>, %arg5: memref<1x4xf32, #tpu.memory_space<vmem>>, %arg6: memref<1x4xf32, #tpu.memory_space<vmem>>, %arg7: memref<1x8x16x4xf32, #tpu.memory_space<vmem>>, %arg8: memref<10x18x4xbf16, #tpu.memory_space<vmem>>) attributes {dimension_semantics = [#tpu.dimension_semantics<parallel>, #tpu.dimension_semantics<parallel>], iteration_bounds = array<i64: 2, 2>, scalar_prefetch = 0 : i64, scratch_operands = 1 : i64, tpu.core_type = #tpu.core_type<tc>, window_params = [{transform_indices = @transform_0, window_bounds = array<i64: 1, 20, 18, 4>}, {pipeline_mode = #tpu.pipeline_mode<synchronous>, transform_indices = @transform_1, window_bounds = array<i64: 9, 4, 4>}, {pipeline_mode = #tpu.pipeline_mode<synchronous>, transform_indices = @transform_2, window_bounds = array<i64: 9, 4, 4>}, {pipeline_mode = #tpu.pipeline_mode<synchronous>, transform_indices = @transform_3, window_bounds = array<i64: 1, 4>}, {pipeline_mode = #tpu.pipeline_mode<synchronous>, transform_indices = @transform_4, window_bounds = array<i64: 1, 4>}, {transform_indices = @transform_5, window_bounds = array<i64: 1, 8, 16, 4>}]} {
    %c8_i32 = arith.constant 8 : i32
    %0 = arith.muli %arg1, %c8_i32 : i32
    %1 = tpu.assume_multiple %0, 8 : i32
    %c0_i32 = arith.constant 0 : i32
    %2 = arith.addi %1, %c0_i32 : i32
    %c0 = arith.constant 0 : index
    %3 = arith.index_cast %2 : i32 to index
    %c0_0 = arith.constant 0 : index
    %c0_1 = arith.constant 0 : index
    %4 = vector.load %arg2[%c0, %3, %c0_0, %c0_1] : memref<1x20x18x4xbf16, #tpu.memory_space<vmem>>, vector<1x10x16x4xbf16>
    %5 = vector.shape_cast %4 : vector<1x10x16x4xbf16> to vector<10x16x4xbf16>
    %6 = vector.shape_cast %5 : vector<10x16x4xbf16> to vector<160x4xbf16>
    %c0_2 = arith.constant 0 : index
    %c0_3 = arith.constant 0 : index
    %c0_4 = arith.constant 0 : index
    %7 = vector.load %arg3[%c0_2, %c0_3, %c0_4] : memref<9x4x4xbf16, #tpu.memory_space<vmem>>, vector<1x4x4xbf16>
    %8 = vector.shape_cast %7 : vector<1x4x4xbf16> to vector<4x4xbf16>
    %cst = arith.constant dense<0.000000e+00> : vector<160x4xf32>
    %9 = tpu.matmul %6, %8, %cst {dimension_numbers = #tpu.dot_dimension_numbers<[1], [0], [0], [1], [0, 0, 1, 1], [], []>} : vector<160x4xbf16>, vector<4x4xbf16>, vector<160x4xf32> -> vector<160x4xf32>
    %c0_i32_5 = arith.constant 0 : i32
    %10 = arith.addi %1, %c0_i32_5 : i32
    %c0_6 = arith.constant 0 : index
    %11 = arith.index_cast %10 : i32 to index
    %c1 = arith.constant 1 : index
    %c0_7 = arith.constant 0 : index
    %12 = vector.load %arg2[%c0_6, %11, %c1, %c0_7] : memref<1x20x18x4xbf16, #tpu.memory_space<vmem>>, vector<1x10x16x4xbf16>
    %13 = vector.shape_cast %12 : vector<1x10x16x4xbf16> to vector<10x16x4xbf16>
    %14 = vector.shape_cast %13 : vector<10x16x4xbf16> to vector<160x4xbf16>
    %c1_8 = arith.constant 1 : index
    %c0_9 = arith.constant 0 : index
    %c0_10 = arith.constant 0 : index
    %15 = vector.load %arg3[%c1_8, %c0_9, %c0_10] : memref<9x4x4xbf16, #tpu.memory_space<vmem>>, vector<1x4x4xbf16>
    %16 = vector.shape_cast %15 : vector<1x4x4xbf16> to vector<4x4xbf16>
    %cst_11 = arith.constant dense<0.000000e+00> : vector<160x4xf32>
    %17 = tpu.matmul %14, %16, %cst_11 {dimension_numbers = #tpu.dot_dimension_numbers<[1], [0], [0], [1], [0, 0, 1, 1], [], []>} : vector<160x4xbf16>, vector<4x4xbf16>, vector<160x4xf32> -> vector<160x4xf32>
    %18 = arith.addf %9, %17 : vector<160x4xf32>
    %c0_i32_12 = arith.constant 0 : i32
    %19 = arith.addi %1, %c0_i32_12 : i32
    %c0_13 = arith.constant 0 : index
    %20 = arith.index_cast %19 : i32 to index
    %c2 = arith.constant 2 : index
    %c0_14 = arith.constant 0 : index
    %21 = vector.load %arg2[%c0_13, %20, %c2, %c0_14] : memref<1x20x18x4xbf16, #tpu.memory_space<vmem>>, vector<1x10x16x4xbf16>
    %22 = vector.shape_cast %21 : vector<1x10x16x4xbf16> to vector<10x16x4xbf16>
    %23 = vector.shape_cast %22 : vector<10x16x4xbf16> to vector<160x4xbf16>
    %c2_15 = arith.constant 2 : index
    %c0_16 = arith.constant 0 : index
    %c0_17 = arith.constant 0 : index
    %24 = vector.load %arg3[%c2_15, %c0_16, %c0_17] : memref<9x4x4xbf16, #tpu.memory_space<vmem>>, vector<1x4x4xbf16>
    %25 = vector.shape_cast %24 : vector<1x4x4xbf16> to vector<4x4xbf16>
    %cst_18 = arith.constant dense<0.000000e+00> : vector<160x4xf32>
    %26 = tpu.matmul %23, %25, %cst_18 {dimension_numbers = #tpu.dot_dimension_numbers<[1], [0], [0], [1], [0, 0, 1, 1], [], []>} : vector<160x4xbf16>, vector<4x4xbf16>, vector<160x4xf32> -> vector<160x4xf32>
    %27 = arith.addf %18, %26 : vector<160x4xf32>
    %c1_i32 = arith.constant 1 : i32
    %28 = arith.addi %1, %c1_i32 : i32
    %c0_19 = arith.constant 0 : index
    %29 = arith.index_cast %28 : i32 to index
    %c0_20 = arith.constant 0 : index
    %c0_21 = arith.constant 0 : index
    %30 = vector.load %arg2[%c0_19, %29, %c0_20, %c0_21] : memref<1x20x18x4xbf16, #tpu.memory_space<vmem>>, vector<1x10x16x4xbf16>
    %31 = vector.shape_cast %30 : vector<1x10x16x4xbf16> to vector<10x16x4xbf16>
    %32 = vector.shape_cast %31 : vector<10x16x4xbf16> to vector<160x4xbf16>
    %c3 = arith.constant 3 : index
    %c0_22 = arith.constant 0 : index
    %c0_23 = arith.constant 0 : index
    %33 = vector.load %arg3[%c3, %c0_22, %c0_23] : memref<9x4x4xbf16, #tpu.memory_space<vmem>>, vector<1x4x4xbf16>
    %34 = vector.shape_cast %33 : vector<1x4x4xbf16> to vector<4x4xbf16>
    %cst_24 = arith.constant dense<0.000000e+00> : vector<160x4xf32>
    %35 = tpu.matmul %32, %34, %cst_24 {dimension_numbers = #tpu.dot_dimension_numbers<[1], [0], [0], [1], [0, 0, 1, 1], [], []>} : vector<160x4xbf16>, vector<4x4xbf16>, vector<160x4xf32> -> vector<160x4xf32>
    %36 = arith.addf %27, %35 : vector<160x4xf32>
    %c1_i32_25 = arith.constant 1 : i32
    %37 = arith.addi %1, %c1_i32_25 : i32
    %c0_26 = arith.constant 0 : index
    %38 = arith.index_cast %37 : i32 to index
    %c1_27 = arith.constant 1 : index
    %c0_28 = arith.constant 0 : index
    %39 = vector.load %arg2[%c0_26, %38, %c1_27, %c0_28] : memref<1x20x18x4xbf16, #tpu.memory_space<vmem>>, vector<1x10x16x4xbf16>
    %40 = vector.shape_cast %39 : vector<1x10x16x4xbf16> to vector<10x16x4xbf16>
    %41 = vector.shape_cast %40 : vector<10x16x4xbf16> to vector<160x4xbf16>
    %c4 = arith.constant 4 : index
    %c0_29 = arith.constant 0 : index
    %c0_30 = arith.constant 0 : index
    %42 = vector.load %arg3[%c4, %c0_29, %c0_30] : memref<9x4x4xbf16, #tpu.memory_space<vmem>>, vector<1x4x4xbf16>
    %43 = vector.shape_cast %42 : vector<1x4x4xbf16> to vector<4x4xbf16>
    %cst_31 = arith.constant dense<0.000000e+00> : vector<160x4xf32>
    %44 = tpu.matmul %41, %43, %cst_31 {dimension_numbers = #tpu.dot_dimension_numbers<[1], [0], [0], [1], [0, 0, 1, 1], [], []>} : vector<160x4xbf16>, vector<4x4xbf16>, vector<160x4xf32> -> vector<160x4xf32>
    %45 = arith.addf %36, %44 : vector<160x4xf32>
    %c1_i32_32 = arith.constant 1 : i32
    %46 = arith.addi %1, %c1_i32_32 : i32
    %c0_33 = arith.constant 0 : index
    %47 = arith.index_cast %46 : i32 to index
    %c2_34 = arith.constant 2 : index
    %c0_35 = arith.constant 0 : index
    %48 = vector.load %arg2[%c0_33, %47, %c2_34, %c0_35] : memref<1x20x18x4xbf16, #tpu.memory_space<vmem>>, vector<1x10x16x4xbf16>
    %49 = vector.shape_cast %48 : vector<1x10x16x4xbf16> to vector<10x16x4xbf16>
    %50 = vector.shape_cast %49 : vector<10x16x4xbf16> to vector<160x4xbf16>
    %c5 = arith.constant 5 : index
    %c0_36 = arith.constant 0 : index
    %c0_37 = arith.constant 0 : index
    %51 = vector.load %arg3[%c5, %c0_36, %c0_37] : memref<9x4x4xbf16, #tpu.memory_space<vmem>>, vector<1x4x4xbf16>
    %52 = vector.shape_cast %51 : vector<1x4x4xbf16> to vector<4x4xbf16>
    %cst_38 = arith.constant dense<0.000000e+00> : vector<160x4xf32>
    %53 = tpu.matmul %50, %52, %cst_38 {dimension_numbers = #tpu.dot_dimension_numbers<[1], [0], [0], [1], [0, 0, 1, 1], [], []>} : vector<160x4xbf16>, vector<4x4xbf16>, vector<160x4xf32> -> vector<160x4xf32>
    %54 = arith.addf %45, %53 : vector<160x4xf32>
    %c2_i32 = arith.constant 2 : i32
    %55 = arith.addi %1, %c2_i32 : i32
    %c0_39 = arith.constant 0 : index
    %56 = arith.index_cast %55 : i32 to index
    %c0_40 = arith.constant 0 : index
    %c0_41 = arith.constant 0 : index
    %57 = vector.load %arg2[%c0_39, %56, %c0_40, %c0_41] : memref<1x20x18x4xbf16, #tpu.memory_space<vmem>>, vector<1x10x16x4xbf16>
    %58 = vector.shape_cast %57 : vector<1x10x16x4xbf16> to vector<10x16x4xbf16>
    %59 = vector.shape_cast %58 : vector<10x16x4xbf16> to vector<160x4xbf16>
    %c6 = arith.constant 6 : index
    %c0_42 = arith.constant 0 : index
    %c0_43 = arith.constant 0 : index
    %60 = vector.load %arg3[%c6, %c0_42, %c0_43] : memref<9x4x4xbf16, #tpu.memory_space<vmem>>, vector<1x4x4xbf16>
    %61 = vector.shape_cast %60 : vector<1x4x4xbf16> to vector<4x4xbf16>
    %cst_44 = arith.constant dense<0.000000e+00> : vector<160x4xf32>
    %62 = tpu.matmul %59, %61, %cst_44 {dimension_numbers = #tpu.dot_dimension_numbers<[1], [0], [0], [1], [0, 0, 1, 1], [], []>} : vector<160x4xbf16>, vector<4x4xbf16>, vector<160x4xf32> -> vector<160x4xf32>
    %63 = arith.addf %54, %62 : vector<160x4xf32>
    %c2_i32_45 = arith.constant 2 : i32
    %64 = arith.addi %1, %c2_i32_45 : i32
    %c0_46 = arith.constant 0 : index
    %65 = arith.index_cast %64 : i32 to index
    %c1_47 = arith.constant 1 : index
    %c0_48 = arith.constant 0 : index
    %66 = vector.load %arg2[%c0_46, %65, %c1_47, %c0_48] : memref<1x20x18x4xbf16, #tpu.memory_space<vmem>>, vector<1x10x16x4xbf16>
    %67 = vector.shape_cast %66 : vector<1x10x16x4xbf16> to vector<10x16x4xbf16>
    %68 = vector.shape_cast %67 : vector<10x16x4xbf16> to vector<160x4xbf16>
    %c7 = arith.constant 7 : index
    %c0_49 = arith.constant 0 : index
    %c0_50 = arith.constant 0 : index
    %69 = vector.load %arg3[%c7, %c0_49, %c0_50] : memref<9x4x4xbf16, #tpu.memory_space<vmem>>, vector<1x4x4xbf16>
    %70 = vector.shape_cast %69 : vector<1x4x4xbf16> to vector<4x4xbf16>
    %cst_51 = arith.constant dense<0.000000e+00> : vector<160x4xf32>
    %71 = tpu.matmul %68, %70, %cst_51 {dimension_numbers = #tpu.dot_dimension_numbers<[1], [0], [0], [1], [0, 0, 1, 1], [], []>} : vector<160x4xbf16>, vector<4x4xbf16>, vector<160x4xf32> -> vector<160x4xf32>
    %72 = arith.addf %63, %71 : vector<160x4xf32>
    %c2_i32_52 = arith.constant 2 : i32
    %73 = arith.addi %1, %c2_i32_52 : i32
    %c0_53 = arith.constant 0 : index
    %74 = arith.index_cast %73 : i32 to index
    %c2_54 = arith.constant 2 : index
    %c0_55 = arith.constant 0 : index
    %75 = vector.load %arg2[%c0_53, %74, %c2_54, %c0_55] : memref<1x20x18x4xbf16, #tpu.memory_space<vmem>>, vector<1x10x16x4xbf16>
    %76 = vector.shape_cast %75 : vector<1x10x16x4xbf16> to vector<10x16x4xbf16>
    %77 = vector.shape_cast %76 : vector<10x16x4xbf16> to vector<160x4xbf16>
    %c8 = arith.constant 8 : index
    %c0_56 = arith.constant 0 : index
    %c0_57 = arith.constant 0 : index
    %78 = vector.load %arg3[%c8, %c0_56, %c0_57] : memref<9x4x4xbf16, #tpu.memory_space<vmem>>, vector<1x4x4xbf16>
    %79 = vector.shape_cast %78 : vector<1x4x4xbf16> to vector<4x4xbf16>
    %cst_58 = arith.constant dense<0.000000e+00> : vector<160x4xf32>
    %80 = tpu.matmul %77, %79, %cst_58 {dimension_numbers = #tpu.dot_dimension_numbers<[1], [0], [0], [1], [0, 0, 1, 1], [], []>} : vector<160x4xbf16>, vector<4x4xbf16>, vector<160x4xf32> -> vector<160x4xf32>
    %81 = arith.addf %72, %80 : vector<160x4xf32>
    %c0_59 = arith.constant 0 : index
    %c0_60 = arith.constant 0 : index
    %82 = vector.load %arg5[%c0_59, %c0_60] : memref<1x4xf32, #tpu.memory_space<vmem>>, vector<1x4xf32>
    %83 = vector.broadcast %82 : vector<1x4xf32> to vector<160x4xf32>
    %84 = arith.addf %81, %83 : vector<160x4xf32>
    %cst_61 = arith.constant 0.000000e+00 : f32
    %85 = vector.broadcast %cst_61 : f32 to vector<160x4xf32>
    %86 = arith.maximumf %84, %85 : vector<160x4xf32>
    %87 = vector.shape_cast %86 : vector<160x4xf32> to vector<10x16x4xf32>
    %88 = arith.truncf %87 : vector<10x16x4xf32> to vector<10x16x4xbf16>
    %c0_62 = arith.constant 0 : index
    %c1_63 = arith.constant 1 : index
    %c0_64 = arith.constant 0 : index
    %89 = vector.load %arg8[%c0_62, %c1_63, %c0_64] : memref<10x18x4xbf16, #tpu.memory_space<vmem>>, vector<10x16x4xbf16>
    tpu.vector_store %arg8[%c0_62, %c1_63, %c0_64], %88 {strides = array<i32>} : memref<10x18x4xbf16, #tpu.memory_space<vmem>>, vector<10x16x4xbf16>,
    %cst_65 = arith.constant 0.000000e+00 : bf16
    %90 = vector.broadcast %cst_65 : bf16 to vector<10x1x4xbf16>
    %c0_66 = arith.constant 0 : index
    %c0_67 = arith.constant 0 : index
    %c0_68 = arith.constant 0 : index
    %91 = vector.load %arg8[%c0_66, %c0_67, %c0_68] : memref<10x18x4xbf16, #tpu.memory_space<vmem>>, vector<10x1x4xbf16>
    tpu.vector_store %arg8[%c0_66, %c0_67, %c0_68], %90 {strides = array<i32>} : memref<10x18x4xbf16, #tpu.memory_space<vmem>>, vector<10x1x4xbf16>,
    %c0_69 = arith.constant 0 : index
    %c17 = arith.constant 17 : index
    %c0_70 = arith.constant 0 : index
    %92 = vector.load %arg8[%c0_69, %c17, %c0_70] : memref<10x18x4xbf16, #tpu.memory_space<vmem>>, vector<10x1x4xbf16>
    tpu.vector_store %arg8[%c0_69, %c17, %c0_70], %90 {strides = array<i32>} : memref<10x18x4xbf16, #tpu.memory_space<vmem>>, vector<10x1x4xbf16>,
    %cst_71 = arith.constant 0.000000e+00 : bf16
    %93 = vector.broadcast %cst_71 : bf16 to vector<1x18x4xbf16>
    %c0_i32_72 = arith.constant 0 : i32
    %94 = arith.cmpi eq, %arg1, %c0_i32_72 : i32
    %95 = arith.extui %94 : i1 to i32
    %c0_i32_73 = arith.constant 0 : i32
    %96 = arith.cmpi ne, %95, %c0_i32_73 : i32
    scf.if %96 {
      %c0_150 = arith.constant 0 : index
      %c0_151 = arith.constant 0 : index
      %c0_152 = arith.constant 0 : index
      %169 = vector.load %arg8[%c0_150, %c0_151, %c0_152] : memref<10x18x4xbf16, #tpu.memory_space<vmem>>, vector<1x18x4xbf16>
      tpu.vector_store %arg8[%c0_150, %c0_151, %c0_152], %93 {strides = array<i32>} : memref<10x18x4xbf16, #tpu.memory_space<vmem>>, vector<1x18x4xbf16>,
    } else {
    }
    %c1_i32_74 = arith.constant 1 : i32
    %97 = arith.cmpi eq, %arg1, %c1_i32_74 : i32
    %98 = arith.extui %97 : i1 to i32
    %c0_i32_75 = arith.constant 0 : i32
    %99 = arith.cmpi ne, %98, %c0_i32_75 : i32
    scf.if %99 {
      %c9 = arith.constant 9 : index
      %c0_150 = arith.constant 0 : index
      %c0_151 = arith.constant 0 : index
      %169 = vector.load %arg8[%c9, %c0_150, %c0_151] : memref<10x18x4xbf16, #tpu.memory_space<vmem>>, vector<1x18x4xbf16>
      tpu.vector_store %arg8[%c9, %c0_150, %c0_151], %93 {strides = array<i32>} : memref<10x18x4xbf16, #tpu.memory_space<vmem>>, vector<1x18x4xbf16>,
    } else {
    }
    %c2_i32_76 = arith.constant 2 : i32
    %100 = arith.addi %1, %c2_i32_76 : i32
    %c0_77 = arith.constant 0 : index
    %101 = arith.index_cast %100 : i32 to index
    %c1_78 = arith.constant 1 : index
    %c0_79 = arith.constant 0 : index
    %102 = vector.load %arg2[%c0_77, %101, %c1_78, %c0_79] : memref<1x20x18x4xbf16, #tpu.memory_space<vmem>>, vector<1x8x16x4xbf16>
    %103 = vector.shape_cast %102 : vector<1x8x16x4xbf16> to vector<8x16x4xbf16>
    %104 = arith.extf %103 : vector<8x16x4xbf16> to vector<8x16x4xf32>
    %c0_80 = arith.constant 0 : index
    %c0_81 = arith.constant 0 : index
    %c0_82 = arith.constant 0 : index
    %105 = vector.load %arg8[%c0_80, %c0_81, %c0_82] : memref<10x18x4xbf16, #tpu.memory_space<vmem>>, vector<8x16x4xbf16>
    %106 = vector.shape_cast %105 : vector<8x16x4xbf16> to vector<128x4xbf16>
    %c0_83 = arith.constant 0 : index
    %c0_84 = arith.constant 0 : index
    %c0_85 = arith.constant 0 : index
    %107 = vector.load %arg4[%c0_83, %c0_84, %c0_85] : memref<9x4x4xbf16, #tpu.memory_space<vmem>>, vector<1x4x4xbf16>
    %108 = vector.shape_cast %107 : vector<1x4x4xbf16> to vector<4x4xbf16>
    %cst_86 = arith.constant dense<0.000000e+00> : vector<128x4xf32>
    %109 = tpu.matmul %106, %108, %cst_86 {dimension_numbers = #tpu.dot_dimension_numbers<[1], [0], [0], [1], [0, 0, 1, 1], [], []>} : vector<128x4xbf16>, vector<4x4xbf16>, vector<128x4xf32> -> vector<128x4xf32>
    %c0_87 = arith.constant 0 : index
    %c1_88 = arith.constant 1 : index
    %c0_89 = arith.constant 0 : index
    %110 = vector.load %arg8[%c0_87, %c1_88, %c0_89] : memref<10x18x4xbf16, #tpu.memory_space<vmem>>, vector<8x16x4xbf16>
    %111 = vector.shape_cast %110 : vector<8x16x4xbf16> to vector<128x4xbf16>
    %c1_90 = arith.constant 1 : index
    %c0_91 = arith.constant 0 : index
    %c0_92 = arith.constant 0 : index
    %112 = vector.load %arg4[%c1_90, %c0_91, %c0_92] : memref<9x4x4xbf16, #tpu.memory_space<vmem>>, vector<1x4x4xbf16>
    %113 = vector.shape_cast %112 : vector<1x4x4xbf16> to vector<4x4xbf16>
    %cst_93 = arith.constant dense<0.000000e+00> : vector<128x4xf32>
    %114 = tpu.matmul %111, %113, %cst_93 {dimension_numbers = #tpu.dot_dimension_numbers<[1], [0], [0], [1], [0, 0, 1, 1], [], []>} : vector<128x4xbf16>, vector<4x4xbf16>, vector<128x4xf32> -> vector<128x4xf32>
    %115 = arith.addf %109, %114 : vector<128x4xf32>
    %c0_94 = arith.constant 0 : index
    %c2_95 = arith.constant 2 : index
    %c0_96 = arith.constant 0 : index
    %116 = vector.load %arg8[%c0_94, %c2_95, %c0_96] : memref<10x18x4xbf16, #tpu.memory_space<vmem>>, vector<8x16x4xbf16>
    %117 = vector.shape_cast %116 : vector<8x16x4xbf16> to vector<128x4xbf16>
    %c2_97 = arith.constant 2 : index
    %c0_98 = arith.constant 0 : index
    %c0_99 = arith.constant 0 : index
    %118 = vector.load %arg4[%c2_97, %c0_98, %c0_99] : memref<9x4x4xbf16, #tpu.memory_space<vmem>>, vector<1x4x4xbf16>
    %119 = vector.shape_cast %118 : vector<1x4x4xbf16> to vector<4x4xbf16>
    %cst_100 = arith.constant dense<0.000000e+00> : vector<128x4xf32>
    %120 = tpu.matmul %117, %119, %cst_100 {dimension_numbers = #tpu.dot_dimension_numbers<[1], [0], [0], [1], [0, 0, 1, 1], [], []>} : vector<128x4xbf16>, vector<4x4xbf16>, vector<128x4xf32> -> vector<128x4xf32>
    %121 = arith.addf %115, %120 : vector<128x4xf32>
    %c1_101 = arith.constant 1 : index
    %c0_102 = arith.constant 0 : index
    %c0_103 = arith.constant 0 : index
    %122 = vector.load %arg8[%c1_101, %c0_102, %c0_103] : memref<10x18x4xbf16, #tpu.memory_space<vmem>>, vector<8x16x4xbf16>
    %123 = vector.shape_cast %122 : vector<8x16x4xbf16> to vector<128x4xbf16>
    %c3_104 = arith.constant 3 : index
    %c0_105 = arith.constant 0 : index
    %c0_106 = arith.constant 0 : index
    %124 = vector.load %arg4[%c3_104, %c0_105, %c0_106] : memref<9x4x4xbf16, #tpu.memory_space<vmem>>, vector<1x4x4xbf16>
    %125 = vector.shape_cast %124 : vector<1x4x4xbf16> to vector<4x4xbf16>
    %cst_107 = arith.constant dense<0.000000e+00> : vector<128x4xf32>
    %126 = tpu.matmul %123, %125, %cst_107 {dimension_numbers = #tpu.dot_dimension_numbers<[1], [0], [0], [1], [0, 0, 1, 1], [], []>} : vector<128x4xbf16>, vector<4x4xbf16>, vector<128x4xf32> -> vector<128x4xf32>
    %127 = arith.addf %121, %126 : vector<128x4xf32>
    %c1_108 = arith.constant 1 : index
    %c1_109 = arith.constant 1 : index
    %c0_110 = arith.constant 0 : index
    %128 = vector.load %arg8[%c1_108, %c1_109, %c0_110] : memref<10x18x4xbf16, #tpu.memory_space<vmem>>, vector<8x16x4xbf16>
    %129 = vector.shape_cast %128 : vector<8x16x4xbf16> to vector<128x4xbf16>
    %c4_111 = arith.constant 4 : index
    %c0_112 = arith.constant 0 : index
    %c0_113 = arith.constant 0 : index
    %130 = vector.load %arg4[%c4_111, %c0_112, %c0_113] : memref<9x4x4xbf16, #tpu.memory_space<vmem>>, vector<1x4x4xbf16>
    %131 = vector.shape_cast %130 : vector<1x4x4xbf16> to vector<4x4xbf16>
    %cst_114 = arith.constant dense<0.000000e+00> : vector<128x4xf32>
    %132 = tpu.matmul %129, %131, %cst_114 {dimension_numbers = #tpu.dot_dimension_numbers<[1], [0], [0], [1], [0, 0, 1, 1], [], []>} : vector<128x4xbf16>, vector<4x4xbf16>, vector<128x4xf32> -> vector<128x4xf32>
    %133 = arith.addf %127, %132 : vector<128x4xf32>
    %c1_115 = arith.constant 1 : index
    %c2_116 = arith.constant 2 : index
    %c0_117 = arith.constant 0 : index
    %134 = vector.load %arg8[%c1_115, %c2_116, %c0_117] : memref<10x18x4xbf16, #tpu.memory_space<vmem>>, vector<8x16x4xbf16>
    %135 = vector.shape_cast %134 : vector<8x16x4xbf16> to vector<128x4xbf16>
    %c5_118 = arith.constant 5 : index
    %c0_119 = arith.constant 0 : index
    %c0_120 = arith.constant 0 : index
    %136 = vector.load %arg4[%c5_118, %c0_119, %c0_120] : memref<9x4x4xbf16, #tpu.memory_space<vmem>>, vector<1x4x4xbf16>
    %137 = vector.shape_cast %136 : vector<1x4x4xbf16> to vector<4x4xbf16>
    %cst_121 = arith.constant dense<0.000000e+00> : vector<128x4xf32>
    %138 = tpu.matmul %135, %137, %cst_121 {dimension_numbers = #tpu.dot_dimension_numbers<[1], [0], [0], [1], [0, 0, 1, 1], [], []>} : vector<128x4xbf16>, vector<4x4xbf16>, vector<128x4xf32> -> vector<128x4xf32>
    %139 = arith.addf %133, %138 : vector<128x4xf32>
    %c2_122 = arith.constant 2 : index
    %c0_123 = arith.constant 0 : index
    %c0_124 = arith.constant 0 : index
    %140 = vector.load %arg8[%c2_122, %c0_123, %c0_124] : memref<10x18x4xbf16, #tpu.memory_space<vmem>>, vector<8x16x4xbf16>
    %141 = vector.shape_cast %140 : vector<8x16x4xbf16> to vector<128x4xbf16>
    %c6_125 = arith.constant 6 : index
    %c0_126 = arith.constant 0 : index
    %c0_127 = arith.constant 0 : index
    %142 = vector.load %arg4[%c6_125, %c0_126, %c0_127] : memref<9x4x4xbf16, #tpu.memory_space<vmem>>, vector<1x4x4xbf16>
    %143 = vector.shape_cast %142 : vector<1x4x4xbf16> to vector<4x4xbf16>
    %cst_128 = arith.constant dense<0.000000e+00> : vector<128x4xf32>
    %144 = tpu.matmul %141, %143, %cst_128 {dimension_numbers = #tpu.dot_dimension_numbers<[1], [0], [0], [1], [0, 0, 1, 1], [], []>} : vector<128x4xbf16>, vector<4x4xbf16>, vector<128x4xf32> -> vector<128x4xf32>
    %145 = arith.addf %139, %144 : vector<128x4xf32>
    %c2_129 = arith.constant 2 : index
    %c1_130 = arith.constant 1 : index
    %c0_131 = arith.constant 0 : index
    %146 = vector.load %arg8[%c2_129, %c1_130, %c0_131] : memref<10x18x4xbf16, #tpu.memory_space<vmem>>, vector<8x16x4xbf16>
    %147 = vector.shape_cast %146 : vector<8x16x4xbf16> to vector<128x4xbf16>
    %c7_132 = arith.constant 7 : index
    %c0_133 = arith.constant 0 : index
    %c0_134 = arith.constant 0 : index
    %148 = vector.load %arg4[%c7_132, %c0_133, %c0_134] : memref<9x4x4xbf16, #tpu.memory_space<vmem>>, vector<1x4x4xbf16>
    %149 = vector.shape_cast %148 : vector<1x4x4xbf16> to vector<4x4xbf16>
    %cst_135 = arith.constant dense<0.000000e+00> : vector<128x4xf32>
    %150 = tpu.matmul %147, %149, %cst_135 {dimension_numbers = #tpu.dot_dimension_numbers<[1], [0], [0], [1], [0, 0, 1, 1], [], []>} : vector<128x4xbf16>, vector<4x4xbf16>, vector<128x4xf32> -> vector<128x4xf32>
    %151 = arith.addf %145, %150 : vector<128x4xf32>
    %c2_136 = arith.constant 2 : index
    %c2_137 = arith.constant 2 : index
    %c0_138 = arith.constant 0 : index
    %152 = vector.load %arg8[%c2_136, %c2_137, %c0_138] : memref<10x18x4xbf16, #tpu.memory_space<vmem>>, vector<8x16x4xbf16>
    %153 = vector.shape_cast %152 : vector<8x16x4xbf16> to vector<128x4xbf16>
    %c8_139 = arith.constant 8 : index
    %c0_140 = arith.constant 0 : index
    %c0_141 = arith.constant 0 : index
    %154 = vector.load %arg4[%c8_139, %c0_140, %c0_141] : memref<9x4x4xbf16, #tpu.memory_space<vmem>>, vector<1x4x4xbf16>
    %155 = vector.shape_cast %154 : vector<1x4x4xbf16> to vector<4x4xbf16>
    %cst_142 = arith.constant dense<0.000000e+00> : vector<128x4xf32>
    %156 = tpu.matmul %153, %155, %cst_142 {dimension_numbers = #tpu.dot_dimension_numbers<[1], [0], [0], [1], [0, 0, 1, 1], [], []>} : vector<128x4xbf16>, vector<4x4xbf16>, vector<128x4xf32> -> vector<128x4xf32>
    %157 = arith.addf %151, %156 : vector<128x4xf32>
    %c0_143 = arith.constant 0 : index
    %c0_144 = arith.constant 0 : index
    %158 = vector.load %arg6[%c0_143, %c0_144] : memref<1x4xf32, #tpu.memory_space<vmem>>, vector<1x4xf32>
    %159 = vector.broadcast %158 : vector<1x4xf32> to vector<128x4xf32>
    %160 = arith.addf %157, %159 : vector<128x4xf32>
    %161 = vector.shape_cast %104 : vector<8x16x4xf32> to vector<128x4xf32>
    %162 = arith.addf %160, %161 : vector<128x4xf32>
    %cst_145 = arith.constant 0.000000e+00 : f32
    %163 = vector.broadcast %cst_145 : f32 to vector<128x4xf32>
    %164 = arith.maximumf %162, %163 : vector<128x4xf32>
    %165 = vector.shape_cast %164 : vector<128x4xf32> to vector<8x16x4xf32>
    %c0_146 = arith.constant 0 : index
    %c0_147 = arith.constant 0 : index
    %c0_148 = arith.constant 0 : index
    %c0_149 = arith.constant 0 : index
    %166 = vector.load %arg7[%c0_146, %c0_147, %c0_148, %c0_149] : memref<1x8x16x4xf32, #tpu.memory_space<vmem>>, vector<1x8x16x4xf32>
    %167 = vector.shape_cast %166 : vector<1x8x16x4xf32> to vector<8x16x4xf32>
    %168 = vector.shape_cast %165 : vector<8x16x4xf32> to vector<1x8x16x4xf32>
    tpu.vector_store %arg7[%c0_146, %c0_147, %c0_148, %c0_149], %168 {strides = array<i32>} : memref<1x8x16x4xf32, #tpu.memory_space<vmem>>, vector<1x8x16x4xf32>,
    return
  }
  func.func @transform_0(%arg0: i32, %arg1: i32) -> (i32, i32, i32, i32) {
    %c0_i32 = arith.constant 0 : i32
    %c0_i32_0 = arith.constant 0 : i32
    %c0_i32_1 = arith.constant 0 : i32
    %c0_i32_2 = arith.constant 0 : i32
    return %arg0, %c0_i32, %c0_i32_0, %c0_i32_1 : i32, i32, i32, i32
  }
  func.func @transform_1(%arg0: i32, %arg1: i32) -> (i32, i32, i32) {
    %c0_i32 = arith.constant 0 : i32
    %c0_i32_0 = arith.constant 0 : i32
    %c0_i32_1 = arith.constant 0 : i32
    %c0_i32_2 = arith.constant 0 : i32
    return %c0_i32, %c0_i32_0, %c0_i32_1 : i32, i32, i32
  }
  func.func @transform_2(%arg0: i32, %arg1: i32) -> (i32, i32, i32) {
    %c0_i32 = arith.constant 0 : i32
    %c0_i32_0 = arith.constant 0 : i32
    %c0_i32_1 = arith.constant 0 : i32
    %c0_i32_2 = arith.constant 0 : i32
    return %c0_i32, %c0_i32_0, %c0_i32_1 : i32, i32, i32
  }
  func.func @transform_3(%arg0: i32, %arg1: i32) -> (i32, i32) {
    %c0_i32 = arith.constant 0 : i32
    %c0_i32_0 = arith.constant 0 : i32
    %c0_i32_1 = arith.constant 0 : i32
    return %c0_i32, %c0_i32_0 : i32, i32
  }
  func.func @transform_4(%arg0: i32, %arg1: i32) -> (i32, i32) {
    %c0_i32 = arith.constant 0 : i32
    %c0_i32_0 = arith.constant 0 : i32
    %c0_i32_1 = arith.constant 0 : i32
    return %c0_i32, %c0_i32_0 : i32, i32
  }
  func.func @transform_5(%arg0: i32, %arg1: i32) -> (i32, i32, i32, i32) {
    %c0_i32 = arith.constant 0 : i32
    %c0_i32_0 = arith.constant 0 : i32
    %c0_i32_1 = arith.constant 0 : i32
    return %arg0, %arg1, %c0_i32, %c0_i32_0 : i32, i32, i32, i32
  }
}

</mosaic_0001>

<llo_original>
// kernel: tpu_custom_call.1
$region0: #{tpu_custom_call.1}
  #allocation0 [shape = 'u32[]', space=smem, size = 0x4, offset = 0x4, fixed_abs, tag = 'smem constant byte address 0x4 - core index']
  #allocation1 [shape = 'u32[72,128]{1,0:T(1,128)}', space=vmem, size = 0x9000, scoped, tag = 'internal scratch']
  #allocation2 [shape = 'bf16[10,18,4]{2,1,0:T(8,128)(2,1)}', space=vmem, size = 0xf000, scoped, tag = 'scratch operand']
  %s0 = inlined_call_operand.vmem [shape: bf16[2,20,18,4], index: 0, kind: input, shape index: {}]
  %s1 = inlined_call_operand.vmem [shape: bf16[9,4,4], index: 1, kind: input, shape index: {}]
  %s2 = inlined_call_operand.vmem [shape: bf16[9,4,4], index: 2, kind: input, shape index: {}]
  %s3 = inlined_call_operand.vmem [shape: f32[1,4], index: 3, kind: input, shape index: {}]
  %s4 = inlined_call_operand.vmem [shape: f32[1,4], index: 4, kind: input, shape index: {}]
  %s5 = inlined_call_operand.vmem [shape: f32[2,16,16,4], index: 5, kind: output, shape index: {}]
  %s6 = sld [smem:[#allocation0]]
  $region61: #{tpu_custom_call.1} parent=0
    _
  %s8 = ssub.s32 1, %s6
  %s9 = scalar_select 0, %s8, %s6
  loop: start=0, step=1, limit=6
  $region2: #{tpu_custom_call.1} parent=0 // loop_pre_header
    _
  $region3: #{tpu_custom_call.1} parent=0 // loop_header
    %s11 = sphi 0, %s15
    %p12 = scmp.ge.s32.totalorder %s11, 6
    %s18 = sphi 0, %s30
    %s19 = sphi 0, %s26
    %s20 = sphi 0, %s18
    %s21 = sphi 0, %s19
    %s22 = sphi 0, %s20
    %s23 = sphi 0, %s21
    %s33 = sphi 0, %s35
    %s36 = sphi 0, %s33
    %s37 = sphi 0, %s36
    %s53 = sphi 0, %s37
    %s57 = sphi 0, %s57
    %s59 = sphi 0, %s57
    %s60 = sphi 0, %s59
    %s74 = sphi 0, %s60
    %s78 = sphi 0, %s78
    %s80 = sphi 0, %s78
    %s81 = sphi 0, %s80
    %s95 = sphi 0, %s81
    %s99 = sphi 0, %s99
    %s101 = sphi 0, %s99
    %s102 = sphi 0, %s101
    %s116 = sphi 0, %s102
    %s120 = sphi 0, %s120
    %s122 = sphi 0, %s120
    %s123 = sphi 0, %s122
    %s137 = sphi 0, %s123
    %s145 = sphi 0, %s147
    %s148 = sphi 0, %s145
    %s149 = sphi 0, %s148
    %s165 = sphi 0, %s149
  $region4: #{tpu_custom_call.1} parent=0 // loop_header_branch
    %14 = sbr.rel (%p12) target = $region8
  $region5: #{tpu_custom_call.1} parent=0 // loop_body
    %s16 = ssub.s32 %s11, 1
    %s17 = ssub.s32 %s11, 2
    %s24 = sadd.s32 1, %s19
    %p25 = scmp.ge.s32.totalorder %s24, 2
    %s26 = scalar_select %p25, 0, %s24
    %s27 = sadd.s32 1, %s18
    %s28 = scalar_select %p25, %s27, %s18
    %p29 = scmp.ge.s32.totalorder %s28, 2
    %s30 = scalar_select %p29, 0, %s28
    %s31 = ssub.s32 %s18, %s30
    %p32 = scmp.eq.s32.totalorder %s31, 0
    %s34 = sadd.s32 %s33, 1
    %s35 = scalar_select %p32, %s33, %s34
    %p38 = pneg %p32
    %p39 = scmp.eq.s32.totalorder %s11, 3
    %p40 = por %p38, %p39
    %p41 = scmp.ne.s32.totalorder %s33, %s36
    %p42 = scmp.eq.s32.totalorder %s11, 0
    %p43 = por %p41, %p42
    %p44 = scmp.ne.s32.totalorder %s33, %s36
    %p45 = scmp.eq.s32.totalorder %s16, 3
    %p46 = por %p44, %p45
    %p47 = scmp.ne.s32.totalorder %s36, %s37
    %p48 = scmp.eq.s32.totalorder %s16, 0
    %p49 = por %p47, %p48
    %p50 = scmp.ne.s32.totalorder %s36, %s37
    %p51 = scmp.eq.s32.totalorder %s17, 3
    %p52 = por %p50, %p51
    %p54 = scmp.ne.s32.totalorder %s37, %s53
    %p55 = scmp.eq.s32.totalorder %s17, 0
    %p56 = por %p54, %p55
    %s58 = sadd.s32 %s57, 1
    %p61 = scmp.eq.s32.totalorder %s11, 3
    %p62 = scmp.ne.s32.totalorder %s57, %s59
    %p63 = scmp.eq.s32.totalorder %s11, 0
    %p64 = por %p62, %p63
    %p65 = scmp.ne.s32.totalorder %s57, %s59
    %p66 = scmp.eq.s32.totalorder %s16, 3
    %p67 = por %p65, %p66
    %p68 = scmp.ne.s32.totalorder %s59, %s60
    %p69 = scmp.eq.s32.totalorder %s16, 0
    %p70 = por %p68, %p69
    %p71 = scmp.ne.s32.totalorder %s59, %s60
    %p72 = scmp.eq.s32.totalorder %s17, 3
    %p73 = por %p71, %p72
    %p75 = scmp.ne.s32.totalorder %s60, %s74
    %p76 = scmp.eq.s32.totalorder %s17, 0
    %p77 = por %p75, %p76
    %s79 = sadd.s32 %s78, 1
    %p82 = scmp.eq.s32.totalorder %s11, 3
    %p83 = scmp.ne.s32.totalorder %s78, %s80
    %p84 = scmp.eq.s32.totalorder %s11, 0
    %p85 = por %p83, %p84
    %p86 = scmp.ne.s32.totalorder %s78, %s80
    %p87 = scmp.eq.s32.totalorder %s16, 3
    %p88 = por %p86, %p87
    %p89 = scmp.ne.s32.totalorder %s80, %s81
    %p90 = scmp.eq.s32.totalorder %s16, 0
    %p91 = por %p89, %p90
    %p92 = scmp.ne.s32.totalorder %s80, %s81
    %p93 = scmp.eq.s32.totalorder %s17, 3
    %p94 = por %p92, %p93
    %p96 = scmp.ne.s32.totalorder %s81, %s95
    %p97 = scmp.eq.s32.totalorder %s17, 0
    %p98 = por %p96, %p97
    %s100 = sadd.s32 %s99, 1
    %p103 = scmp.eq.s32.totalorder %s11, 3
    %p104 = scmp.ne.s32.totalorder %s99, %s101
    %p105 = scmp.eq.s32.totalorder %s11, 0
    %p106 = por %p104, %p105
    %p107 = scmp.ne.s32.totalorder %s99, %s101
    %p108 = scmp.eq.s32.totalorder %s16, 3
    %p109 = por %p107, %p108
    %p110 = scmp.ne.s32.totalorder %s101, %s102
    %p111 = scmp.eq.s32.totalorder %s16, 0
    %p112 = por %p110, %p111
    %p113 = scmp.ne.s32.totalorder %s101, %s102
    %p114 = scmp.eq.s32.totalorder %s17, 3
    %p115 = por %p113, %p114
    %p117 = scmp.ne.s32.totalorder %s102, %s116
    %p118 = scmp.eq.s32.totalorder %s17, 0
    %p119 = por %p117, %p118
    %s121 = sadd.s32 %s120, 1
    %p124 = scmp.eq.s32.totalorder %s11, 3
    %p125 = scmp.ne.s32.totalorder %s120, %s122
    %p126 = scmp.eq.s32.totalorder %s11, 0
    %p127 = por %p125, %p126
    %p128 = scmp.ne.s32.totalorder %s120, %s122
    %p129 = scmp.eq.s32.totalorder %s16, 3
    %p130 = por %p128, %p129
    %p131 = scmp.ne.s32.totalorder %s122, %s123
    %p132 = scmp.eq.s32.totalorder %s16, 0
    %p133 = por %p131, %p132
    %p134 = scmp.ne.s32.totalorder %s122, %s123
    %p135 = scmp.eq.s32.totalorder %s17, 3
    %p136 = por %p134, %p135
    %p138 = scmp.ne.s32.totalorder %s123, %s137
    %p139 = scmp.eq.s32.totalorder %s17, 0
    %p140 = por %p138, %p139
    %s141 = ssub.s32 %s18, %s30
    %s142 = ssub.s32 %s19, %s26
    %s143 = sor.u32 %s141, %s142
    %p144 = scmp.eq.s32.totalorder %s143, 0
    %s146 = sadd.s32 %s145, 1
    %s147 = scalar_select %p144, %s145, %s146
    %p150 = pneg %p144
    %p151 = scmp.eq.s32.totalorder %s11, 3
    %p152 = por %p150, %p151
    %p153 = scmp.ne.s32.totalorder %s145, %s148
    %p154 = scmp.eq.s32.totalorder %s11, 0
    %p155 = por %p153, %p154
    %p156 = scmp.ne.s32.totalorder %s145, %s148
    %p157 = scmp.eq.s32.totalorder %s16, 3
    %p158 = por %p156, %p157
    %p159 = scmp.ne.s32.totalorder %s148, %s149
    %p160 = scmp.eq.s32.totalorder %s16, 0
    %p161 = por %p159, %p160
    %p162 = scmp.ne.s32.totalorder %s148, %s149
    %p163 = scmp.eq.s32.totalorder %s17, 3
    %p164 = por %p162, %p163
    %p166 = scmp.ne.s32.totalorder %s149, %s165
    %p167 = scmp.eq.s32.totalorder %s17, 0
    %p168 = por %p166, %p167
    %p169 = scmp.le.s32.totalorder 1, %s11
    %p170 = scmp.lt.s32.totalorder %s11, 5
    %p171 = pnand %p169, %p170
    %p172 = pneg %p171
    // Predicated region
    $region9: #{tpu_custom_call.1} parent=5 // pred_check
      _
    $region10: #{tpu_custom_call.1} parent=5 // pred_check_branch
      %174 = sbr.rel (%p171) target = $region12
    $region11: #{tpu_custom_call.1} parent=5 // pred_region
      %s175 = ssub.s32 %s11, 1
      // Predicated region
      $region13: #{tpu_custom_call.1} parent=11 // pred_check
        %p176 = pneg %p70
      $region14: #{tpu_custom_call.1} parent=11 // pred_check_branch
        %178 = sbr.rel (%p176) target = $region16
      $region15: #{tpu_custom_call.1} parent=11 // pred_region
        _
      $region16: #{tpu_custom_call.1} parent=11 // pred_fallthru
        _
      // Predicated region
      $region17: #{tpu_custom_call.1} parent=11 // pred_check
        %p179 = pneg %p91
      $region18: #{tpu_custom_call.1} parent=11 // pred_check_branch
        %181 = sbr.rel (%p179) target = $region20
      $region19: #{tpu_custom_call.1} parent=11 // pred_region
        _
      $region20: #{tpu_custom_call.1} parent=11 // pred_fallthru
        _
      // Predicated region
      $region21: #{tpu_custom_call.1} parent=11 // pred_check
        %p182 = pneg %p112
      $region22: #{tpu_custom_call.1} parent=11 // pred_check_branch
        %184 = sbr.rel (%p182) target = $region24
      $region23: #{tpu_custom_call.1} parent=11 // pred_region
        _
      $region24: #{tpu_custom_call.1} parent=11 // pred_fallthru
        _
      // Predicated region
      $region25: #{tpu_custom_call.1} parent=11 // pred_check
        %p185 = pneg %p133
      $region26: #{tpu_custom_call.1} parent=11 // pred_check_branch
        %187 = sbr.rel (%p185) target = $region28
      $region27: #{tpu_custom_call.1} parent=11 // pred_region
        _
      $region28: #{tpu_custom_call.1} parent=11 // pred_fallthru
        _
    $region12: #{tpu_custom_call.1} parent=5 // pred_fallthru
      _
    %p188 = scmp.lt.s32.totalorder %s11, 4
    // Predicated region
    $region29: #{tpu_custom_call.1} parent=5 // pred_check
      %p189 = pneg %p188
    $region30: #{tpu_custom_call.1} parent=5 // pred_check_branch
      %191 = sbr.rel (%p189) target = $region32
    $region31: #{tpu_custom_call.1} parent=5 // pred_region
      // Predicated region
      $region33: #{tpu_custom_call.1} parent=31 // pred_check
        %p192 = pneg %p43
      $region34: #{tpu_custom_call.1} parent=31 // pred_check_branch
        %194 = sbr.rel (%p192) target = $region36
      $region35: #{tpu_custom_call.1} parent=31 // pred_region
        %p195 = scmp.lt.s32.totalorder %s18, 1
        %s196 = scalar_select %p195, %s18, 1
        %s197 = smul.addr %s196, 60
        %s198 = smul.addr %s197, 4
        %s199 = scalar_lea.vmem %s0, %s198
      $region36: #{tpu_custom_call.1} parent=31 // pred_fallthru
        _
    $region32: #{tpu_custom_call.1} parent=5 // pred_fallthru
      _
    %p200 = scmp.le.s32.totalorder 1, %s11
    %p201 = scmp.lt.s32.totalorder %s11, 5
    %p202 = pnand %p200, %p201
    %p203 = pneg %p202
    // Predicated region
    $region37: #{tpu_custom_call.1} parent=5 // pred_check
      _
    $region38: #{tpu_custom_call.1} parent=5 // pred_check_branch
      %205 = sbr.rel (%p202) target = $region40
    $region39: #{tpu_custom_call.1} parent=5 // pred_region
      %s206 = ssub.s32 %s11, 1
      %p207 = scmp.lt.s32.totalorder %s20, 1
      %s208 = scalar_select %p207, %s20, 1
      %s209 = smul.addr %s208, 60
      %s210 = smul.addr %s209, 4
      %s211 = scalar_lea.vmem %s0, %s210
      %p212 = pneg %p49
      %p213 = pneg %p46
      %p214 = pneg %p70
      %p215 = pneg %p67
      %p216 = pneg %p91
      %p217 = pneg %p88
      %p218 = pneg %p112
      %p219 = pneg %p109
      %p220 = pneg %p133
      %p221 = pneg %p130
      %p222 = pneg %p161
      %p223 = pneg %p158
      %s224 = smul.u32 8, %s21
      %p225 = scmp.lt.s32.totalorder %s20, 1
      %s226 = scalar_select %p225, %s20, 1
      %p227 = scmp.lt.s32.totalorder %s224, 15
      %s228 = scalar_select %p227, %s224, 15
      %s229 = smul.addr %s228, 2
      %s230 = smul.addr %s226, 32
      %s231 = sadd.s32 %s229, %s230
      %s232 = smul.addr %s231, 8
      %s233 = scalar_lea.vmem %s5, %s232
      %p234 = scmp.lt.s32.totalorder %s20, 1
      %s235 = scalar_select %p234, %s20, 1
      %s236 = smul.addr %s235, 60
      %s237 = smul.addr %s236, 4
      %s238 = scalar_lea.vmem %s0, %s237
      %s239 = smul.u32 8, %s21
      %p240 = scmp.lt.s32.totalorder %s20, 1
      %s241 = scalar_select %p240, %s20, 1
      %p242 = scmp.lt.s32.totalorder %s239, 15
      %s243 = scalar_select %p242, %s239, 15
      %s244 = smul.addr %s243, 2
      %s245 = smul.addr %s241, 32
      %s246 = sadd.s32 %s244, %s245
      %s247 = smul.addr %s246, 8
      %s248 = scalar_lea.vmem %s5, %s247
      %s249 = smul.u32 8, %s21
      %s251 = smul.u32 %s21, 8
      %s252 = smul.u32 %s251, 3
      %s253 = smul.addr %s252, 4
      %s254 = scalar_lea.vmem %s238, %s253
      %v255 = vld [vmem:[%s254] sm:$0xf]
      %v256 = vld [vmem:[%s254 + $0x4] sm:$0xf]
      %v257 = vld [vmem:[%s254 + $0xc] sm:$0xf]
      %v258 = vld [vmem:[%s254 + $0x10] sm:$0xf]
      %v259 = vld [vmem:[%s254 + $0x18] sm:$0xf]
      %v260 = vld [vmem:[%s254 + $0x1c] sm:$0xf]
      %v261 = vld [vmem:[%s254 + $0x24] sm:$0xf]
      %v262 = vld [vmem:[%s254 + $0x28] sm:$0xf]
      %v263 = vld [vmem:[%s254 + $0x30] sm:$0xf]
      %v264 = vld [vmem:[%s254 + $0x34] sm:$0xf]
      %v265 = vld [vmem:[%s254 + $0x3c] sm:$0xf]
      %v266 = vld [vmem:[%s254 + $0x40] sm:$0xf]
      %v267 = vld [vmem:[%s254 + $0x48] sm:$0xf]
      %v268 = vld [vmem:[%s254 + $0x4c] sm:$0xf]
      %v269 = vld [vmem:[%s254 + $0x54] sm:$0xf]
      %v270 = vld [vmem:[%s254 + $0x58] sm:$0xf]
      %v271 = vld [vmem:[%s254 + $0x60] sm:$0xf]
      %v272 = vld [vmem:[%s254 + $0x64] sm:$0xf]
      %v273 = vld [vmem:[%s254 + $0x6c] sm:$0xf]
      %v274 = vld [vmem:[%s254 + $0x70] sm:$0xf]
      %v275 = vld [vmem:[%s1] sm:$0x3]
      %v276 = vld [vmem:[%s254 + $0x8] sm:$0x1]
      %v277 = vld [vmem:[%s254 + $0x14] sm:$0x1]
      %v278 = vld [vmem:[%s254 + $0x20] sm:$0x1]
      %v279 = vld [vmem:[%s254 + $0x2c] sm:$0x1]
      %v280 = vld [vmem:[%s254 + $0x38] sm:$0x1]
      %v281 = vld [vmem:[%s254 + $0x44] sm:$0x1]
      %v282 = vld [vmem:[%s254 + $0x50] sm:$0x1]
      %v283 = vld [vmem:[%s254 + $0x5c] sm:$0x1]
      %v284 = vld [vmem:[%s254 + $0x68] sm:$0x1]
      %v285 = vld [vmem:[%s254 + $0x74] sm:$0x1]
      %vm286 = vsmask.f32 3328
      %vm287 = vsmask.f32 7440
      %vm288 = vmor %vm286, %vm287
      %v290 = vshrl.u32 %v255, 16
      %v292 = vrot.slane %v290, 4
      %v293 = vshll.u32 %v255, 16
      %v295 = vrot.slane %v293, 5
      %v296 = vor.u32 %v292, %v295
      %v297 = vrot.slane %v296, 4
      %v299 = vshll.u32 %v256, 16
      %v301 = vrot.slane %v299, 5
      %v302 = vsel %vm288, %v297, %v301
      %v303 = vshrl.u32 %v256, 16
      %v305 = vrot.slane %v303, 4
      %v306 = vor.u32 %v305, %v301
      %v307 = vrot.slane %v306, 4
      %v309 = vshll.u32 %v276, 16
      %v311 = vrot.slane %v309, 5
      %v312 = vsel %vm288, %v307, %v311
      %v314 = vshrl.u32 %v257, 16
      %v316 = vrot.slane %v314, 4
      %v317 = vshll.u32 %v257, 16
      %v319 = vrot.slane %v317, 5
      %v320 = vor.u32 %v316, %v319
      %v321 = vrot.slane %v320, 4
      %v323 = vshll.u32 %v258, 16
      %v325 = vrot.slane %v323, 5
      %v326 = vsel %vm288, %v321, %v325
      %v327 = vshrl.u32 %v258, 16
      %v329 = vrot.slane %v327, 4
      %v330 = vor.u32 %v329, %v325
      %v331 = vrot.slane %v330, 4
      %v333 = vshll.u32 %v277, 16
      %v335 = vrot.slane %v333, 5
      %v336 = vsel %vm288, %v331, %v335
      %v338 = vshrl.u32 %v259, 16
      %v340 = vrot.slane %v338, 4
      %v341 = vshll.u32 %v259, 16
      %v343 = vrot.slane %v341, 5
      %v344 = vor.u32 %v340, %v343
      %v345 = vrot.slane %v344, 4
      %v347 = vshll.u32 %v260, 16
      %v349 = vrot.slane %v347, 5
      %v350 = vsel %vm288, %v345, %v349
      %v351 = vshrl.u32 %v260, 16
      %v353 = vrot.slane %v351, 4
      %v354 = vor.u32 %v353, %v349
      %v355 = vrot.slane %v354, 4
      %v357 = vshll.u32 %v278, 16
      %v359 = vrot.slane %v357, 5
      %v360 = vsel %vm288, %v355, %v359
      %v362 = vshrl.u32 %v261, 16
      %v364 = vrot.slane %v362, 4
      %v365 = vshll.u32 %v261, 16
      %v367 = vrot.slane %v365, 5
      %v368 = vor.u32 %v364, %v367
      %v369 = vrot.slane %v368, 4
      %v371 = vshll.u32 %v262, 16
      %v373 = vrot.slane %v371, 5
      %v374 = vsel %vm288, %v369, %v373
      %v375 = vshrl.u32 %v262, 16
      %v377 = vrot.slane %v375, 4
      %v378 = vor.u32 %v377, %v373
      %v379 = vrot.slane %v378, 4
      %v381 = vshll.u32 %v279, 16
      %v383 = vrot.slane %v381, 5
      %v384 = vsel %vm288, %v379, %v383
      %v386 = vshrl.u32 %v263, 16
      %v388 = vrot.slane %v386, 4
      %v389 = vshll.u32 %v263, 16
      %v391 = vrot.slane %v389, 5
      %v392 = vor.u32 %v388, %v391
      %v393 = vrot.slane %v392, 4
      %v395 = vshll.u32 %v264, 16
      %v397 = vrot.slane %v395, 5
      %v398 = vsel %vm288, %v393, %v397
      %v399 = vshrl.u32 %v264, 16
      %v401 = vrot.slane %v399, 4
      %v402 = vor.u32 %v401, %v397
      %v403 = vrot.slane %v402, 4
      %v405 = vshll.u32 %v280, 16
      %v407 = vrot.slane %v405, 5
      %v408 = vsel %vm288, %v403, %v407
      %v410 = vshrl.u32 %v265, 16
      %v412 = vrot.slane %v410, 4
      %v413 = vshll.u32 %v265, 16
      %v415 = vrot.slane %v413, 5
      %v416 = vor.u32 %v412, %v415
      %v417 = vrot.slane %v416, 4
      %v419 = vshll.u32 %v266, 16
      %v421 = vrot.slane %v419, 5
      %v422 = vsel %vm288, %v417, %v421
      %v423 = vshrl.u32 %v266, 16
      %v425 = vrot.slane %v423, 4
      %v426 = vor.u32 %v425, %v421
      %v427 = vrot.slane %v426, 4
      %v429 = vshll.u32 %v281, 16
      %v431 = vrot.slane %v429, 5
      %v432 = vsel %vm288, %v427, %v431
      %v434 = vshrl.u32 %v267, 16
      %v436 = vrot.slane %v434, 4
      %v437 = vshll.u32 %v267, 16
      %v439 = vrot.slane %v437, 5
      %v440 = vor.u32 %v436, %v439
      %v441 = vrot.slane %v440, 4
      %v443 = vshll.u32 %v268, 16
      %v445 = vrot.slane %v443, 5
      %v446 = vsel %vm288, %v441, %v445
      %v447 = vshrl.u32 %v268, 16
      %v449 = vrot.slane %v447, 4
      %v450 = vor.u32 %v449, %v445
      %v451 = vrot.slane %v450, 4
      %v453 = vshll.u32 %v282, 16
      %v455 = vrot.slane %v453, 5
      %v456 = vsel %vm288, %v451, %v455
      %v458 = vshrl.u32 %v269, 16
      %v460 = vrot.slane %v458, 4
      %v461 = vshll.u32 %v269, 16
      %v463 = vrot.slane %v461, 5
      %v464 = vor.u32 %v460, %v463
      %v465 = vrot.slane %v464, 4
      %v467 = vshll.u32 %v270, 16
      %v469 = vrot.slane %v467, 5
      %v470 = vsel %vm288, %v465, %v469
      %v471 = vshrl.u32 %v270, 16
      %v473 = vrot.slane %v471, 4
      %v474 = vor.u32 %v473, %v469
      %v475 = vrot.slane %v474, 4
      %v477 = vshll.u32 %v283, 16
      %v479 = vrot.slane %v477, 5
      %v480 = vsel %vm288, %v475, %v479
      %v482 = vshrl.u32 %v271, 16
      %v484 = vrot.slane %v482, 4
      %v485 = vshll.u32 %v271, 16
      %v487 = vrot.slane %v485, 5
      %v488 = vor.u32 %v484, %v487
      %v489 = vrot.slane %v488, 4
      %v491 = vshll.u32 %v272, 16
      %v493 = vrot.slane %v491, 5
      %v494 = vsel %vm288, %v489, %v493
      %v495 = vshrl.u32 %v272, 16
      %v497 = vrot.slane %v495, 4
      %v498 = vor.u32 %v497, %v493
      %v499 = vrot.slane %v498, 4
      %v501 = vshll.u32 %v284, 16
      %v503 = vrot.slane %v501, 5
      %v504 = vsel %vm288, %v499, %v503
      %v506 = vshrl.u32 %v273, 16
      %v508 = vrot.slane %v506, 4
      %v509 = vshll.u32 %v273, 16
      %v511 = vrot.slane %v509, 5
      %v512 = vor.u32 %v508, %v511
      %v513 = vrot.slane %v512, 4
      %v515 = vshll.u32 %v274, 16
      %v517 = vrot.slane %v515, 5
      %v518 = vsel %vm288, %v513, %v517
      %v519 = vshrl.u32 %v274, 16
      %v521 = vrot.slane %v519, 4
      %v522 = vor.u32 %v521, %v517
      %v523 = vrot.slane %v522, 4
      %v525 = vshll.u32 %v285, 16
      %v527 = vrot.slane %v525, 5
      %v528 = vsel %vm288, %v523, %v527
      %s529 = scalar_lea.vmem %s1, 2
      %v530 = vld [vmem:[%s529] sm:$0x3]
      %v531 = vunpack.c.l.b16 %v302
      %v532 = vunpack.c.l.b16 %v312
      %v533 = vunpack.c.l.b16 %v326
      %v534 = vunpack.c.l.b16 %v336
      %v535 = vunpack.c.l.b16 %v350
      %v536 = vunpack.c.l.b16 %v360
      %v537 = vunpack.c.l.b16 %v374
      %v538 = vunpack.c.l.b16 %v384
      %v539 = vunpack.c.l.b16 %v398
      %v540 = vunpack.c.l.b16 %v408
      %v541 = vunpack.c.l.b16 %v422
      %v542 = vunpack.c.l.b16 %v432
      %v543 = vunpack.c.l.b16 %v446
      %v544 = vunpack.c.l.b16 %v456
      %v545 = vunpack.c.l.b16 %v470
      %v546 = vunpack.c.l.b16 %v480
      %v547 = vunpack.c.l.b16 %v494
      %v548 = vunpack.c.l.b16 %v504
      %v549 = vunpack.c.l.b16 %v518
      %v550 = vunpack.c.l.b16 %v528
      %v551 = vpack.c.b16 %v532, %v531
      %v552 = vpack.c.b16 %v534, %v533
      %v553 = vpack.c.b16 %v536, %v535
      %v554 = vpack.c.b16 %v538, %v537
      %v555 = vpack.c.b16 %v540, %v539
      %v556 = vpack.c.b16 %v542, %v541
      %v557 = vpack.c.b16 %v544, %v543
      %v558 = vpack.c.b16 %v546, %v545
      %v559 = vpack.c.b16 %v548, %v547
      %v560 = vpack.c.b16 %v550, %v549
      %vm561 = vcmask 31744
      %v563 = vsel %vm561, %v551, 0
      %v566 = vsel %vm561, %v552, 0
      %v569 = vsel %vm561, %v553, 0
      %v572 = vsel %vm561, %v554, 0
      %v575 = vsel %vm561, %v555, 0
      %v578 = vsel %vm561, %v556, 0
      %v581 = vsel %vm561, %v557, 0
      %v584 = vsel %vm561, %v558, 0
      %v587 = vsel %vm561, %v559, 0
      %v590 = vsel %vm561, %v560, 0
      %vm592 = vcmask 1041408
      %v594 = vsel %vm592, %v530, 0
      %596 = vmatpush.bf16.msra.mxu0 0
      %597 = vmatpush.bf16.msra.mxu0 0
      %598 = vmatpush.bf16.msra.mxu0 0
      %599 = vmatpush.bf16.msra.mxu0 0
      %600 = vmatpush.bf16.msra.mxu0 0
      %601 = vmatpush.bf16.msra.mxu0 0
      %602 = vmatpush.bf16.msra.mxu0 0
      %603 = vmatpush.bf16.msra.mxu0 %v594
      %604 = vmatmul.bf16.gmra.mxu0 %v563
      %v605 = vpop.f32.mrf.mxu0
      %v606 = vadd.f32 0.0, %v605
      %v607 = vpop.f32.mrf.mxu0
      %v608 = vadd.f32 0.0, %v607
      %609 = vmatmul.bf16.gmra.mxu0 %v566
      %v610 = vpop.f32.mrf.mxu0
      %v611 = vadd.f32 0.0, %v610
      %v612 = vpop.f32.mrf.mxu0
      %v613 = vadd.f32 0.0, %v612
      %614 = vmatmul.bf16.gmra.mxu0 %v569
      %v615 = vpop.f32.mrf.mxu0
      %v616 = vadd.f32 0.0, %v615
      %v617 = vpop.f32.mrf.mxu0
      %v618 = vadd.f32 0.0, %v617
      %619 = vmatmul.bf16.gmra.mxu0 %v572
      %v620 = vpop.f32.mrf.mxu0
      %v621 = vadd.f32 0.0, %v620
      %v622 = vpop.f32.mrf.mxu0
      %v623 = vadd.f32 0.0, %v622
      %624 = vmatmul.bf16.gmra.mxu0 %v575
      %v625 = vpop.f32.mrf.mxu0
      %v626 = vadd.f32 0.0, %v625
      %v627 = vpop.f32.mrf.mxu0
      %v628 = vadd.f32 0.0, %v627
      %629 = vmatmul.bf16.gmra.mxu0 %v578
      %v630 = vpop.f32.mrf.mxu0
      %v631 = vadd.f32 0.0, %v630
      %v632 = vpop.f32.mrf.mxu0
      %v633 = vadd.f32 0.0, %v632
      %634 = vmatmul.bf16.gmra.mxu0 %v581
      %v635 = vpop.f32.mrf.mxu0
      %v636 = vadd.f32 0.0, %v635
      %v637 = vpop.f32.mrf.mxu0
      %v638 = vadd.f32 0.0, %v637
      %639 = vmatmul.bf16.gmra.mxu0 %v584
      %v640 = vpop.f32.mrf.mxu0
      %v641 = vadd.f32 0.0, %v640
      %v642 = vpop.f32.mrf.mxu0
      %v643 = vadd.f32 0.0, %v642
      %644 = vmatmul.bf16.gmra.mxu0 %v587
      %v645 = vpop.f32.mrf.mxu0
      %v646 = vadd.f32 0.0, %v645
      %v647 = vpop.f32.mrf.mxu0
      %v648 = vadd.f32 0.0, %v647
      %649 = vmatmul.bf16.gmra.mxu0 %v590
      %v650 = vpop.f32.mrf.mxu0
      %v651 = vadd.f32 0.0, %v650
      %v652 = vpop.f32.mrf.mxu0
      %v653 = vadd.f32 0.0, %v652
      %654 = vdwg.mxu0
      %v675 = vunpack.c.l.b16 %v255
      %v676 = vunpack.c.l.b16 %v256
      %v677 = vunpack.c.l.b16 %v257
      %v678 = vunpack.c.l.b16 %v258
      %v679 = vunpack.c.l.b16 %v259
      %v680 = vunpack.c.l.b16 %v260
      %v681 = vunpack.c.l.b16 %v261
      %v682 = vunpack.c.l.b16 %v262
      %v683 = vunpack.c.l.b16 %v263
      %v684 = vunpack.c.l.b16 %v264
      %v685 = vunpack.c.l.b16 %v265
      %v686 = vunpack.c.l.b16 %v266
      %v687 = vunpack.c.l.b16 %v267
      %v688 = vunpack.c.l.b16 %v268
      %v689 = vunpack.c.l.b16 %v269
      %v690 = vunpack.c.l.b16 %v270
      %v691 = vunpack.c.l.b16 %v271
      %v692 = vunpack.c.l.b16 %v272
      %v693 = vunpack.c.l.b16 %v273
      %v694 = vunpack.c.l.b16 %v274
      %v695 = vpack.c.b16 %v676, %v675
      %v696 = vpack.c.b16 %v678, %v677
      %v697 = vpack.c.b16 %v680, %v679
      %v698 = vpack.c.b16 %v682, %v681
      %v699 = vpack.c.b16 %v684, %v683
      %v700 = vpack.c.b16 %v686, %v685
      %v701 = vpack.c.b16 %v688, %v687
      %v702 = vpack.c.b16 %v690, %v689
      %v703 = vpack.c.b16 %v692, %v691
      %v704 = vpack.c.b16 %v694, %v693
      %v706 = vsel %vm561, %v695, 0
      %v709 = vsel %vm561, %v696, 0
      %v712 = vsel %vm561, %v697, 0
      %v715 = vsel %vm561, %v698, 0
      %v718 = vsel %vm561, %v699, 0
      %v721 = vsel %vm561, %v700, 0
      %v724 = vsel %vm561, %v701, 0
      %v727 = vsel %vm561, %v702, 0
      %v730 = vsel %vm561, %v703, 0
      %v733 = vsel %vm561, %v704, 0
      %v736 = vsel %vm592, %v275, 0
      %738 = vmatpush.bf16.msra.mxu0 0
      %739 = vmatpush.bf16.msra.mxu0 0
      %740 = vmatpush.bf16.msra.mxu0 0
      %741 = vmatpush.bf16.msra.mxu0 0
      %742 = vmatpush.bf16.msra.mxu0 0
      %743 = vmatpush.bf16.msra.mxu0 0
      %744 = vmatpush.bf16.msra.mxu0 0
      %745 = vmatpush.bf16.msra.mxu0 %v736
      %746 = vmatmul.bf16.gmra.mxu0 %v706
      %v747 = vpop.f32.mrf.mxu0
      %v748 = vadd.f32 %v606, %v747
      %v749 = vpop.f32.mrf.mxu0
      %v750 = vadd.f32 %v608, %v749
      %751 = vmatmul.bf16.gmra.mxu0 %v709
      %v752 = vpop.f32.mrf.mxu0
      %v753 = vadd.f32 %v611, %v752
      %v754 = vpop.f32.mrf.mxu0
      %v755 = vadd.f32 %v613, %v754
      %756 = vmatmul.bf16.gmra.mxu0 %v712
      %v757 = vpop.f32.mrf.mxu0
      %v758 = vadd.f32 %v616, %v757
      %v759 = vpop.f32.mrf.mxu0
      %v760 = vadd.f32 %v618, %v759
      %761 = vmatmul.bf16.gmra.mxu0 %v715
      %v762 = vpop.f32.mrf.mxu0
      %v763 = vadd.f32 %v621, %v762
      %v764 = vpop.f32.mrf.mxu0
      %v765 = vadd.f32 %v623, %v764
      %766 = vmatmul.bf16.gmra.mxu0 %v718
      %v767 = vpop.f32.mrf.mxu0
      %v768 = vadd.f32 %v626, %v767
      %v769 = vpop.f32.mrf.mxu0
      %v770 = vadd.f32 %v628, %v769
      %771 = vmatmul.bf16.gmra.mxu0 %v721
      %v772 = vpop.f32.mrf.mxu0
      %v773 = vadd.f32 %v631, %v772
      %v774 = vpop.f32.mrf.mxu0
      %v775 = vadd.f32 %v633, %v774
      %776 = vmatmul.bf16.gmra.mxu0 %v724
      %v777 = vpop.f32.mrf.mxu0
      %v778 = vadd.f32 %v636, %v777
      %v779 = vpop.f32.mrf.mxu0
      %v780 = vadd.f32 %v638, %v779
      %781 = vmatmul.bf16.gmra.mxu0 %v727
      %v782 = vpop.f32.mrf.mxu0
      %v783 = vadd.f32 %v641, %v782
      %v784 = vpop.f32.mrf.mxu0
      %v785 = vadd.f32 %v643, %v784
      %786 = vmatmul.bf16.gmra.mxu0 %v730
      %v787 = vpop.f32.mrf.mxu0
      %v788 = vadd.f32 %v646, %v787
      %v789 = vpop.f32.mrf.mxu0
      %v790 = vadd.f32 %v648, %v789
      %791 = vmatmul.bf16.gmra.mxu0 %v733
      %v792 = vpop.f32.mrf.mxu0
      %v793 = vadd.f32 %v651, %v792
      %v794 = vpop.f32.mrf.mxu0
      %v795 = vadd.f32 %v653, %v794
      %796 = vdwg.mxu0
      %v797 = vld [vmem:[%s254] sm:$0xe]
      %v798 = vld [vmem:[%s254 + $0xc] sm:$0xe]
      %v799 = vld [vmem:[%s254 + $0x18] sm:$0xe]
      %v800 = vld [vmem:[%s254 + $0x24] sm:$0xe]
      %v801 = vld [vmem:[%s254 + $0x30] sm:$0xe]
      %v802 = vld [vmem:[%s254 + $0x3c] sm:$0xe]
      %v803 = vld [vmem:[%s254 + $0x48] sm:$0xe]
      %v804 = vld [vmem:[%s254 + $0x54] sm:$0xe]
      %v805 = vld [vmem:[%s254 + $0x60] sm:$0xe]
      %v806 = vld [vmem:[%s254 + $0x6c] sm:$0xe]
      %vm827 = vcmask 1042432
      %vm828 = vcmask 1046532
      %vm829 = vmor %vm827, %vm828
      %v830 = vrot.slane %v797, 5
      %v831 = vrot.slane %v830, 4
      %v832 = vrot.slane %v256, 5
      %v833 = vsel %vm829, %v831, %v832
      %v834 = vrot.slane %v832, 4
      %v835 = vrot.slane %v276, 5
      %v836 = vsel %vm829, %v834, %v835
      %v837 = vrot.slane %v798, 5
      %v838 = vrot.slane %v837, 4
      %v839 = vrot.slane %v258, 5
      %v840 = vsel %vm829, %v838, %v839
      %v841 = vrot.slane %v839, 4
      %v842 = vrot.slane %v277, 5
      %v843 = vsel %vm829, %v841, %v842
      %v844 = vrot.slane %v799, 5
      %v845 = vrot.slane %v844, 4
      %v846 = vrot.slane %v260, 5
      %v847 = vsel %vm829, %v845, %v846
      %v848 = vrot.slane %v846, 4
      %v849 = vrot.slane %v278, 5
      %v850 = vsel %vm829, %v848, %v849
      %v851 = vrot.slane %v800, 5
      %v852 = vrot.slane %v851, 4
      %v853 = vrot.slane %v262, 5
      %v854 = vsel %vm829, %v852, %v853
      %v855 = vrot.slane %v853, 4
      %v856 = vrot.slane %v279, 5
      %v857 = vsel %vm829, %v855, %v856
      %v858 = vrot.slane %v801, 5
      %v859 = vrot.slane %v858, 4
      %v860 = vrot.slane %v264, 5
      %v861 = vsel %vm829, %v859, %v860
      %v862 = vrot.slane %v860, 4
      %v863 = vrot.slane %v280, 5
      %v864 = vsel %vm829, %v862, %v863
      %v865 = vrot.slane %v802, 5
      %v866 = vrot.slane %v865, 4
      %v867 = vrot.slane %v266, 5
      %v868 = vsel %vm829, %v866, %v867
      %v869 = vrot.slane %v867, 4
      %v870 = vrot.slane %v281, 5
      %v871 = vsel %vm829, %v869, %v870
      %v872 = vrot.slane %v803, 5
      %v873 = vrot.slane %v872, 4
      %v874 = vrot.slane %v268, 5
      %v875 = vsel %vm829, %v873, %v874
      %v876 = vrot.slane %v874, 4
      %v877 = vrot.slane %v282, 5
      %v878 = vsel %vm829, %v876, %v877
      %v879 = vrot.slane %v804, 5
      %v880 = vrot.slane %v879, 4
      %v881 = vrot.slane %v270, 5
      %v882 = vsel %vm829, %v880, %v881
      %v883 = vrot.slane %v881, 4
      %v884 = vrot.slane %v283, 5
      %v885 = vsel %vm829, %v883, %v884
      %v886 = vrot.slane %v805, 5
      %v887 = vrot.slane %v886, 4
      %v888 = vrot.slane %v272, 5
      %v889 = vsel %vm829, %v887, %v888
      %v890 = vrot.slane %v888, 4
      %v891 = vrot.slane %v284, 5
      %v892 = vsel %vm829, %v890, %v891
      %v893 = vrot.slane %v806, 5
      %v894 = vrot.slane %v893, 4
      %v895 = vrot.slane %v274, 5
      %v896 = vsel %vm829, %v894, %v895
      %v897 = vrot.slane %v895, 4
      %v898 = vrot.slane %v285, 5
      %v899 = vsel %vm829, %v897, %v898
      %s900 = scalar_lea.vmem %s1, 4
      %v901 = vld [vmem:[%s900] sm:$0x3]
      %v902 = vunpack.c.l.b16 %v833
      %v903 = vunpack.c.l.b16 %v836
      %v904 = vunpack.c.l.b16 %v840
      %v905 = vunpack.c.l.b16 %v843
      %v906 = vunpack.c.l.b16 %v847
      %v907 = vunpack.c.l.b16 %v850
      %v908 = vunpack.c.l.b16 %v854
      %v909 = vunpack.c.l.b16 %v857
      %v910 = vunpack.c.l.b16 %v861
      %v911 = vunpack.c.l.b16 %v864
      %v912 = vunpack.c.l.b16 %v868
      %v913 = vunpack.c.l.b16 %v871
      %v914 = vunpack.c.l.b16 %v875
      %v915 = vunpack.c.l.b16 %v878
      %v916 = vunpack.c.l.b16 %v882
      %v917 = vunpack.c.l.b16 %v885
      %v918 = vunpack.c.l.b16 %v889
      %v919 = vunpack.c.l.b16 %v892
      %v920 = vunpack.c.l.b16 %v896
      %v921 = vunpack.c.l.b16 %v899
      %v922 = vpack.c.b16 %v903, %v902
      %v923 = vpack.c.b16 %v905, %v904
      %v924 = vpack.c.b16 %v907, %v906
      %v925 = vpack.c.b16 %v909, %v908
      %v926 = vpack.c.b16 %v911, %v910
      %v927 = vpack.c.b16 %v913, %v912
      %v928 = vpack.c.b16 %v915, %v914
      %v929 = vpack.c.b16 %v917, %v916
      %v930 = vpack.c.b16 %v919, %v918
      %v931 = vpack.c.b16 %v921, %v920
      %v933 = vsel %vm561, %v922, 0
      %v936 = vsel %vm561, %v923, 0
      %v939 = vsel %vm561, %v924, 0
      %v942 = vsel %vm561, %v925, 0
      %v945 = vsel %vm561, %v926, 0
      %v948 = vsel %vm561, %v927, 0
      %v951 = vsel %vm561, %v928, 0
      %v954 = vsel %vm561, %v929, 0
      %v957 = vsel %vm561, %v930, 0
      %v960 = vsel %vm561, %v931, 0
      %v963 = vsel %vm592, %v901, 0
      %965 = vmatpush.bf16.msra.mxu0 0
      %966 = vmatpush.bf16.msra.mxu0 0
      %967 = vmatpush.bf16.msra.mxu0 0
      %968 = vmatpush.bf16.msra.mxu0 0
      %969 = vmatpush.bf16.msra.mxu0 0
      %970 = vmatpush.bf16.msra.mxu0 0
      %971 = vmatpush.bf16.msra.mxu0 0
      %972 = vmatpush.bf16.msra.mxu0 %v963
      %973 = vmatmul.bf16.gmra.mxu0 %v933
      %v974 = vpop.f32.mrf.mxu0
      %v975 = vadd.f32 0.0, %v974
      %v976 = vpop.f32.mrf.mxu0
      %v977 = vadd.f32 0.0, %v976
      %978 = vmatmul.bf16.gmra.mxu0 %v936
      %v979 = vpop.f32.mrf.mxu0
      %v980 = vadd.f32 0.0, %v979
      %v981 = vpop.f32.mrf.mxu0
      %v982 = vadd.f32 0.0, %v981
      %983 = vmatmul.bf16.gmra.mxu0 %v939
      %v984 = vpop.f32.mrf.mxu0
      %v985 = vadd.f32 0.0, %v984
      %v986 = vpop.f32.mrf.mxu0
      %v987 = vadd.f32 0.0, %v986
      %988 = vmatmul.bf16.gmra.mxu0 %v942
      %v989 = vpop.f32.mrf.mxu0
      %v990 = vadd.f32 0.0, %v989
      %v991 = vpop.f32.mrf.mxu0
      %v992 = vadd.f32 0.0, %v991
      %993 = vmatmul.bf16.gmra.mxu0 %v945
      %v994 = vpop.f32.mrf.mxu0
      %v995 = vadd.f32 0.0, %v994
      %v996 = vpop.f32.mrf.mxu0
      %v997 = vadd.f32 0.0, %v996
      %998 = vmatmul.bf16.gmra.mxu0 %v948
      %v999 = vpop.f32.mrf.mxu0
      %v1000 = vadd.f32 0.0, %v999
      %v1001 = vpop.f32.mrf.mxu0
      %v1002 = vadd.f32 0.0, %v1001
      %1003 = vmatmul.bf16.gmra.mxu0 %v951
      %v1004 = vpop.f32.mrf.mxu0
      %v1005 = vadd.f32 0.0, %v1004
      %v1006 = vpop.f32.mrf.mxu0
      %v1007 = vadd.f32 0.0, %v1006
      %1008 = vmatmul.bf16.gmra.mxu0 %v954
      %v1009 = vpop.f32.mrf.mxu0
      %v1010 = vadd.f32 0.0, %v1009
      %v1011 = vpop.f32.mrf.mxu0
      %v1012 = vadd.f32 0.0, %v1011
      %1013 = vmatmul.bf16.gmra.mxu0 %v957
      %v1014 = vpop.f32.mrf.mxu0
      %v1015 = vadd.f32 0.0, %v1014
      %v1016 = vpop.f32.mrf.mxu0
      %v1017 = vadd.f32 0.0, %v1016
      %1018 = vmatmul.bf16.gmra.mxu0 %v960
      %v1019 = vpop.f32.mrf.mxu0
      %v1020 = vadd.f32 0.0, %v1019
      %v1021 = vpop.f32.mrf.mxu0
      %v1022 = vadd.f32 0.0, %v1021
      %1023 = vdwg.mxu0
      %v1024 = vadd.f32 %v748, %v975
      %v1025 = vadd.f32 %v750, %v977
      %v1026 = vadd.f32 %v753, %v980
      %v1027 = vadd.f32 %v755, %v982
      %v1028 = vadd.f32 %v758, %v985
      %v1029 = vadd.f32 %v760, %v987
      %v1030 = vadd.f32 %v763, %v990
      %v1031 = vadd.f32 %v765, %v992
      %v1032 = vadd.f32 %v768, %v995
      %v1033 = vadd.f32 %v770, %v997
      %v1034 = vadd.f32 %v773, %v1000
      %v1035 = vadd.f32 %v775, %v1002
      %v1036 = vadd.f32 %v778, %v1005
      %v1037 = vadd.f32 %v780, %v1007
      %v1038 = vadd.f32 %v783, %v1010
      %v1039 = vadd.f32 %v785, %v1012
      %v1040 = vadd.f32 %v788, %v1015
      %v1041 = vadd.f32 %v790, %v1017
      %v1042 = vadd.f32 %v793, %v1020
      %v1043 = vadd.f32 %v795, %v1022
      %s1044 = sadd.s32 %s251, 1
      %s1045 = smul.u32 %s1044, 3
      %s1046 = smul.addr %s1045, 4
      %s1047 = scalar_lea.vmem %s238, %s1046
      %v1048 = vld [vmem:[%s1047] sm:$0xf]
      %v1049 = vld [vmem:[%s1047 + $0x4] sm:$0xf]
      %v1050 = vld [vmem:[%s1047 + $0xc] sm:$0xf]
      %v1051 = vld [vmem:[%s1047 + $0x10] sm:$0xf]
      %v1052 = vld [vmem:[%s1047 + $0x18] sm:$0xf]
      %v1053 = vld [vmem:[%s1047 + $0x1c] sm:$0xf]
      %v1054 = vld [vmem:[%s1047 + $0x24] sm:$0xf]
      %v1055 = vld [vmem:[%s1047 + $0x28] sm:$0xf]
      %v1056 = vld [vmem:[%s1047 + $0x30] sm:$0xf]
      %v1057 = vld [vmem:[%s1047 + $0x34] sm:$0xf]
      %v1058 = vld [vmem:[%s1047 + $0x3c] sm:$0xf]
      %v1059 = vld [vmem:[%s1047 + $0x40] sm:$0xf]
      %v1060 = vld [vmem:[%s1047 + $0x48] sm:$0xf]
      %v1061 = vld [vmem:[%s1047 + $0x4c] sm:$0xf]
      %v1062 = vld [vmem:[%s1047 + $0x54] sm:$0xf]
      %v1063 = vld [vmem:[%s1047 + $0x58] sm:$0xf]
      %v1064 = vld [vmem:[%s1047 + $0x60] sm:$0xf]
      %v1065 = vld [vmem:[%s1047 + $0x64] sm:$0xf]
      %v1066 = vld [vmem:[%s1047 + $0x6c] sm:$0xf]
      %v1067 = vld [vmem:[%s1047 + $0x70] sm:$0xf]
      %s1068 = scalar_lea.vmem %s1, 6
      %v1069 = vld [vmem:[%s1068] sm:$0x3]
      %v1090 = vunpack.c.l.b16 %v1048
      %v1091 = vunpack.c.l.b16 %v1049
      %v1092 = vunpack.c.l.b16 %v1050
      %v1093 = vunpack.c.l.b16 %v1051
      %v1094 = vunpack.c.l.b16 %v1052
      %v1095 = vunpack.c.l.b16 %v1053
      %v1096 = vunpack.c.l.b16 %v1054
      %v1097 = vunpack.c.l.b16 %v1055
      %v1098 = vunpack.c.l.b16 %v1056
      %v1099 = vunpack.c.l.b16 %v1057
      %v1100 = vunpack.c.l.b16 %v1058
      %v1101 = vunpack.c.l.b16 %v1059
      %v1102 = vunpack.c.l.b16 %v1060
      %v1103 = vunpack.c.l.b16 %v1061
      %v1104 = vunpack.c.l.b16 %v1062
      %v1105 = vunpack.c.l.b16 %v1063
      %v1106 = vunpack.c.l.b16 %v1064
      %v1107 = vunpack.c.l.b16 %v1065
      %v1108 = vunpack.c.l.b16 %v1066
      %v1109 = vunpack.c.l.b16 %v1067
      %v1110 = vpack.c.b16 %v1091, %v1090
      %v1111 = vpack.c.b16 %v1093, %v1092
      %v1112 = vpack.c.b16 %v1095, %v1094
      %v1113 = vpack.c.b16 %v1097, %v1096
      %v1114 = vpack.c.b16 %v1099, %v1098
      %v1115 = vpack.c.b16 %v1101, %v1100
      %v1116 = vpack.c.b16 %v1103, %v1102
      %v1117 = vpack.c.b16 %v1105, %v1104
      %v1118 = vpack.c.b16 %v1107, %v1106
      %v1119 = vpack.c.b16 %v1109, %v1108
      %v1121 = vsel %vm561, %v1110, 0
      %v1124 = vsel %vm561, %v1111, 0
      %v1127 = vsel %vm561, %v1112, 0
      %v1130 = vsel %vm561, %v1113, 0
      %v1133 = vsel %vm561, %v1114, 0
      %v1136 = vsel %vm561, %v1115, 0
      %v1139 = vsel %vm561, %v1116, 0
      %v1142 = vsel %vm561, %v1117, 0
      %v1145 = vsel %vm561, %v1118, 0
      %v1148 = vsel %vm561, %v1119, 0
      %v1151 = vsel %vm592, %v1069, 0
      %1153 = vmatpush.bf16.msra.mxu0 0
      %1154 = vmatpush.bf16.msra.mxu0 0
      %1155 = vmatpush.bf16.msra.mxu0 0
      %1156 = vmatpush.bf16.msra.mxu0 0
      %1157 = vmatpush.bf16.msra.mxu0 0
      %1158 = vmatpush.bf16.msra.mxu0 0
      %1159 = vmatpush.bf16.msra.mxu0 0
      %1160 = vmatpush.bf16.msra.mxu0 %v1151
      %1161 = vmatmul.bf16.gmra.mxu0 %v1121
      %v1162 = vpop.f32.mrf.mxu0
      %v1163 = vadd.f32 0.0, %v1162
      %v1164 = vpop.f32.mrf.mxu0
      %v1165 = vadd.f32 0.0, %v1164
      %1166 = vmatmul.bf16.gmra.mxu0 %v1124
      %v1167 = vpop.f32.mrf.mxu0
      %v1168 = vadd.f32 0.0, %v1167
      %v1169 = vpop.f32.mrf.mxu0
      %v1170 = vadd.f32 0.0, %v1169
      %1171 = vmatmul.bf16.gmra.mxu0 %v1127
      %v1172 = vpop.f32.mrf.mxu0
      %v1173 = vadd.f32 0.0, %v1172
      %v1174 = vpop.f32.mrf.mxu0
      %v1175 = vadd.f32 0.0, %v1174
      %1176 = vmatmul.bf16.gmra.mxu0 %v1130
      %v1177 = vpop.f32.mrf.mxu0
      %v1178 = vadd.f32 0.0, %v1177
      %v1179 = vpop.f32.mrf.mxu0
      %v1180 = vadd.f32 0.0, %v1179
      %1181 = vmatmul.bf16.gmra.mxu0 %v1133
      %v1182 = vpop.f32.mrf.mxu0
      %v1183 = vadd.f32 0.0, %v1182
      %v1184 = vpop.f32.mrf.mxu0
      %v1185 = vadd.f32 0.0, %v1184
      %1186 = vmatmul.bf16.gmra.mxu0 %v1136
      %v1187 = vpop.f32.mrf.mxu0
      %v1188 = vadd.f32 0.0, %v1187
      %v1189 = vpop.f32.mrf.mxu0
      %v1190 = vadd.f32 0.0, %v1189
      %1191 = vmatmul.bf16.gmra.mxu0 %v1139
      %v1192 = vpop.f32.mrf.mxu0
      %v1193 = vadd.f32 0.0, %v1192
      %v1194 = vpop.f32.mrf.mxu0
      %v1195 = vadd.f32 0.0, %v1194
      %1196 = vmatmul.bf16.gmra.mxu0 %v1142
      %v1197 = vpop.f32.mrf.mxu0
      %v1198 = vadd.f32 0.0, %v1197
      %v1199 = vpop.f32.mrf.mxu0
      %v1200 = vadd.f32 0.0, %v1199
      %1201 = vmatmul.bf16.gmra.mxu0 %v1145
      %v1202 = vpop.f32.mrf.mxu0
      %v1203 = vadd.f32 0.0, %v1202
      %v1204 = vpop.f32.mrf.mxu0
      %v1205 = vadd.f32 0.0, %v1204
      %1206 = vmatmul.bf16.gmra.mxu0 %v1148
      %v1207 = vpop.f32.mrf.mxu0
      %v1208 = vadd.f32 0.0, %v1207
      %v1209 = vpop.f32.mrf.mxu0
      %v1210 = vadd.f32 0.0, %v1209
      %1211 = vdwg.mxu0
      %v1212 = vadd.f32 %v1024, %v1163
      %v1213 = vadd.f32 %v1025, %v1165
      %v1214 = vadd.f32 %v1026, %v1168
      %v1215 = vadd.f32 %v1027, %v1170
      %v1216 = vadd.f32 %v1028, %v1173
      %v1217 = vadd.f32 %v1029, %v1175
      %v1218 = vadd.f32 %v1030, %v1178
      %v1219 = vadd.f32 %v1031, %v1180
      %v1220 = vadd.f32 %v1032, %v1183
      %v1221 = vadd.f32 %v1033, %v1185
      %v1222 = vadd.f32 %v1034, %v1188
      %v1223 = vadd.f32 %v1035, %v1190
      %v1224 = vadd.f32 %v1036, %v1193
      %v1225 = vadd.f32 %v1037, %v1195
      %v1226 = vadd.f32 %v1038, %v1198
      %v1227 = vadd.f32 %v1039, %v1200
      %v1228 = vadd.f32 %v1040, %v1203
      %v1229 = vadd.f32 %v1041, %v1205
      %v1230 = vadd.f32 %v1042, %v1208
      %v1231 = vadd.f32 %v1043, %v1210
      %v1232 = vld [vmem:[%s1047] sm:$0xf]
      %v1233 = vld [vmem:[%s1047 + $0x4] sm:$0xf]
      %v1234 = vld [vmem:[%s1047 + $0x8] sm:$0x1]
      %v1235 = vld [vmem:[%s1047 + $0xc] sm:$0xf]
      %v1236 = vld [vmem:[%s1047 + $0x10] sm:$0xf]
      %v1237 = vld [vmem:[%s1047 + $0x14] sm:$0x1]
      %v1238 = vld [vmem:[%s1047 + $0x18] sm:$0xf]
      %v1239 = vld [vmem:[%s1047 + $0x1c] sm:$0xf]
      %v1240 = vld [vmem:[%s1047 + $0x20] sm:$0x1]
      %v1241 = vld [vmem:[%s1047 + $0x24] sm:$0xf]
      %v1242 = vld [vmem:[%s1047 + $0x28] sm:$0xf]
      %v1243 = vld [vmem:[%s1047 + $0x2c] sm:$0x1]
      %v1244 = vld [vmem:[%s1047 + $0x30] sm:$0xf]
      %v1245 = vld [vmem:[%s1047 + $0x34] sm:$0xf]
      %v1246 = vld [vmem:[%s1047 + $0x38] sm:$0x1]
      %v1247 = vld [vmem:[%s1047 + $0x3c] sm:$0xf]
      %v1248 = vld [vmem:[%s1047 + $0x40] sm:$0xf]
      %v1249 = vld [vmem:[%s1047 + $0x44] sm:$0x1]
      %v1250 = vld [vmem:[%s1047 + $0x48] sm:$0xf]
      %v1251 = vld [vmem:[%s1047 + $0x4c] sm:$0xf]
      %v1252 = vld [vmem:[%s1047 + $0x50] sm:$0x1]
      %v1253 = vld [vmem:[%s1047 + $0x54] sm:$0xf]
      %v1254 = vld [vmem:[%s1047 + $0x58] sm:$0xf]
      %v1255 = vld [vmem:[%s1047 + $0x5c] sm:$0x1]
      %v1256 = vld [vmem:[%s1047 + $0x60] sm:$0xf]
      %v1257 = vld [vmem:[%s1047 + $0x64] sm:$0xf]
      %v1258 = vld [vmem:[%s1047 + $0x68] sm:$0x1]
      %v1259 = vld [vmem:[%s1047 + $0x6c] sm:$0xf]
      %v1260 = vld [vmem:[%s1047 + $0x70] sm:$0xf]
      %v1261 = vld [vmem:[%s1047 + $0x74] sm:$0x1]
      %v1263 = vshrl.u32 %v1232, 16
      %v1265 = vrot.slane %v1263, 4
      %v1266 = vshll.u32 %v1232, 16
      %v1268 = vrot.slane %v1266, 5
      %v1269 = vor.u32 %v1265, %v1268
      %v1270 = vrot.slane %v1269, 4
      %v1272 = vshll.u32 %v1233, 16
      %v1274 = vrot.slane %v1272, 5
      %v1275 = vsel %vm288, %v1270, %v1274
      %v1276 = vshrl.u32 %v1233, 16
      %v1278 = vrot.slane %v1276, 4
      %v1279 = vor.u32 %v1278, %v1274
      %v1280 = vrot.slane %v1279, 4
      %v1282 = vshll.u32 %v1234, 16
      %v1284 = vrot.slane %v1282, 5
      %v1285 = vsel %vm288, %v1280, %v1284
      %v1287 = vshrl.u32 %v1235, 16
      %v1289 = vrot.slane %v1287, 4
      %v1290 = vshll.u32 %v1235, 16
      %v1292 = vrot.slane %v1290, 5
      %v1293 = vor.u32 %v1289, %v1292
      %v1294 = vrot.slane %v1293, 4
      %v1296 = vshll.u32 %v1236, 16
      %v1298 = vrot.slane %v1296, 5
      %v1299 = vsel %vm288, %v1294, %v1298
      %v1300 = vshrl.u32 %v1236, 16
      %v1302 = vrot.slane %v1300, 4
      %v1303 = vor.u32 %v1302, %v1298
      %v1304 = vrot.slane %v1303, 4
      %v1306 = vshll.u32 %v1237, 16
      %v1308 = vrot.slane %v1306, 5
      %v1309 = vsel %vm288, %v1304, %v1308
      %v1311 = vshrl.u32 %v1238, 16
      %v1313 = vrot.slane %v1311, 4
      %v1314 = vshll.u32 %v1238, 16
      %v1316 = vrot.slane %v1314, 5
      %v1317 = vor.u32 %v1313, %v1316
      %v1318 = vrot.slane %v1317, 4
      %v1320 = vshll.u32 %v1239, 16
      %v1322 = vrot.slane %v1320, 5
      %v1323 = vsel %vm288, %v1318, %v1322
      %v1324 = vshrl.u32 %v1239, 16
      %v1326 = vrot.slane %v1324, 4
      %v1327 = vor.u32 %v1326, %v1322
      %v1328 = vrot.slane %v1327, 4
      %v1330 = vshll.u32 %v1240, 16
      %v1332 = vrot.slane %v1330, 5
      %v1333 = vsel %vm288, %v1328, %v1332
      %v1335 = vshrl.u32 %v1241, 16
      %v1337 = vrot.slane %v1335, 4
      %v1338 = vshll.u32 %v1241, 16
      %v1340 = vrot.slane %v1338, 5
      %v1341 = vor.u32 %v1337, %v1340
      %v1342 = vrot.slane %v1341, 4
      %v1344 = vshll.u32 %v1242, 16
      %v1346 = vrot.slane %v1344, 5
      %v1347 = vsel %vm288, %v1342, %v1346
      %v1348 = vshrl.u32 %v1242, 16
      %v1350 = vrot.slane %v1348, 4
      %v1351 = vor.u32 %v1350, %v1346
      %v1352 = vrot.slane %v1351, 4
      %v1354 = vshll.u32 %v1243, 16
      %v1356 = vrot.slane %v1354, 5
      %v1357 = vsel %vm288, %v1352, %v1356
      %v1359 = vshrl.u32 %v1244, 16
      %v1361 = vrot.slane %v1359, 4
      %v1362 = vshll.u32 %v1244, 16
      %v1364 = vrot.slane %v1362, 5
      %v1365 = vor.u32 %v1361, %v1364
      %v1366 = vrot.slane %v1365, 4
      %v1368 = vshll.u32 %v1245, 16
      %v1370 = vrot.slane %v1368, 5
      %v1371 = vsel %vm288, %v1366, %v1370
      %v1372 = vshrl.u32 %v1245, 16
      %v1374 = vrot.slane %v1372, 4
      %v1375 = vor.u32 %v1374, %v1370
      %v1376 = vrot.slane %v1375, 4
      %v1378 = vshll.u32 %v1246, 16
      %v1380 = vrot.slane %v1378, 5
      %v1381 = vsel %vm288, %v1376, %v1380
      %v1383 = vshrl.u32 %v1247, 16
      %v1385 = vrot.slane %v1383, 4
      %v1386 = vshll.u32 %v1247, 16
      %v1388 = vrot.slane %v1386, 5
      %v1389 = vor.u32 %v1385, %v1388
      %v1390 = vrot.slane %v1389, 4
      %v1392 = vshll.u32 %v1248, 16
      %v1394 = vrot.slane %v1392, 5
      %v1395 = vsel %vm288, %v1390, %v1394
      %v1396 = vshrl.u32 %v1248, 16
      %v1398 = vrot.slane %v1396, 4
      %v1399 = vor.u32 %v1398, %v1394
      %v1400 = vrot.slane %v1399, 4
      %v1402 = vshll.u32 %v1249, 16
      %v1404 = vrot.slane %v1402, 5
      %v1405 = vsel %vm288, %v1400, %v1404
      %v1407 = vshrl.u32 %v1250, 16
      %v1409 = vrot.slane %v1407, 4
      %v1410 = vshll.u32 %v1250, 16
      %v1412 = vrot.slane %v1410, 5
      %v1413 = vor.u32 %v1409, %v1412
      %v1414 = vrot.slane %v1413, 4
      %v1416 = vshll.u32 %v1251, 16
      %v1418 = vrot.slane %v1416, 5
      %v1419 = vsel %vm288, %v1414, %v1418
      %v1420 = vshrl.u32 %v1251, 16
      %v1422 = vrot.slane %v1420, 4
      %v1423 = vor.u32 %v1422, %v1418
      %v1424 = vrot.slane %v1423, 4
      %v1426 = vshll.u32 %v1252, 16
      %v1428 = vrot.slane %v1426, 5
      %v1429 = vsel %vm288, %v1424, %v1428
      %v1431 = vshrl.u32 %v1253, 16
      %v1433 = vrot.slane %v1431, 4
      %v1434 = vshll.u32 %v1253, 16
      %v1436 = vrot.slane %v1434, 5
      %v1437 = vor.u32 %v1433, %v1436
      %v1438 = vrot.slane %v1437, 4
      %v1440 = vshll.u32 %v1254, 16
      %v1442 = vrot.slane %v1440, 5
      %v1443 = vsel %vm288, %v1438, %v1442
      %v1444 = vshrl.u32 %v1254, 16
      %v1446 = vrot.slane %v1444, 4
      %v1447 = vor.u32 %v1446, %v1442
      %v1448 = vrot.slane %v1447, 4
      %v1450 = vshll.u32 %v1255, 16
      %v1452 = vrot.slane %v1450, 5
      %v1453 = vsel %vm288, %v1448, %v1452
      %v1455 = vshrl.u32 %v1256, 16
      %v1457 = vrot.slane %v1455, 4
      %v1458 = vshll.u32 %v1256, 16
      %v1460 = vrot.slane %v1458, 5
      %v1461 = vor.u32 %v1457, %v1460
      %v1462 = vrot.slane %v1461, 4
      %v1464 = vshll.u32 %v1257, 16
      %v1466 = vrot.slane %v1464, 5
      %v1467 = vsel %vm288, %v1462, %v1466
      %v1468 = vshrl.u32 %v1257, 16
      %v1470 = vrot.slane %v1468, 4
      %v1471 = vor.u32 %v1470, %v1466
      %v1472 = vrot.slane %v1471, 4
      %v1474 = vshll.u32 %v1258, 16
      %v1476 = vrot.slane %v1474, 5
      %v1477 = vsel %vm288, %v1472, %v1476
      %v1479 = vshrl.u32 %v1259, 16
      %v1481 = vrot.slane %v1479, 4
      %v1482 = vshll.u32 %v1259, 16
      %v1484 = vrot.slane %v1482, 5
      %v1485 = vor.u32 %v1481, %v1484
      %v1486 = vrot.slane %v1485, 4
      %v1488 = vshll.u32 %v1260, 16
      %v1490 = vrot.slane %v1488, 5
      %v1491 = vsel %vm288, %v1486, %v1490
      %v1492 = vshrl.u32 %v1260, 16
      %v1494 = vrot.slane %v1492, 4
      %v1495 = vor.u32 %v1494, %v1490
      %v1496 = vrot.slane %v1495, 4
      %v1498 = vshll.u32 %v1261, 16
      %v1500 = vrot.slane %v1498, 5
      %v1501 = vsel %vm288, %v1496, %v1500
      %s1502 = scalar_lea.vmem %s1, 8
      %v1503 = vld [vmem:[%s1502] sm:$0x3]
      %v1504 = vunpack.c.l.b16 %v1275
      %v1505 = vunpack.c.l.b16 %v1285
      %v1506 = vunpack.c.l.b16 %v1299
      %v1507 = vunpack.c.l.b16 %v1309
      %v1508 = vunpack.c.l.b16 %v1323
      %v1509 = vunpack.c.l.b16 %v1333
      %v1510 = vunpack.c.l.b16 %v1347
      %v1511 = vunpack.c.l.b16 %v1357
      %v1512 = vunpack.c.l.b16 %v1371
      %v1513 = vunpack.c.l.b16 %v1381
      %v1514 = vunpack.c.l.b16 %v1395
      %v1515 = vunpack.c.l.b16 %v1405
      %v1516 = vunpack.c.l.b16 %v1419
      %v1517 = vunpack.c.l.b16 %v1429
      %v1518 = vunpack.c.l.b16 %v1443
      %v1519 = vunpack.c.l.b16 %v1453
      %v1520 = vunpack.c.l.b16 %v1467
      %v1521 = vunpack.c.l.b16 %v1477
      %v1522 = vunpack.c.l.b16 %v1491
      %v1523 = vunpack.c.l.b16 %v1501
      %v1524 = vpack.c.b16 %v1505, %v1504
      %v1525 = vpack.c.b16 %v1507, %v1506
      %v1526 = vpack.c.b16 %v1509, %v1508
      %v1527 = vpack.c.b16 %v1511, %v1510
      %v1528 = vpack.c.b16 %v1513, %v1512
      %v1529 = vpack.c.b16 %v1515, %v1514
      %v1530 = vpack.c.b16 %v1517, %v1516
      %v1531 = vpack.c.b16 %v1519, %v1518
      %v1532 = vpack.c.b16 %v1521, %v1520
      %v1533 = vpack.c.b16 %v1523, %v1522
      %v1535 = vsel %vm561, %v1524, 0
      %v1538 = vsel %vm561, %v1525, 0
      %v1541 = vsel %vm561, %v1526, 0
      %v1544 = vsel %vm561, %v1527, 0
      %v1547 = vsel %vm561, %v1528, 0
      %v1550 = vsel %vm561, %v1529, 0
      %v1553 = vsel %vm561, %v1530, 0
      %v1556 = vsel %vm561, %v1531, 0
      %v1559 = vsel %vm561, %v1532, 0
      %v1562 = vsel %vm561, %v1533, 0
      %v1565 = vsel %vm592, %v1503, 0
      %1567 = vmatpush.bf16.msra.mxu0 0
      %1568 = vmatpush.bf16.msra.mxu0 0
      %1569 = vmatpush.bf16.msra.mxu0 0
      %1570 = vmatpush.bf16.msra.mxu0 0
      %1571 = vmatpush.bf16.msra.mxu0 0
      %1572 = vmatpush.bf16.msra.mxu0 0
      %1573 = vmatpush.bf16.msra.mxu0 0
      %1574 = vmatpush.bf16.msra.mxu0 %v1565
      %1575 = vmatmul.bf16.gmra.mxu0 %v1535
      %v1576 = vpop.f32.mrf.mxu0
      %v1577 = vadd.f32 0.0, %v1576
      %v1578 = vpop.f32.mrf.mxu0
      %v1579 = vadd.f32 0.0, %v1578
      %1580 = vmatmul.bf16.gmra.mxu0 %v1538
      %v1581 = vpop.f32.mrf.mxu0
      %v1582 = vadd.f32 0.0, %v1581
      %v1583 = vpop.f32.mrf.mxu0
      %v1584 = vadd.f32 0.0, %v1583
      %1585 = vmatmul.bf16.gmra.mxu0 %v1541
      %v1586 = vpop.f32.mrf.mxu0
      %v1587 = vadd.f32 0.0, %v1586
      %v1588 = vpop.f32.mrf.mxu0
      %v1589 = vadd.f32 0.0, %v1588
      %1590 = vmatmul.bf16.gmra.mxu0 %v1544
      %v1591 = vpop.f32.mrf.mxu0
      %v1592 = vadd.f32 0.0, %v1591
      %v1593 = vpop.f32.mrf.mxu0
      %v1594 = vadd.f32 0.0, %v1593
      %1595 = vmatmul.bf16.gmra.mxu0 %v1547
      %v1596 = vpop.f32.mrf.mxu0
      %v1597 = vadd.f32 0.0, %v1596
      %v1598 = vpop.f32.mrf.mxu0
      %v1599 = vadd.f32 0.0, %v1598
      %1600 = vmatmul.bf16.gmra.mxu0 %v1550
      %v1601 = vpop.f32.mrf.mxu0
      %v1602 = vadd.f32 0.0, %v1601
      %v1603 = vpop.f32.mrf.mxu0
      %v1604 = vadd.f32 0.0, %v1603
      %1605 = vmatmul.bf16.gmra.mxu0 %v1553
      %v1606 = vpop.f32.mrf.mxu0
      %v1607 = vadd.f32 0.0, %v1606
      %v1608 = vpop.f32.mrf.mxu0
      %v1609 = vadd.f32 0.0, %v1608
      %1610 = vmatmul.bf16.gmra.mxu0 %v1556
      %v1611 = vpop.f32.mrf.mxu0
      %v1612 = vadd.f32 0.0, %v1611
      %v1613 = vpop.f32.mrf.mxu0
      %v1614 = vadd.f32 0.0, %v1613
      %1615 = vmatmul.bf16.gmra.mxu0 %v1559
      %v1616 = vpop.f32.mrf.mxu0
      %v1617 = vadd.f32 0.0, %v1616
      %v1618 = vpop.f32.mrf.mxu0
      %v1619 = vadd.f32 0.0, %v1618
      %1620 = vmatmul.bf16.gmra.mxu0 %v1562
      %v1621 = vpop.f32.mrf.mxu0
      %v1622 = vadd.f32 0.0, %v1621
      %v1623 = vpop.f32.mrf.mxu0
      %v1624 = vadd.f32 0.0, %v1623
      %1625 = vdwg.mxu0
      %v1626 = vadd.f32 %v1212, %v1577
      %v1627 = vadd.f32 %v1213, %v1579
      %v1628 = vadd.f32 %v1214, %v1582
      %v1629 = vadd.f32 %v1215, %v1584
      %v1630 = vadd.f32 %v1216, %v1587
      %v1631 = vadd.f32 %v1217, %v1589
      %v1632 = vadd.f32 %v1218, %v1592
      %v1633 = vadd.f32 %v1219, %v1594
      %v1634 = vadd.f32 %v1220, %v1597
      %v1635 = vadd.f32 %v1221, %v1599
      %v1636 = vadd.f32 %v1222, %v1602
      %v1637 = vadd.f32 %v1223, %v1604
      %v1638 = vadd.f32 %v1224, %v1607
      %v1639 = vadd.f32 %v1225, %v1609
      %v1640 = vadd.f32 %v1226, %v1612
      %v1641 = vadd.f32 %v1227, %v1614
      %v1642 = vadd.f32 %v1228, %v1617
      %v1643 = vadd.f32 %v1229, %v1619
      %v1644 = vadd.f32 %v1230, %v1622
      %v1645 = vadd.f32 %v1231, %v1624
      %v1646 = vld [vmem:[%s1047] sm:$0xe]
      %v1647 = vld [vmem:[%s1047 + $0xc] sm:$0xe]
      %v1648 = vld [vmem:[%s1047 + $0x18] sm:$0xe]
      %v1649 = vld [vmem:[%s1047 + $0x24] sm:$0xe]
      %v1650 = vld [vmem:[%s1047 + $0x30] sm:$0xe]
      %v1651 = vld [vmem:[%s1047 + $0x3c] sm:$0xe]
      %v1652 = vld [vmem:[%s1047 + $0x48] sm:$0xe]
      %v1653 = vld [vmem:[%s1047 + $0x54] sm:$0xe]
      %v1654 = vld [vmem:[%s1047 + $0x60] sm:$0xe]
      %v1655 = vld [vmem:[%s1047 + $0x6c] sm:$0xe]
      %v1686 = vrot.slane %v1646, 5
      %v1687 = vrot.slane %v1686, 4
      %v1688 = vrot.slane %v1233, 5
      %v1689 = vsel %vm829, %v1687, %v1688
      %v1690 = vrot.slane %v1688, 4
      %v1691 = vrot.slane %v1234, 5
      %v1692 = vsel %vm829, %v1690, %v1691
      %v1693 = vrot.slane %v1647, 5
      %v1694 = vrot.slane %v1693, 4
      %v1695 = vrot.slane %v1236, 5
      %v1696 = vsel %vm829, %v1694, %v1695
      %v1697 = vrot.slane %v1695, 4
      %v1698 = vrot.slane %v1237, 5
      %v1699 = vsel %vm829, %v1697, %v1698
      %v1700 = vrot.slane %v1648, 5
      %v1701 = vrot.slane %v1700, 4
      %v1702 = vrot.slane %v1239, 5
      %v1703 = vsel %vm829, %v1701, %v1702
      %v1704 = vrot.slane %v1702, 4
      %v1705 = vrot.slane %v1240, 5
      %v1706 = vsel %vm829, %v1704, %v1705
      %v1707 = vrot.slane %v1649, 5
      %v1708 = vrot.slane %v1707, 4
      %v1709 = vrot.slane %v1242, 5
      %v1710 = vsel %vm829, %v1708, %v1709
      %v1711 = vrot.slane %v1709, 4
      %v1712 = vrot.slane %v1243, 5
      %v1713 = vsel %vm829, %v1711, %v1712
      %v1714 = vrot.slane %v1650, 5
      %v1715 = vrot.slane %v1714, 4
      %v1716 = vrot.slane %v1245, 5
      %v1717 = vsel %vm829, %v1715, %v1716
      %v1718 = vrot.slane %v1716, 4
      %v1719 = vrot.slane %v1246, 5
      %v1720 = vsel %vm829, %v1718, %v1719
      %v1721 = vrot.slane %v1651, 5
      %v1722 = vrot.slane %v1721, 4
      %v1723 = vrot.slane %v1248, 5
      %v1724 = vsel %vm829, %v1722, %v1723
      %v1725 = vrot.slane %v1723, 4
      %v1726 = vrot.slane %v1249, 5
      %v1727 = vsel %vm829, %v1725, %v1726
      %v1728 = vrot.slane %v1652, 5
      %v1729 = vrot.slane %v1728, 4
      %v1730 = vrot.slane %v1251, 5
      %v1731 = vsel %vm829, %v1729, %v1730
      %v1732 = vrot.slane %v1730, 4
      %v1733 = vrot.slane %v1252, 5
      %v1734 = vsel %vm829, %v1732, %v1733
      %v1735 = vrot.slane %v1653, 5
      %v1736 = vrot.slane %v1735, 4
      %v1737 = vrot.slane %v1254, 5
      %v1738 = vsel %vm829, %v1736, %v1737
      %v1739 = vrot.slane %v1737, 4
      %v1740 = vrot.slane %v1255, 5
      %v1741 = vsel %vm829, %v1739, %v1740
      %v1742 = vrot.slane %v1654, 5
      %v1743 = vrot.slane %v1742, 4
      %v1744 = vrot.slane %v1257, 5
      %v1745 = vsel %vm829, %v1743, %v1744
      %v1746 = vrot.slane %v1744, 4
      %v1747 = vrot.slane %v1258, 5
      %v1748 = vsel %vm829, %v1746, %v1747
      %v1749 = vrot.slane %v1655, 5
      %v1750 = vrot.slane %v1749, 4
      %v1751 = vrot.slane %v1260, 5
      %v1752 = vsel %vm829, %v1750, %v1751
      %v1753 = vrot.slane %v1751, 4
      %v1754 = vrot.slane %v1261, 5
      %v1755 = vsel %vm829, %v1753, %v1754
      %s1756 = scalar_lea.vmem %s1, 10
      %v1757 = vld [vmem:[%s1756] sm:$0x3]
      %v1758 = vunpack.c.l.b16 %v1689
      %v1759 = vunpack.c.l.b16 %v1692
      %v1760 = vunpack.c.l.b16 %v1696
      %v1761 = vunpack.c.l.b16 %v1699
      %v1762 = vunpack.c.l.b16 %v1703
      %v1763 = vunpack.c.l.b16 %v1706
      %v1764 = vunpack.c.l.b16 %v1710
      %v1765 = vunpack.c.l.b16 %v1713
      %v1766 = vunpack.c.l.b16 %v1717
      %v1767 = vunpack.c.l.b16 %v1720
      %v1768 = vunpack.c.l.b16 %v1724
      %v1769 = vunpack.c.l.b16 %v1727
      %v1770 = vunpack.c.l.b16 %v1731
      %v1771 = vunpack.c.l.b16 %v1734
      %v1772 = vunpack.c.l.b16 %v1738
      %v1773 = vunpack.c.l.b16 %v1741
      %v1774 = vunpack.c.l.b16 %v1745
      %v1775 = vunpack.c.l.b16 %v1748
      %v1776 = vunpack.c.l.b16 %v1752
      %v1777 = vunpack.c.l.b16 %v1755
      %v1778 = vpack.c.b16 %v1759, %v1758
      %v1779 = vpack.c.b16 %v1761, %v1760
      %v1780 = vpack.c.b16 %v1763, %v1762
      %v1781 = vpack.c.b16 %v1765, %v1764
      %v1782 = vpack.c.b16 %v1767, %v1766
      %v1783 = vpack.c.b16 %v1769, %v1768
      %v1784 = vpack.c.b16 %v1771, %v1770
      %v1785 = vpack.c.b16 %v1773, %v1772
      %v1786 = vpack.c.b16 %v1775, %v1774
      %v1787 = vpack.c.b16 %v1777, %v1776
      %v1789 = vsel %vm561, %v1778, 0
      %v1792 = vsel %vm561, %v1779, 0
      %v1795 = vsel %vm561, %v1780, 0
      %v1798 = vsel %vm561, %v1781, 0
      %v1801 = vsel %vm561, %v1782, 0
      %v1804 = vsel %vm561, %v1783, 0
      %v1807 = vsel %vm561, %v1784, 0
      %v1810 = vsel %vm561, %v1785, 0
      %v1813 = vsel %vm561, %v1786, 0
      %v1816 = vsel %vm561, %v1787, 0
      %v1819 = vsel %vm592, %v1757, 0
      %1821 = vmatpush.bf16.msra.mxu0 0
      %1822 = vmatpush.bf16.msra.mxu0 0
      %1823 = vmatpush.bf16.msra.mxu0 0
      %1824 = vmatpush.bf16.msra.mxu0 0
      %1825 = vmatpush.bf16.msra.mxu0 0
      %1826 = vmatpush.bf16.msra.mxu0 0
      %1827 = vmatpush.bf16.msra.mxu0 0
      %1828 = vmatpush.bf16.msra.mxu0 %v1819
      %1829 = vmatmul.bf16.gmra.mxu0 %v1789
      %v1830 = vpop.f32.mrf.mxu0
      %v1831 = vadd.f32 0.0, %v1830
      %v1832 = vpop.f32.mrf.mxu0
      %v1833 = vadd.f32 0.0, %v1832
      %1834 = vmatmul.bf16.gmra.mxu0 %v1792
      %v1835 = vpop.f32.mrf.mxu0
      %v1836 = vadd.f32 0.0, %v1835
      %v1837 = vpop.f32.mrf.mxu0
      %v1838 = vadd.f32 0.0, %v1837
      %1839 = vmatmul.bf16.gmra.mxu0 %v1795
      %v1840 = vpop.f32.mrf.mxu0
      %v1841 = vadd.f32 0.0, %v1840
      %v1842 = vpop.f32.mrf.mxu0
      %v1843 = vadd.f32 0.0, %v1842
      %1844 = vmatmul.bf16.gmra.mxu0 %v1798
      %v1845 = vpop.f32.mrf.mxu0
      %v1846 = vadd.f32 0.0, %v1845
      %v1847 = vpop.f32.mrf.mxu0
      %v1848 = vadd.f32 0.0, %v1847
      %1849 = vmatmul.bf16.gmra.mxu0 %v1801
      %v1850 = vpop.f32.mrf.mxu0
      %v1851 = vadd.f32 0.0, %v1850
      %v1852 = vpop.f32.mrf.mxu0
      %v1853 = vadd.f32 0.0, %v1852
      %1854 = vmatmul.bf16.gmra.mxu0 %v1804
      %v1855 = vpop.f32.mrf.mxu0
      %v1856 = vadd.f32 0.0, %v1855
      %v1857 = vpop.f32.mrf.mxu0
      %v1858 = vadd.f32 0.0, %v1857
      %1859 = vmatmul.bf16.gmra.mxu0 %v1807
      %v1860 = vpop.f32.mrf.mxu0
      %v1861 = vadd.f32 0.0, %v1860
      %v1862 = vpop.f32.mrf.mxu0
      %v1863 = vadd.f32 0.0, %v1862
      %1864 = vmatmul.bf16.gmra.mxu0 %v1810
      %v1865 = vpop.f32.mrf.mxu0
      %v1866 = vadd.f32 0.0, %v1865
      %v1867 = vpop.f32.mrf.mxu0
      %v1868 = vadd.f32 0.0, %v1867
      %1869 = vmatmul.bf16.gmra.mxu0 %v1813
      %v1870 = vpop.f32.mrf.mxu0
      %v1871 = vadd.f32 0.0, %v1870
      %v1872 = vpop.f32.mrf.mxu0
      %v1873 = vadd.f32 0.0, %v1872
      %1874 = vmatmul.bf16.gmra.mxu0 %v1816
      %v1875 = vpop.f32.mrf.mxu0
      %v1876 = vadd.f32 0.0, %v1875
      %v1877 = vpop.f32.mrf.mxu0
      %v1878 = vadd.f32 0.0, %v1877
      %1879 = vdwg.mxu0
      %v1880 = vadd.f32 %v1626, %v1831
      %v1881 = vadd.f32 %v1627, %v1833
      %v1882 = vadd.f32 %v1628, %v1836
      %v1883 = vadd.f32 %v1629, %v1838
      %v1884 = vadd.f32 %v1630, %v1841
      %v1885 = vadd.f32 %v1631, %v1843
      %v1886 = vadd.f32 %v1632, %v1846
      %v1887 = vadd.f32 %v1633, %v1848
      %v1888 = vadd.f32 %v1634, %v1851
      %v1889 = vadd.f32 %v1635, %v1853
      %v1890 = vadd.f32 %v1636, %v1856
      %v1891 = vadd.f32 %v1637, %v1858
      %v1892 = vadd.f32 %v1638, %v1861
      %v1893 = vadd.f32 %v1639, %v1863
      %v1894 = vadd.f32 %v1640, %v1866
      %v1895 = vadd.f32 %v1641, %v1868
      %v1896 = vadd.f32 %v1642, %v1871
      %v1897 = vadd.f32 %v1643, %v1873
      %v1898 = vadd.f32 %v1644, %v1876
      %v1899 = vadd.f32 %v1645, %v1878
      %s1900 = sadd.s32 %s251, 2
      %s1901 = smul.u32 %s1900, 3
      %s1902 = smul.addr %s1901, 4
      %s1903 = scalar_lea.vmem %s238, %s1902
      %v1904 = vld [vmem:[%s1903] sm:$0xf]
      %v1905 = vld [vmem:[%s1903 + $0x4] sm:$0xf]
      %v1906 = vld [vmem:[%s1903 + $0xc] sm:$0xf]
      %v1907 = vld [vmem:[%s1903 + $0x10] sm:$0xf]
      %v1908 = vld [vmem:[%s1903 + $0x18] sm:$0xf]
      %v1909 = vld [vmem:[%s1903 + $0x1c] sm:$0xf]
      %v1910 = vld [vmem:[%s1903 + $0x24] sm:$0xf]
      %v1911 = vld [vmem:[%s1903 + $0x28] sm:$0xf]
      %v1912 = vld [vmem:[%s1903 + $0x30] sm:$0xf]
      %v1913 = vld [vmem:[%s1903 + $0x34] sm:$0xf]
      %v1914 = vld [vmem:[%s1903 + $0x3c] sm:$0xf]
      %v1915 = vld [vmem:[%s1903 + $0x40] sm:$0xf]
      %v1916 = vld [vmem:[%s1903 + $0x48] sm:$0xf]
      %v1917 = vld [vmem:[%s1903 + $0x4c] sm:$0xf]
      %v1918 = vld [vmem:[%s1903 + $0x54] sm:$0xf]
      %v1919 = vld [vmem:[%s1903 + $0x58] sm:$0xf]
      %v1920 = vld [vmem:[%s1903 + $0x60] sm:$0xf]
      %v1921 = vld [vmem:[%s1903 + $0x64] sm:$0xf]
      %v1922 = vld [vmem:[%s1903 + $0x6c] sm:$0xf]
      %v1923 = vld [vmem:[%s1903 + $0x70] sm:$0xf]
      %s1924 = scalar_lea.vmem %s1, 12
      %v1925 = vld [vmem:[%s1924] sm:$0x3]
      %v1946 = vunpack.c.l.b16 %v1904
      %v1947 = vunpack.c.l.b16 %v1905
      %v1948 = vunpack.c.l.b16 %v1906
      %v1949 = vunpack.c.l.b16 %v1907
      %v1950 = vunpack.c.l.b16 %v1908
      %v1951 = vunpack.c.l.b16 %v1909
      %v1952 = vunpack.c.l.b16 %v1910
      %v1953 = vunpack.c.l.b16 %v1911
      %v1954 = vunpack.c.l.b16 %v1912
      %v1955 = vunpack.c.l.b16 %v1913
      %v1956 = vunpack.c.l.b16 %v1914
      %v1957 = vunpack.c.l.b16 %v1915
      %v1958 = vunpack.c.l.b16 %v1916
      %v1959 = vunpack.c.l.b16 %v1917
      %v1960 = vunpack.c.l.b16 %v1918
      %v1961 = vunpack.c.l.b16 %v1919
      %v1962 = vunpack.c.l.b16 %v1920
      %v1963 = vunpack.c.l.b16 %v1921
      %v1964 = vunpack.c.l.b16 %v1922
      %v1965 = vunpack.c.l.b16 %v1923
      %v1966 = vpack.c.b16 %v1947, %v1946
      %v1967 = vpack.c.b16 %v1949, %v1948
      %v1968 = vpack.c.b16 %v1951, %v1950
      %v1969 = vpack.c.b16 %v1953, %v1952
      %v1970 = vpack.c.b16 %v1955, %v1954
      %v1971 = vpack.c.b16 %v1957, %v1956
      %v1972 = vpack.c.b16 %v1959, %v1958
      %v1973 = vpack.c.b16 %v1961, %v1960
      %v1974 = vpack.c.b16 %v1963, %v1962
      %v1975 = vpack.c.b16 %v1965, %v1964
      %v1977 = vsel %vm561, %v1966, 0
      %v1980 = vsel %vm561, %v1967, 0
      %v1983 = vsel %vm561, %v1968, 0
      %v1986 = vsel %vm561, %v1969, 0
      %v1989 = vsel %vm561, %v1970, 0
      %v1992 = vsel %vm561, %v1971, 0
      %v1995 = vsel %vm561, %v1972, 0
      %v1998 = vsel %vm561, %v1973, 0
      %v2001 = vsel %vm561, %v1974, 0
      %v2004 = vsel %vm561, %v1975, 0
      %v2007 = vsel %vm592, %v1925, 0
      %2009 = vmatpush.bf16.msra.mxu0 0
      %2010 = vmatpush.bf16.msra.mxu0 0
      %2011 = vmatpush.bf16.msra.mxu0 0
      %2012 = vmatpush.bf16.msra.mxu0 0
      %2013 = vmatpush.bf16.msra.mxu0 0
      %2014 = vmatpush.bf16.msra.mxu0 0
      %2015 = vmatpush.bf16.msra.mxu0 0
      %2016 = vmatpush.bf16.msra.mxu0 %v2007
      %2017 = vmatmul.bf16.gmra.mxu0 %v1977
      %v2018 = vpop.f32.mrf.mxu0
      %v2019 = vadd.f32 0.0, %v2018
      %v2020 = vpop.f32.mrf.mxu0
      %v2021 = vadd.f32 0.0, %v2020
      %2022 = vmatmul.bf16.gmra.mxu0 %v1980
      %v2023 = vpop.f32.mrf.mxu0
      %v2024 = vadd.f32 0.0, %v2023
      %v2025 = vpop.f32.mrf.mxu0
      %v2026 = vadd.f32 0.0, %v2025
      %2027 = vmatmul.bf16.gmra.mxu0 %v1983
      %v2028 = vpop.f32.mrf.mxu0
      %v2029 = vadd.f32 0.0, %v2028
      %v2030 = vpop.f32.mrf.mxu0
      %v2031 = vadd.f32 0.0, %v2030
      %2032 = vmatmul.bf16.gmra.mxu0 %v1986
      %v2033 = vpop.f32.mrf.mxu0
      %v2034 = vadd.f32 0.0, %v2033
      %v2035 = vpop.f32.mrf.mxu0
      %v2036 = vadd.f32 0.0, %v2035
      %2037 = vmatmul.bf16.gmra.mxu0 %v1989
      %v2038 = vpop.f32.mrf.mxu0
      %v2039 = vadd.f32 0.0, %v2038
      %v2040 = vpop.f32.mrf.mxu0
      %v2041 = vadd.f32 0.0, %v2040
      %2042 = vmatmul.bf16.gmra.mxu0 %v1992
      %v2043 = vpop.f32.mrf.mxu0
      %v2044 = vadd.f32 0.0, %v2043
      %v2045 = vpop.f32.mrf.mxu0
      %v2046 = vadd.f32 0.0, %v2045
      %2047 = vmatmul.bf16.gmra.mxu0 %v1995
      %v2048 = vpop.f32.mrf.mxu0
      %v2049 = vadd.f32 0.0, %v2048
      %v2050 = vpop.f32.mrf.mxu0
      %v2051 = vadd.f32 0.0, %v2050
      %2052 = vmatmul.bf16.gmra.mxu0 %v1998
      %v2053 = vpop.f32.mrf.mxu0
      %v2054 = vadd.f32 0.0, %v2053
      %v2055 = vpop.f32.mrf.mxu0
      %v2056 = vadd.f32 0.0, %v2055
      %2057 = vmatmul.bf16.gmra.mxu0 %v2001
      %v2058 = vpop.f32.mrf.mxu0
      %v2059 = vadd.f32 0.0, %v2058
      %v2060 = vpop.f32.mrf.mxu0
      %v2061 = vadd.f32 0.0, %v2060
      %2062 = vmatmul.bf16.gmra.mxu0 %v2004
      %v2063 = vpop.f32.mrf.mxu0
      %v2064 = vadd.f32 0.0, %v2063
      %v2065 = vpop.f32.mrf.mxu0
      %v2066 = vadd.f32 0.0, %v2065
      %2067 = vdwg.mxu0
      %v2068 = vadd.f32 %v1880, %v2019
      %v2069 = vadd.f32 %v1881, %v2021
      %v2070 = vadd.f32 %v1882, %v2024
      %v2071 = vadd.f32 %v1883, %v2026
      %v2072 = vadd.f32 %v1884, %v2029
      %v2073 = vadd.f32 %v1885, %v2031
      %v2074 = vadd.f32 %v1886, %v2034
      %v2075 = vadd.f32 %v1887, %v2036
      %v2076 = vadd.f32 %v1888, %v2039
      %v2077 = vadd.f32 %v1889, %v2041
      %v2078 = vadd.f32 %v1890, %v2044
      %v2079 = vadd.f32 %v1891, %v2046
      %v2080 = vadd.f32 %v1892, %v2049
      %v2081 = vadd.f32 %v1893, %v2051
      %v2082 = vadd.f32 %v1894, %v2054
      %v2083 = vadd.f32 %v1895, %v2056
      %v2084 = vadd.f32 %v1896, %v2059
      %v2085 = vadd.f32 %v1897, %v2061
      %v2086 = vadd.f32 %v1898, %v2064
      %v2087 = vadd.f32 %v1899, %v2066
      %v2088 = vld [vmem:[%s1903] sm:$0xf]
      %v2089 = vld [vmem:[%s1903 + $0x4] sm:$0xf]
      %v2090 = vld [vmem:[%s1903 + $0x8] sm:$0x1]
      %v2091 = vld [vmem:[%s1903 + $0xc] sm:$0xf]
      %v2092 = vld [vmem:[%s1903 + $0x10] sm:$0xf]
      %v2093 = vld [vmem:[%s1903 + $0x14] sm:$0x1]
      %v2094 = vld [vmem:[%s1903 + $0x18] sm:$0xf]
      %v2095 = vld [vmem:[%s1903 + $0x1c] sm:$0xf]
      %v2096 = vld [vmem:[%s1903 + $0x20] sm:$0x1]
      %v2097 = vld [vmem:[%s1903 + $0x24] sm:$0xf]
      %v2098 = vld [vmem:[%s1903 + $0x28] sm:$0xf]
      %v2099 = vld [vmem:[%s1903 + $0x2c] sm:$0x1]
      %v2100 = vld [vmem:[%s1903 + $0x30] sm:$0xf]
      %v2101 = vld [vmem:[%s1903 + $0x34] sm:$0xf]
      %v2102 = vld [vmem:[%s1903 + $0x38] sm:$0x1]
      %v2103 = vld [vmem:[%s1903 + $0x3c] sm:$0xf]
      %v2104 = vld [vmem:[%s1903 + $0x40] sm:$0xf]
      %v2105 = vld [vmem:[%s1903 + $0x44] sm:$0x1]
      %v2106 = vld [vmem:[%s1903 + $0x48] sm:$0xf]
      %v2107 = vld [vmem:[%s1903 + $0x4c] sm:$0xf]
      %v2108 = vld [vmem:[%s1903 + $0x50] sm:$0x1]
      %v2109 = vld [vmem:[%s1903 + $0x54] sm:$0xf]
      %v2110 = vld [vmem:[%s1903 + $0x58] sm:$0xf]
      %v2111 = vld [vmem:[%s1903 + $0x5c] sm:$0x1]
      %v2112 = vld [vmem:[%s1903 + $0x60] sm:$0xf]
      %v2113 = vld [vmem:[%s1903 + $0x64] sm:$0xf]
      %v2114 = vld [vmem:[%s1903 + $0x68] sm:$0x1]
      %v2115 = vld [vmem:[%s1903 + $0x6c] sm:$0xf]
      %v2116 = vld [vmem:[%s1903 + $0x70] sm:$0xf]
      %v2117 = vld [vmem:[%s1903 + $0x74] sm:$0x1]
      %v2119 = vshrl.u32 %v2088, 16
      %v2121 = vrot.slane %v2119, 4
      %v2122 = vshll.u32 %v2088, 16
      %v2124 = vrot.slane %v2122, 5
      %v2125 = vor.u32 %v2121, %v2124
      %v2126 = vrot.slane %v2125, 4
      %v2128 = vshll.u32 %v2089, 16
      %v2130 = vrot.slane %v2128, 5
      %v2131 = vsel %vm288, %v2126, %v2130
      %v2132 = vshrl.u32 %v2089, 16
      %v2134 = vrot.slane %v2132, 4
      %v2135 = vor.u32 %v2134, %v2130
      %v2136 = vrot.slane %v2135, 4
      %v2138 = vshll.u32 %v2090, 16
      %v2140 = vrot.slane %v2138, 5
      %v2141 = vsel %vm288, %v2136, %v2140
      %v2143 = vshrl.u32 %v2091, 16
      %v2145 = vrot.slane %v2143, 4
      %v2146 = vshll.u32 %v2091, 16
      %v2148 = vrot.slane %v2146, 5
      %v2149 = vor.u32 %v2145, %v2148
      %v2150 = vrot.slane %v2149, 4
      %v2152 = vshll.u32 %v2092, 16
      %v2154 = vrot.slane %v2152, 5
      %v2155 = vsel %vm288, %v2150, %v2154
      %v2156 = vshrl.u32 %v2092, 16
      %v2158 = vrot.slane %v2156, 4
      %v2159 = vor.u32 %v2158, %v2154
      %v2160 = vrot.slane %v2159, 4
      %v2162 = vshll.u32 %v2093, 16
      %v2164 = vrot.slane %v2162, 5
      %v2165 = vsel %vm288, %v2160, %v2164
      %v2167 = vshrl.u32 %v2094, 16
      %v2169 = vrot.slane %v2167, 4
      %v2170 = vshll.u32 %v2094, 16
      %v2172 = vrot.slane %v2170, 5
      %v2173 = vor.u32 %v2169, %v2172
      %v2174 = vrot.slane %v2173, 4
      %v2176 = vshll.u32 %v2095, 16
      %v2178 = vrot.slane %v2176, 5
      %v2179 = vsel %vm288, %v2174, %v2178
      %v2180 = vshrl.u32 %v2095, 16
      %v2182 = vrot.slane %v2180, 4
      %v2183 = vor.u32 %v2182, %v2178
      %v2184 = vrot.slane %v2183, 4
      %v2186 = vshll.u32 %v2096, 16
      %v2188 = vrot.slane %v2186, 5
      %v2189 = vsel %vm288, %v2184, %v2188
      %v2191 = vshrl.u32 %v2097, 16
      %v2193 = vrot.slane %v2191, 4
      %v2194 = vshll.u32 %v2097, 16
      %v2196 = vrot.slane %v2194, 5
      %v2197 = vor.u32 %v2193, %v2196
      %v2198 = vrot.slane %v2197, 4
      %v2200 = vshll.u32 %v2098, 16
      %v2202 = vrot.slane %v2200, 5
      %v2203 = vsel %vm288, %v2198, %v2202
      %v2204 = vshrl.u32 %v2098, 16
      %v2206 = vrot.slane %v2204, 4
      %v2207 = vor.u32 %v2206, %v2202
      %v2208 = vrot.slane %v2207, 4
      %v2210 = vshll.u32 %v2099, 16
      %v2212 = vrot.slane %v2210, 5
      %v2213 = vsel %vm288, %v2208, %v2212
      %v2215 = vshrl.u32 %v2100, 16
      %v2217 = vrot.slane %v2215, 4
      %v2218 = vshll.u32 %v2100, 16
      %v2220 = vrot.slane %v2218, 5
      %v2221 = vor.u32 %v2217, %v2220
      %v2222 = vrot.slane %v2221, 4
      %v2224 = vshll.u32 %v2101, 16
      %v2226 = vrot.slane %v2224, 5
      %v2227 = vsel %vm288, %v2222, %v2226
      %v2228 = vshrl.u32 %v2101, 16
      %v2230 = vrot.slane %v2228, 4
      %v2231 = vor.u32 %v2230, %v2226
      %v2232 = vrot.slane %v2231, 4
      %v2234 = vshll.u32 %v2102, 16
      %v2236 = vrot.slane %v2234, 5
      %v2237 = vsel %vm288, %v2232, %v2236
      %v2239 = vshrl.u32 %v2103, 16
      %v2241 = vrot.slane %v2239, 4
      %v2242 = vshll.u32 %v2103, 16
      %v2244 = vrot.slane %v2242, 5
      %v2245 = vor.u32 %v2241, %v2244
      %v2246 = vrot.slane %v2245, 4
      %v2248 = vshll.u32 %v2104, 16
      %v2250 = vrot.slane %v2248, 5
      %v2251 = vsel %vm288, %v2246, %v2250
      %v2252 = vshrl.u32 %v2104, 16
      %v2254 = vrot.slane %v2252, 4
      %v2255 = vor.u32 %v2254, %v2250
      %v2256 = vrot.slane %v2255, 4
      %v2258 = vshll.u32 %v2105, 16
      %v2260 = vrot.slane %v2258, 5
      %v2261 = vsel %vm288, %v2256, %v2260
      %v2263 = vshrl.u32 %v2106, 16
      %v2265 = vrot.slane %v2263, 4
      %v2266 = vshll.u32 %v2106, 16
      %v2268 = vrot.slane %v2266, 5
      %v2269 = vor.u32 %v2265, %v2268
      %v2270 = vrot.slane %v2269, 4
      %v2272 = vshll.u32 %v2107, 16
      %v2274 = vrot.slane %v2272, 5
      %v2275 = vsel %vm288, %v2270, %v2274
      %v2276 = vshrl.u32 %v2107, 16
      %v2278 = vrot.slane %v2276, 4
      %v2279 = vor.u32 %v2278, %v2274
      %v2280 = vrot.slane %v2279, 4
      %v2282 = vshll.u32 %v2108, 16
      %v2284 = vrot.slane %v2282, 5
      %v2285 = vsel %vm288, %v2280, %v2284
      %v2287 = vshrl.u32 %v2109, 16
      %v2289 = vrot.slane %v2287, 4
      %v2290 = vshll.u32 %v2109, 16
      %v2292 = vrot.slane %v2290, 5
      %v2293 = vor.u32 %v2289, %v2292
      %v2294 = vrot.slane %v2293, 4
      %v2296 = vshll.u32 %v2110, 16
      %v2298 = vrot.slane %v2296, 5
      %v2299 = vsel %vm288, %v2294, %v2298
      %v2300 = vshrl.u32 %v2110, 16
      %v2302 = vrot.slane %v2300, 4
      %v2303 = vor.u32 %v2302, %v2298
      %v2304 = vrot.slane %v2303, 4
      %v2306 = vshll.u32 %v2111, 16
      %v2308 = vrot.slane %v2306, 5
      %v2309 = vsel %vm288, %v2304, %v2308
      %v2311 = vshrl.u32 %v2112, 16
      %v2313 = vrot.slane %v2311, 4
      %v2314 = vshll.u32 %v2112, 16
      %v2316 = vrot.slane %v2314, 5
      %v2317 = vor.u32 %v2313, %v2316
      %v2318 = vrot.slane %v2317, 4
      %v2320 = vshll.u32 %v2113, 16
      %v2322 = vrot.slane %v2320, 5
      %v2323 = vsel %vm288, %v2318, %v2322
      %v2324 = vshrl.u32 %v2113, 16
      %v2326 = vrot.slane %v2324, 4
      %v2327 = vor.u32 %v2326, %v2322
      %v2328 = vrot.slane %v2327, 4
      %v2330 = vshll.u32 %v2114, 16
      %v2332 = vrot.slane %v2330, 5
      %v2333 = vsel %vm288, %v2328, %v2332
      %v2335 = vshrl.u32 %v2115, 16
      %v2337 = vrot.slane %v2335, 4
      %v2338 = vshll.u32 %v2115, 16
      %v2340 = vrot.slane %v2338, 5
      %v2341 = vor.u32 %v2337, %v2340
      %v2342 = vrot.slane %v2341, 4
      %v2344 = vshll.u32 %v2116, 16
      %v2346 = vrot.slane %v2344, 5
      %v2347 = vsel %vm288, %v2342, %v2346
      %v2348 = vshrl.u32 %v2116, 16
      %v2350 = vrot.slane %v2348, 4
      %v2351 = vor.u32 %v2350, %v2346
      %v2352 = vrot.slane %v2351, 4
      %v2354 = vshll.u32 %v2117, 16
      %v2356 = vrot.slane %v2354, 5
      %v2357 = vsel %vm288, %v2352, %v2356
      %s2358 = scalar_lea.vmem %s1, 14
      %v2359 = vld [vmem:[%s2358] sm:$0x3]
      %v2360 = vunpack.c.l.b16 %v2131
      %v2361 = vunpack.c.l.b16 %v2141
      %v2362 = vunpack.c.l.b16 %v2155
      %v2363 = vunpack.c.l.b16 %v2165
      %v2364 = vunpack.c.l.b16 %v2179
      %v2365 = vunpack.c.l.b16 %v2189
      %v2366 = vunpack.c.l.b16 %v2203
      %v2367 = vunpack.c.l.b16 %v2213
      %v2368 = vunpack.c.l.b16 %v2227
      %v2369 = vunpack.c.l.b16 %v2237
      %v2370 = vunpack.c.l.b16 %v2251
      %v2371 = vunpack.c.l.b16 %v2261
      %v2372 = vunpack.c.l.b16 %v2275
      %v2373 = vunpack.c.l.b16 %v2285
      %v2374 = vunpack.c.l.b16 %v2299
      %v2375 = vunpack.c.l.b16 %v2309
      %v2376 = vunpack.c.l.b16 %v2323
      %v2377 = vunpack.c.l.b16 %v2333
      %v2378 = vunpack.c.l.b16 %v2347
      %v2379 = vunpack.c.l.b16 %v2357
      %v2380 = vpack.c.b16 %v2361, %v2360
      %v2381 = vpack.c.b16 %v2363, %v2362
      %v2382 = vpack.c.b16 %v2365, %v2364
      %v2383 = vpack.c.b16 %v2367, %v2366
      %v2384 = vpack.c.b16 %v2369, %v2368
      %v2385 = vpack.c.b16 %v2371, %v2370
      %v2386 = vpack.c.b16 %v2373, %v2372
      %v2387 = vpack.c.b16 %v2375, %v2374
      %v2388 = vpack.c.b16 %v2377, %v2376
      %v2389 = vpack.c.b16 %v2379, %v2378
      %v2391 = vsel %vm561, %v2380, 0
      %v2394 = vsel %vm561, %v2381, 0
      %v2397 = vsel %vm561, %v2382, 0
      %v2400 = vsel %vm561, %v2383, 0
      %v2403 = vsel %vm561, %v2384, 0
      %v2406 = vsel %vm561, %v2385, 0
      %v2409 = vsel %vm561, %v2386, 0
      %v2412 = vsel %vm561, %v2387, 0
      %v2415 = vsel %vm561, %v2388, 0
      %v2418 = vsel %vm561, %v2389, 0
      %v2421 = vsel %vm592, %v2359, 0
      %2423 = vmatpush.bf16.msra.mxu0 0
      %2424 = vmatpush.bf16.msra.mxu0 0
      %2425 = vmatpush.bf16.msra.mxu0 0
      %2426 = vmatpush.bf16.msra.mxu0 0
      %2427 = vmatpush.bf16.msra.mxu0 0
      %2428 = vmatpush.bf16.msra.mxu0 0
      %2429 = vmatpush.bf16.msra.mxu0 0
      %2430 = vmatpush.bf16.msra.mxu0 %v2421
      %2431 = vmatmul.bf16.gmra.mxu0 %v2391
      %v2432 = vpop.f32.mrf.mxu0
      %v2433 = vadd.f32 0.0, %v2432
      %v2434 = vpop.f32.mrf.mxu0
      %v2435 = vadd.f32 0.0, %v2434
      %2436 = vmatmul.bf16.gmra.mxu0 %v2394
      %v2437 = vpop.f32.mrf.mxu0
      %v2438 = vadd.f32 0.0, %v2437
      %v2439 = vpop.f32.mrf.mxu0
      %v2440 = vadd.f32 0.0, %v2439
      %2441 = vmatmul.bf16.gmra.mxu0 %v2397
      %v2442 = vpop.f32.mrf.mxu0
      %v2443 = vadd.f32 0.0, %v2442
      %v2444 = vpop.f32.mrf.mxu0
      %v2445 = vadd.f32 0.0, %v2444
      %2446 = vmatmul.bf16.gmra.mxu0 %v2400
      %v2447 = vpop.f32.mrf.mxu0
      %v2448 = vadd.f32 0.0, %v2447
      %v2449 = vpop.f32.mrf.mxu0
      %v2450 = vadd.f32 0.0, %v2449
      %2451 = vmatmul.bf16.gmra.mxu0 %v2403
      %v2452 = vpop.f32.mrf.mxu0
      %v2453 = vadd.f32 0.0, %v2452
      %v2454 = vpop.f32.mrf.mxu0
      %v2455 = vadd.f32 0.0, %v2454
      %2456 = vmatmul.bf16.gmra.mxu0 %v2406
      %v2457 = vpop.f32.mrf.mxu0
      %v2458 = vadd.f32 0.0, %v2457
      %v2459 = vpop.f32.mrf.mxu0
      %v2460 = vadd.f32 0.0, %v2459
      %2461 = vmatmul.bf16.gmra.mxu0 %v2409
      %v2462 = vpop.f32.mrf.mxu0
      %v2463 = vadd.f32 0.0, %v2462
      %v2464 = vpop.f32.mrf.mxu0
      %v2465 = vadd.f32 0.0, %v2464
      %2466 = vmatmul.bf16.gmra.mxu0 %v2412
      %v2467 = vpop.f32.mrf.mxu0
      %v2468 = vadd.f32 0.0, %v2467
      %v2469 = vpop.f32.mrf.mxu0
      %v2470 = vadd.f32 0.0, %v2469
      %2471 = vmatmul.bf16.gmra.mxu0 %v2415
      %v2472 = vpop.f32.mrf.mxu0
      %v2473 = vadd.f32 0.0, %v2472
      %v2474 = vpop.f32.mrf.mxu0
      %v2475 = vadd.f32 0.0, %v2474
      %2476 = vmatmul.bf16.gmra.mxu0 %v2418
      %v2477 = vpop.f32.mrf.mxu0
      %v2478 = vadd.f32 0.0, %v2477
      %v2479 = vpop.f32.mrf.mxu0
      %v2480 = vadd.f32 0.0, %v2479
      %2481 = vdwg.mxu0
      %v2482 = vadd.f32 %v2068, %v2433
      %v2483 = vadd.f32 %v2069, %v2435
      %v2484 = vadd.f32 %v2070, %v2438
      %v2485 = vadd.f32 %v2071, %v2440
      %v2486 = vadd.f32 %v2072, %v2443
      %v2487 = vadd.f32 %v2073, %v2445
      %v2488 = vadd.f32 %v2074, %v2448
      %v2489 = vadd.f32 %v2075, %v2450
      %v2490 = vadd.f32 %v2076, %v2453
      %v2491 = vadd.f32 %v2077, %v2455
      %v2492 = vadd.f32 %v2078, %v2458
      %v2493 = vadd.f32 %v2079, %v2460
      %v2494 = vadd.f32 %v2080, %v2463
      %v2495 = vadd.f32 %v2081, %v2465
      %v2496 = vadd.f32 %v2082, %v2468
      %v2497 = vadd.f32 %v2083, %v2470
      %v2498 = vadd.f32 %v2084, %v2473
      %v2499 = vadd.f32 %v2085, %v2475
      %v2500 = vadd.f32 %v2086, %v2478
      %v2501 = vadd.f32 %v2087, %v2480
      %v2502 = vld [vmem:[%s1903] sm:$0xe]
      %v2503 = vld [vmem:[%s1903 + $0xc] sm:$0xe]
      %v2504 = vld [vmem:[%s1903 + $0x18] sm:$0xe]
      %v2505 = vld [vmem:[%s1903 + $0x24] sm:$0xe]
      %v2506 = vld [vmem:[%s1903 + $0x30] sm:$0xe]
      %v2507 = vld [vmem:[%s1903 + $0x3c] sm:$0xe]
      %v2508 = vld [vmem:[%s1903 + $0x48] sm:$0xe]
      %v2509 = vld [vmem:[%s1903 + $0x54] sm:$0xe]
      %v2510 = vld [vmem:[%s1903 + $0x60] sm:$0xe]
      %v2511 = vld [vmem:[%s1903 + $0x6c] sm:$0xe]
      %v2542 = vrot.slane %v2502, 5
      %v2543 = vrot.slane %v2542, 4
      %v2544 = vrot.slane %v2089, 5
      %v2545 = vsel %vm829, %v2543, %v2544
      %v2546 = vrot.slane %v2544, 4
      %v2547 = vrot.slane %v2090, 5
      %v2548 = vsel %vm829, %v2546, %v2547
      %v2549 = vrot.slane %v2503, 5
      %v2550 = vrot.slane %v2549, 4
      %v2551 = vrot.slane %v2092, 5
      %v2552 = vsel %vm829, %v2550, %v2551
      %v2553 = vrot.slane %v2551, 4
      %v2554 = vrot.slane %v2093, 5
      %v2555 = vsel %vm829, %v2553, %v2554
      %v2556 = vrot.slane %v2504, 5
      %v2557 = vrot.slane %v2556, 4
      %v2558 = vrot.slane %v2095, 5
      %v2559 = vsel %vm829, %v2557, %v2558
      %v2560 = vrot.slane %v2558, 4
      %v2561 = vrot.slane %v2096, 5
      %v2562 = vsel %vm829, %v2560, %v2561
      %v2563 = vrot.slane %v2505, 5
      %v2564 = vrot.slane %v2563, 4
      %v2565 = vrot.slane %v2098, 5
      %v2566 = vsel %vm829, %v2564, %v2565
      %v2567 = vrot.slane %v2565, 4
      %v2568 = vrot.slane %v2099, 5
      %v2569 = vsel %vm829, %v2567, %v2568
      %v2570 = vrot.slane %v2506, 5
      %v2571 = vrot.slane %v2570, 4
      %v2572 = vrot.slane %v2101, 5
      %v2573 = vsel %vm829, %v2571, %v2572
      %v2574 = vrot.slane %v2572, 4
      %v2575 = vrot.slane %v2102, 5
      %v2576 = vsel %vm829, %v2574, %v2575
      %v2577 = vrot.slane %v2507, 5
      %v2578 = vrot.slane %v2577, 4
      %v2579 = vrot.slane %v2104, 5
      %v2580 = vsel %vm829, %v2578, %v2579
      %v2581 = vrot.slane %v2579, 4
      %v2582 = vrot.slane %v2105, 5
      %v2583 = vsel %vm829, %v2581, %v2582
      %v2584 = vrot.slane %v2508, 5
      %v2585 = vrot.slane %v2584, 4
      %v2586 = vrot.slane %v2107, 5
      %v2587 = vsel %vm829, %v2585, %v2586
      %v2588 = vrot.slane %v2586, 4
      %v2589 = vrot.slane %v2108, 5
      %v2590 = vsel %vm829, %v2588, %v2589
      %v2591 = vrot.slane %v2509, 5
      %v2592 = vrot.slane %v2591, 4
      %v2593 = vrot.slane %v2110, 5
      %v2594 = vsel %vm829, %v2592, %v2593
      %v2595 = vrot.slane %v2593, 4
      %v2596 = vrot.slane %v2111, 5
      %v2597 = vsel %vm829, %v2595, %v2596
      %v2598 = vrot.slane %v2510, 5
      %v2599 = vrot.slane %v2598, 4
      %v2600 = vrot.slane %v2113, 5
      %v2601 = vsel %vm829, %v2599, %v2600
      %v2602 = vrot.slane %v2600, 4
      %v2603 = vrot.slane %v2114, 5
      %v2604 = vsel %vm829, %v2602, %v2603
      %v2605 = vrot.slane %v2511, 5
      %v2606 = vrot.slane %v2605, 4
      %v2607 = vrot.slane %v2116, 5
      %v2608 = vsel %vm829, %v2606, %v2607
      %v2609 = vrot.slane %v2607, 4
      %v2610 = vrot.slane %v2117, 5
      %v2611 = vsel %vm829, %v2609, %v2610
      %s2612 = scalar_lea.vmem %s1, 16
      %v2613 = vld [vmem:[%s2612] sm:$0x3]
      %v2614 = vunpack.c.l.b16 %v2545
      %v2615 = vunpack.c.l.b16 %v2548
      %v2616 = vunpack.c.l.b16 %v2552
      %v2617 = vunpack.c.l.b16 %v2555
      %v2618 = vunpack.c.l.b16 %v2559
      %v2619 = vunpack.c.l.b16 %v2562
      %v2620 = vunpack.c.l.b16 %v2566
      %v2621 = vunpack.c.l.b16 %v2569
      %v2622 = vunpack.c.l.b16 %v2573
      %v2623 = vunpack.c.l.b16 %v2576
      %v2624 = vunpack.c.l.b16 %v2580
      %v2625 = vunpack.c.l.b16 %v2583
      %v2626 = vunpack.c.l.b16 %v2587
      %v2627 = vunpack.c.l.b16 %v2590
      %v2628 = vunpack.c.l.b16 %v2594
      %v2629 = vunpack.c.l.b16 %v2597
      %v2630 = vunpack.c.l.b16 %v2601
      %v2631 = vunpack.c.l.b16 %v2604
      %v2632 = vunpack.c.l.b16 %v2608
      %v2633 = vunpack.c.l.b16 %v2611
      %v2634 = vpack.c.b16 %v2615, %v2614
      %v2635 = vpack.c.b16 %v2617, %v2616
      %v2636 = vpack.c.b16 %v2619, %v2618
      %v2637 = vpack.c.b16 %v2621, %v2620
      %v2638 = vpack.c.b16 %v2623, %v2622
      %v2639 = vpack.c.b16 %v2625, %v2624
      %v2640 = vpack.c.b16 %v2627, %v2626
      %v2641 = vpack.c.b16 %v2629, %v2628
      %v2642 = vpack.c.b16 %v2631, %v2630
      %v2643 = vpack.c.b16 %v2633, %v2632
      %v2645 = vsel %vm561, %v2634, 0
      %v2648 = vsel %vm561, %v2635, 0
      %v2651 = vsel %vm561, %v2636, 0
      %v2654 = vsel %vm561, %v2637, 0
      %v2657 = vsel %vm561, %v2638, 0
      %v2660 = vsel %vm561, %v2639, 0
      %v2663 = vsel %vm561, %v2640, 0
      %v2666 = vsel %vm561, %v2641, 0
      %v2669 = vsel %vm561, %v2642, 0
      %v2672 = vsel %vm561, %v2643, 0
      %v2675 = vsel %vm592, %v2613, 0
      %2677 = vmatpush.bf16.msra.mxu0 0
      %2678 = vmatpush.bf16.msra.mxu0 0
      %2679 = vmatpush.bf16.msra.mxu0 0
      %2680 = vmatpush.bf16.msra.mxu0 0
      %2681 = vmatpush.bf16.msra.mxu0 0
      %2682 = vmatpush.bf16.msra.mxu0 0
      %2683 = vmatpush.bf16.msra.mxu0 0
      %2684 = vmatpush.bf16.msra.mxu0 %v2675
      %2685 = vmatmul.bf16.gmra.mxu0 %v2645
      %v2686 = vpop.f32.mrf.mxu0
      %v2687 = vadd.f32 0.0, %v2686
      %v2688 = vpop.f32.mrf.mxu0
      %v2689 = vadd.f32 0.0, %v2688
      %2690 = vmatmul.bf16.gmra.mxu0 %v2648
      %v2691 = vpop.f32.mrf.mxu0
      %v2692 = vadd.f32 0.0, %v2691
      %v2693 = vpop.f32.mrf.mxu0
      %v2694 = vadd.f32 0.0, %v2693
      %2695 = vmatmul.bf16.gmra.mxu0 %v2651
      %v2696 = vpop.f32.mrf.mxu0
      %v2697 = vadd.f32 0.0, %v2696
      %v2698 = vpop.f32.mrf.mxu0
      %v2699 = vadd.f32 0.0, %v2698
      %2700 = vmatmul.bf16.gmra.mxu0 %v2654
      %v2701 = vpop.f32.mrf.mxu0
      %v2702 = vadd.f32 0.0, %v2701
      %v2703 = vpop.f32.mrf.mxu0
      %v2704 = vadd.f32 0.0, %v2703
      %2705 = vmatmul.bf16.gmra.mxu0 %v2657
      %v2706 = vpop.f32.mrf.mxu0
      %v2707 = vadd.f32 0.0, %v2706
      %v2708 = vpop.f32.mrf.mxu0
      %v2709 = vadd.f32 0.0, %v2708
      %2710 = vmatmul.bf16.gmra.mxu0 %v2660
      %v2711 = vpop.f32.mrf.mxu0
      %v2712 = vadd.f32 0.0, %v2711
      %v2713 = vpop.f32.mrf.mxu0
      %v2714 = vadd.f32 0.0, %v2713
      %2715 = vmatmul.bf16.gmra.mxu0 %v2663
      %v2716 = vpop.f32.mrf.mxu0
      %v2717 = vadd.f32 0.0, %v2716
      %v2718 = vpop.f32.mrf.mxu0
      %v2719 = vadd.f32 0.0, %v2718
      %2720 = vmatmul.bf16.gmra.mxu0 %v2666
      %v2721 = vpop.f32.mrf.mxu0
      %v2722 = vadd.f32 0.0, %v2721
      %v2723 = vpop.f32.mrf.mxu0
      %v2724 = vadd.f32 0.0, %v2723
      %2725 = vmatmul.bf16.gmra.mxu0 %v2669
      %v2726 = vpop.f32.mrf.mxu0
      %v2727 = vadd.f32 0.0, %v2726
      %v2728 = vpop.f32.mrf.mxu0
      %v2729 = vadd.f32 0.0, %v2728
      %2730 = vmatmul.bf16.gmra.mxu0 %v2672
      %v2731 = vpop.f32.mrf.mxu0
      %v2732 = vadd.f32 0.0, %v2731
      %v2733 = vpop.f32.mrf.mxu0
      %v2734 = vadd.f32 0.0, %v2733
      %2735 = vdwg.mxu0
      %v2736 = vadd.f32 %v2482, %v2687
      %v2737 = vadd.f32 %v2483, %v2689
      %v2738 = vadd.f32 %v2484, %v2692
      %v2739 = vadd.f32 %v2485, %v2694
      %v2740 = vadd.f32 %v2486, %v2697
      %v2741 = vadd.f32 %v2487, %v2699
      %v2742 = vadd.f32 %v2488, %v2702
      %v2743 = vadd.f32 %v2489, %v2704
      %v2744 = vadd.f32 %v2490, %v2707
      %v2745 = vadd.f32 %v2491, %v2709
      %v2746 = vadd.f32 %v2492, %v2712
      %v2747 = vadd.f32 %v2493, %v2714
      %v2748 = vadd.f32 %v2494, %v2717
      %v2749 = vadd.f32 %v2495, %v2719
      %v2750 = vadd.f32 %v2496, %v2722
      %v2751 = vadd.f32 %v2497, %v2724
      %v2752 = vadd.f32 %v2498, %v2727
      %v2753 = vadd.f32 %v2499, %v2729
      %v2754 = vadd.f32 %v2500, %v2732
      %v2755 = vadd.f32 %v2501, %v2734
      %v2756 = vld [vmem:[%s3] sm:$0x1]
      %v2758 = vperm.slane %v2756, 0
      %v2760 = vadd.f32 %v2736, %v2758
      %v2761 = vadd.f32 %v2737, %v2758
      %v2762 = vadd.f32 %v2738, %v2758
      %v2763 = vadd.f32 %v2739, %v2758
      %v2764 = vadd.f32 %v2740, %v2758
      %v2765 = vadd.f32 %v2741, %v2758
      %v2766 = vadd.f32 %v2742, %v2758
      %v2767 = vadd.f32 %v2743, %v2758
      %v2768 = vadd.f32 %v2744, %v2758
      %v2769 = vadd.f32 %v2745, %v2758
      %v2770 = vadd.f32 %v2746, %v2758
      %v2771 = vadd.f32 %v2747, %v2758
      %v2772 = vadd.f32 %v2748, %v2758
      %v2773 = vadd.f32 %v2749, %v2758
      %v2774 = vadd.f32 %v2750, %v2758
      %v2775 = vadd.f32 %v2751, %v2758
      %v2776 = vadd.f32 %v2752, %v2758
      %v2777 = vadd.f32 %v2753, %v2758
      %v2778 = vadd.f32 %v2754, %v2758
      %v2779 = vadd.f32 %v2755, %v2758
      %v2780 = vmax.f32 %v2760, 0.0
      %v2781 = vmax.f32 %v2761, 0.0
      %v2782 = vmax.f32 %v2762, 0.0
      %v2783 = vmax.f32 %v2763, 0.0
      %v2784 = vmax.f32 %v2764, 0.0
      %v2785 = vmax.f32 %v2765, 0.0
      %v2786 = vmax.f32 %v2766, 0.0
      %v2787 = vmax.f32 %v2767, 0.0
      %v2788 = vmax.f32 %v2768, 0.0
      %v2789 = vmax.f32 %v2769, 0.0
      %v2790 = vmax.f32 %v2770, 0.0
      %v2791 = vmax.f32 %v2771, 0.0
      %v2792 = vmax.f32 %v2772, 0.0
      %v2793 = vmax.f32 %v2773, 0.0
      %v2794 = vmax.f32 %v2774, 0.0
      %v2795 = vmax.f32 %v2775, 0.0
      %v2796 = vmax.f32 %v2776, 0.0
      %v2797 = vmax.f32 %v2777, 0.0
      %v2798 = vmax.f32 %v2778, 0.0
      %v2799 = vmax.f32 %v2779, 0.0
      %v2800 = vpack.c.bf16 %v2780, %v2780
      %v2801 = vpack.c.bf16 %v2781, %v2781
      %v2802 = vpack.c.bf16 %v2782, %v2782
      %v2803 = vpack.c.bf16 %v2783, %v2783
      %v2804 = vpack.c.bf16 %v2784, %v2784
      %v2805 = vpack.c.bf16 %v2785, %v2785
      %v2806 = vpack.c.bf16 %v2786, %v2786
      %v2807 = vpack.c.bf16 %v2787, %v2787
      %v2808 = vpack.c.bf16 %v2788, %v2788
      %v2809 = vpack.c.bf16 %v2789, %v2789
      %v2810 = vpack.c.bf16 %v2790, %v2790
      %v2811 = vpack.c.bf16 %v2791, %v2791
      %v2812 = vpack.c.bf16 %v2792, %v2792
      %v2813 = vpack.c.bf16 %v2793, %v2793
      %v2814 = vpack.c.bf16 %v2794, %v2794
      %v2815 = vpack.c.bf16 %v2795, %v2795
      %v2816 = vpack.c.bf16 %v2796, %v2796
      %v2817 = vpack.c.bf16 %v2797, %v2797
      %v2818 = vpack.c.bf16 %v2798, %v2798
      %v2819 = vpack.c.bf16 %v2799, %v2799
      %vm2820 = vsmask.f32 256
      %vm2821 = vsmask.f32 4368
      %vm2822 = vmor %vm2820, %vm2821
      %v2824 = vshrl.u32 %v2800, 16
      %v2826 = vrot.slane %v2824, 7
      %v2827 = vshll.u32 %v2800, 16
      %v2829 = vor.u32 %v2826, %v2827
      %v2830 = vrot.slane %v2826, 4
      %v2832 = vshrl.u32 %v2801, 16
      %v2834 = vrot.slane %v2832, 7
      %v2835 = vshll.u32 %v2801, 16
      %v2837 = vor.u32 %v2834, %v2835
      %v2838 = vsel %vm2822, %v2830, %v2837
      %v2839 = vrot.slane %v2834, 4
      %v2841 = vshrl.u32 %v2802, 16
      %v2843 = vrot.slane %v2841, 7
      %v2844 = vshll.u32 %v2802, 16
      %v2846 = vor.u32 %v2843, %v2844
      %v2847 = vrot.slane %v2843, 4
      %v2849 = vshrl.u32 %v2803, 16
      %v2851 = vrot.slane %v2849, 7
      %v2852 = vshll.u32 %v2803, 16
      %v2854 = vor.u32 %v2851, %v2852
      %v2855 = vsel %vm2822, %v2847, %v2854
      %v2856 = vrot.slane %v2851, 4
      %v2858 = vshrl.u32 %v2804, 16
      %v2860 = vrot.slane %v2858, 7
      %v2861 = vshll.u32 %v2804, 16
      %v2863 = vor.u32 %v2860, %v2861
      %v2864 = vrot.slane %v2860, 4
      %v2866 = vshrl.u32 %v2805, 16
      %v2868 = vrot.slane %v2866, 7
      %v2869 = vshll.u32 %v2805, 16
      %v2871 = vor.u32 %v2868, %v2869
      %v2872 = vsel %vm2822, %v2864, %v2871
      %v2873 = vrot.slane %v2868, 4
      %v2875 = vshrl.u32 %v2806, 16
      %v2877 = vrot.slane %v2875, 7
      %v2878 = vshll.u32 %v2806, 16
      %v2880 = vor.u32 %v2877, %v2878
      %v2881 = vrot.slane %v2877, 4
      %v2883 = vshrl.u32 %v2807, 16
      %v2885 = vrot.slane %v2883, 7
      %v2886 = vshll.u32 %v2807, 16
      %v2888 = vor.u32 %v2885, %v2886
      %v2889 = vsel %vm2822, %v2881, %v2888
      %v2890 = vrot.slane %v2885, 4
      %v2892 = vshrl.u32 %v2808, 16
      %v2894 = vrot.slane %v2892, 7
      %v2895 = vshll.u32 %v2808, 16
      %v2897 = vor.u32 %v2894, %v2895
      %v2898 = vrot.slane %v2894, 4
      %v2900 = vshrl.u32 %v2809, 16
      %v2902 = vrot.slane %v2900, 7
      %v2903 = vshll.u32 %v2809, 16
      %v2905 = vor.u32 %v2902, %v2903
      %v2906 = vsel %vm2822, %v2898, %v2905
      %v2907 = vrot.slane %v2902, 4
      %v2909 = vshrl.u32 %v2810, 16
      %v2911 = vrot.slane %v2909, 7
      %v2912 = vshll.u32 %v2810, 16
      %v2914 = vor.u32 %v2911, %v2912
      %v2915 = vrot.slane %v2911, 4
      %v2917 = vshrl.u32 %v2811, 16
      %v2919 = vrot.slane %v2917, 7
      %v2920 = vshll.u32 %v2811, 16
      %v2922 = vor.u32 %v2919, %v2920
      %v2923 = vsel %vm2822, %v2915, %v2922
      %v2924 = vrot.slane %v2919, 4
      %v2926 = vshrl.u32 %v2812, 16
      %v2928 = vrot.slane %v2926, 7
      %v2929 = vshll.u32 %v2812, 16
      %v2931 = vor.u32 %v2928, %v2929
      %v2932 = vrot.slane %v2928, 4
      %v2934 = vshrl.u32 %v2813, 16
      %v2936 = vrot.slane %v2934, 7
      %v2937 = vshll.u32 %v2813, 16
      %v2939 = vor.u32 %v2936, %v2937
      %v2940 = vsel %vm2822, %v2932, %v2939
      %v2941 = vrot.slane %v2936, 4
      %v2943 = vshrl.u32 %v2814, 16
      %v2945 = vrot.slane %v2943, 7
      %v2946 = vshll.u32 %v2814, 16
      %v2948 = vor.u32 %v2945, %v2946
      %v2949 = vrot.slane %v2945, 4
      %v2951 = vshrl.u32 %v2815, 16
      %v2953 = vrot.slane %v2951, 7
      %v2954 = vshll.u32 %v2815, 16
      %v2956 = vor.u32 %v2953, %v2954
      %v2957 = vsel %vm2822, %v2949, %v2956
      %v2958 = vrot.slane %v2953, 4
      %v2960 = vshrl.u32 %v2816, 16
      %v2962 = vrot.slane %v2960, 7
      %v2963 = vshll.u32 %v2816, 16
      %v2965 = vor.u32 %v2962, %v2963
      %v2966 = vrot.slane %v2962, 4
      %v2968 = vshrl.u32 %v2817, 16
      %v2970 = vrot.slane %v2968, 7
      %v2971 = vshll.u32 %v2817, 16
      %v2973 = vor.u32 %v2970, %v2971
      %v2974 = vsel %vm2822, %v2966, %v2973
      %v2975 = vrot.slane %v2970, 4
      %v2977 = vshrl.u32 %v2818, 16
      %v2979 = vrot.slane %v2977, 7
      %v2980 = vshll.u32 %v2818, 16
      %v2982 = vor.u32 %v2979, %v2980
      %v2983 = vrot.slane %v2979, 4
      %v2985 = vshrl.u32 %v2819, 16
      %v2987 = vrot.slane %v2985, 7
      %v2988 = vshll.u32 %v2819, 16
      %v2990 = vor.u32 %v2987, %v2988
      %v2991 = vsel %vm2822, %v2983, %v2990
      %v2992 = vrot.slane %v2987, 4
      %vm3023 = vcmask 27648
      %vm3024 = vsmask.f32 7938
      %vm3025 = vmand %vm3023, %vm3024
      %v3026 = vld [vmem:[#allocation2] sm:$0xf]
      %v3027 = vsel %vm3025, %v2829, %v3026
      %3028 = vst [vmem:[#allocation2] sm:$0xf] %v3027
      %vm3029 = vcmask 27648
      %3030 = vst.msk [vmem:[#allocation2 + $0x4] sm:$0xf] %vm3029, %v2838
      %vm3031 = vcmask 24576
      %vm3032 = vmand %vm3031, %vm2820
      %v3033 = vld [vmem:[#allocation2 + $0x8] sm:$0x1]
      %v3034 = vsel %vm3032, %v2839, %v3033
      %3035 = vst [vmem:[#allocation2 + $0x8] sm:$0x1] %v3034
      %v3036 = vld [vmem:[#allocation2 + $0xc] sm:$0xf]
      %v3037 = vsel %vm3025, %v2846, %v3036
      %3038 = vst [vmem:[#allocation2 + $0xc] sm:$0xf] %v3037
      %3039 = vst.msk [vmem:[#allocation2 + $0x10] sm:$0xf] %vm3029, %v2855
      %v3040 = vld [vmem:[#allocation2 + $0x14] sm:$0x1]
      %v3041 = vsel %vm3032, %v2856, %v3040
      %3042 = vst [vmem:[#allocation2 + $0x14] sm:$0x1] %v3041
      %v3043 = vld [vmem:[#allocation2 + $0x18] sm:$0xf]
      %v3044 = vsel %vm3025, %v2863, %v3043
      %3045 = vst [vmem:[#allocation2 + $0x18] sm:$0xf] %v3044
      %3046 = vst.msk [vmem:[#allocation2 + $0x1c] sm:$0xf] %vm3029, %v2872
      %v3047 = vld [vmem:[#allocation2 + $0x20] sm:$0x1]
      %v3048 = vsel %vm3032, %v2873, %v3047
      %3049 = vst [vmem:[#allocation2 + $0x20] sm:$0x1] %v3048
      %v3050 = vld [vmem:[#allocation2 + $0x24] sm:$0xf]
      %v3051 = vsel %vm3025, %v2880, %v3050
      %3052 = vst [vmem:[#allocation2 + $0x24] sm:$0xf] %v3051
      %3053 = vst.msk [vmem:[#allocation2 + $0x28] sm:$0xf] %vm3029, %v2889
      %v3054 = vld [vmem:[#allocation2 + $0x2c] sm:$0x1]
      %v3055 = vsel %vm3032, %v2890, %v3054
      %3056 = vst [vmem:[#allocation2 + $0x2c] sm:$0x1] %v3055
      %v3057 = vld [vmem:[#allocation2 + $0x30] sm:$0xf]
      %v3058 = vsel %vm3025, %v2897, %v3057
      %3059 = vst [vmem:[#allocation2 + $0x30] sm:$0xf] %v3058
      %3060 = vst.msk [vmem:[#allocation2 + $0x34] sm:$0xf] %vm3029, %v2906
      %v3061 = vld [vmem:[#allocation2 + $0x38] sm:$0x1]
      %v3062 = vsel %vm3032, %v2907, %v3061
      %3063 = vst [vmem:[#allocation2 + $0x38] sm:$0x1] %v3062
      %v3064 = vld [vmem:[#allocation2 + $0x3c] sm:$0xf]
      %v3065 = vsel %vm3025, %v2914, %v3064
      %3066 = vst [vmem:[#allocation2 + $0x3c] sm:$0xf] %v3065
      %3067 = vst.msk [vmem:[#allocation2 + $0x40] sm:$0xf] %vm3029, %v2923
      %v3068 = vld [vmem:[#allocation2 + $0x44] sm:$0x1]
      %v3069 = vsel %vm3032, %v2924, %v3068
      %3070 = vst [vmem:[#allocation2 + $0x44] sm:$0x1] %v3069
      %v3071 = vld [vmem:[#allocation2 + $0x48] sm:$0xf]
      %v3072 = vsel %vm3025, %v2931, %v3071
      %3073 = vst [vmem:[#allocation2 + $0x48] sm:$0xf] %v3072
      %3074 = vst.msk [vmem:[#allocation2 + $0x4c] sm:$0xf] %vm3029, %v2940
      %v3075 = vld [vmem:[#allocation2 + $0x50] sm:$0x1]
      %v3076 = vsel %vm3032, %v2941, %v3075
      %3077 = vst [vmem:[#allocation2 + $0x50] sm:$0x1] %v3076
      %v3078 = vld [vmem:[#allocation2 + $0x54] sm:$0xf]
      %v3079 = vsel %vm3025, %v2948, %v3078
      %3080 = vst [vmem:[#allocation2 + $0x54] sm:$0xf] %v3079
      %3081 = vst.msk [vmem:[#allocation2 + $0x58] sm:$0xf] %vm3029, %v2957
      %v3082 = vld [vmem:[#allocation2 + $0x5c] sm:$0x1]
      %v3083 = vsel %vm3032, %v2958, %v3082
      %3084 = vst [vmem:[#allocation2 + $0x5c] sm:$0x1] %v3083
      %v3085 = vld [vmem:[#allocation2 + $0x60] sm:$0xf]
      %v3086 = vsel %vm3025, %v2965, %v3085
      %3087 = vst [vmem:[#allocation2 + $0x60] sm:$0xf] %v3086
      %3088 = vst.msk [vmem:[#allocation2 + $0x64] sm:$0xf] %vm3029, %v2974
      %v3089 = vld [vmem:[#allocation2 + $0x68] sm:$0x1]
      %v3090 = vsel %vm3032, %v2975, %v3089
      %3091 = vst [vmem:[#allocation2 + $0x68] sm:$0x1] %v3090
      %v3092 = vld [vmem:[#allocation2 + $0x6c] sm:$0xf]
      %v3093 = vsel %vm3025, %v2982, %v3092
      %3094 = vst [vmem:[#allocation2 + $0x6c] sm:$0xf] %v3093
      %3095 = vst.msk [vmem:[#allocation2 + $0x70] sm:$0xf] %vm3029, %v2991
      %v3096 = vld [vmem:[#allocation2 + $0x74] sm:$0x1]
      %v3097 = vsel %vm3032, %v2992, %v3096
      %3098 = vst [vmem:[#allocation2 + $0x74] sm:$0x1] %v3097
      %v3099 = vld [vmem:[#allocation2] sm:$0x1]
      %v3100 = vsel %vm3032, 0, %v3099
      %3101 = vst [vmem:[#allocation2] sm:$0x1] %v3100
      %v3102 = vld [vmem:[#allocation2 + $0xc] sm:$0x1]
      %v3103 = vsel %vm3032, 0, %v3102
      %3104 = vst [vmem:[#allocation2 + $0xc] sm:$0x1] %v3103
      %v3105 = vld [vmem:[#allocation2 + $0x18] sm:$0x1]
      %v3106 = vsel %vm3032, 0, %v3105
      %3107 = vst [vmem:[#allocation2 + $0x18] sm:$0x1] %v3106
      %v3108 = vld [vmem:[#allocation2 + $0x24] sm:$0x1]
      %v3109 = vsel %vm3032, 0, %v3108
      %3110 = vst [vmem:[#allocation2 + $0x24] sm:$0x1] %v3109
      %v3111 = vld [vmem:[#allocation2 + $0x30] sm:$0x1]
      %v3112 = vsel %vm3032, 0, %v3111
      %3113 = vst [vmem:[#allocation2 + $0x30] sm:$0x1] %v3112
      %v3114 = vld [vmem:[#allocation2 + $0x3c] sm:$0x1]
      %v3115 = vsel %vm3032, 0, %v3114
      %3116 = vst [vmem:[#allocation2 + $0x3c] sm:$0x1] %v3115
      %v3117 = vld [vmem:[#allocation2 + $0x48] sm:$0x1]
      %v3118 = vsel %vm3032, 0, %v3117
      %3119 = vst [vmem:[#allocation2 + $0x48] sm:$0x1] %v3118
      %v3120 = vld [vmem:[#allocation2 + $0x54] sm:$0x1]
      %v3121 = vsel %vm3032, 0, %v3120
      %3122 = vst [vmem:[#allocation2 + $0x54] sm:$0x1] %v3121
      %v3123 = vld [vmem:[#allocation2 + $0x60] sm:$0x1]
      %v3124 = vsel %vm3032, 0, %v3123
      %3125 = vst [vmem:[#allocation2 + $0x60] sm:$0x1] %v3124
      %v3126 = vld [vmem:[#allocation2 + $0x6c] sm:$0x1]
      %v3127 = vsel %vm3032, 0, %v3126
      %3128 = vst [vmem:[#allocation2 + $0x6c] sm:$0x1] %v3127
      %vm3129 = vmand %vm3031, %vm3024
      %v3130 = vld [vmem:[#allocation2 + $0x8] sm:$0x1]
      %v3131 = vsel %vm3129, 0, %v3130
      %3132 = vst [vmem:[#allocation2 + $0x8] sm:$0x1] %v3131
      %v3133 = vld [vmem:[#allocation2 + $0x14] sm:$0x1]
      %v3134 = vsel %vm3129, 0, %v3133
      %3135 = vst [vmem:[#allocation2 + $0x14] sm:$0x1] %v3134
      %v3136 = vld [vmem:[#allocation2 + $0x20] sm:$0x1]
      %v3137 = vsel %vm3129, 0, %v3136
      %3138 = vst [vmem:[#allocation2 + $0x20] sm:$0x1] %v3137
      %v3139 = vld [vmem:[#allocation2 + $0x2c] sm:$0x1]
      %v3140 = vsel %vm3129, 0, %v3139
      %3141 = vst [vmem:[#allocation2 + $0x2c] sm:$0x1] %v3140
      %v3142 = vld [vmem:[#allocation2 + $0x38] sm:$0x1]
      %v3143 = vsel %vm3129, 0, %v3142
      %3144 = vst [vmem:[#allocation2 + $0x38] sm:$0x1] %v3143
      %v3145 = vld [vmem:[#allocation2 + $0x44] sm:$0x1]
      %v3146 = vsel %vm3129, 0, %v3145
      %3147 = vst [vmem:[#allocation2 + $0x44] sm:$0x1] %v3146
      %v3148 = vld [vmem:[#allocation2 + $0x50] sm:$0x1]
      %v3149 = vsel %vm3129, 0, %v3148
      %3150 = vst [vmem:[#allocation2 + $0x50] sm:$0x1] %v3149
      %v3151 = vld [vmem:[#allocation2 + $0x5c] sm:$0x1]
      %v3152 = vsel %vm3129, 0, %v3151
      %3153 = vst [vmem:[#allocation2 + $0x5c] sm:$0x1] %v3152
      %v3154 = vld [vmem:[#allocation2 + $0x68] sm:$0x1]
      %v3155 = vsel %vm3129, 0, %v3154
      %3156 = vst [vmem:[#allocation2 + $0x68] sm:$0x1] %v3155
      %v3157 = vld [vmem:[#allocation2 + $0x74] sm:$0x1]
      %v3158 = vsel %vm3129, 0, %v3157
      %3159 = vst [vmem:[#allocation2 + $0x74] sm:$0x1] %v3158
      %p3160 = scmp.eq.s32.totalorder %s21, 0
      // Predicated region
      $region41: #{tpu_custom_call.1} parent=39 // pred_check
        %p3161 = pneg %p3160
      $region42: #{tpu_custom_call.1} parent=39 // pred_check_branch
        %3163 = sbr.rel (%p3161) target = $region44
      $region43: #{tpu_custom_call.1} parent=39 // pred_region
        %3164 = vst.msk [vmem:[#allocation2] sm:$0xf] %vm3029, 0
        %3165 = vst.msk [vmem:[#allocation2 + $0x4] sm:$0xf] %vm3029, 0
        %vm3166 = vcmask 24576
        %3167 = vst.msk [vmem:[#allocation2 + $0x8] sm:$0x1] %vm3166, 0
      $region44: #{tpu_custom_call.1} parent=39 // pred_fallthru
        _
      %p3168 = scmp.eq.s32.totalorder %s21, 1
      // Predicated region
      $region45: #{tpu_custom_call.1} parent=39 // pred_check
        %p3169 = pneg %p3168
      $region46: #{tpu_custom_call.1} parent=39 // pred_check_branch
        %3171 = sbr.rel (%p3169) target = $region48
      $region47: #{tpu_custom_call.1} parent=39 // pred_region
        %s3172 = scalar_lea.vmem [#allocation2], 108
        %3173 = vst.msk [vmem:[%s3172] sm:$0xf] %vm3029, 0
        %3174 = vst.msk [vmem:[%s3172 + $0x4] sm:$0xf] %vm3029, 0
        %vm3175 = vcmask 24576
        %3176 = vst.msk [vmem:[%s3172 + $0x8] sm:$0x1] %vm3175, 0
      $region48: #{tpu_custom_call.1} parent=39 // pred_fallthru
        _
      %v3177 = vld [vmem:[%s1903] sm:$0xf]
      %v3178 = vld [vmem:[%s1903 + $0x4] sm:$0xf]
      %v3179 = vld [vmem:[%s1903 + $0x8] sm:$0x1]
      %v3180 = vld [vmem:[%s1903 + $0xc] sm:$0xf]
      %v3181 = vld [vmem:[%s1903 + $0x10] sm:$0xf]
      %v3182 = vld [vmem:[%s1903 + $0x14] sm:$0x1]
      %v3183 = vld [vmem:[%s1903 + $0x18] sm:$0xf]
      %v3184 = vld [vmem:[%s1903 + $0x1c] sm:$0xf]
      %v3185 = vld [vmem:[%s1903 + $0x20] sm:$0x1]
      %v3186 = vld [vmem:[%s1903 + $0x24] sm:$0xf]
      %v3187 = vld [vmem:[%s1903 + $0x28] sm:$0xf]
      %v3188 = vld [vmem:[%s1903 + $0x2c] sm:$0x1]
      %v3189 = vld [vmem:[%s1903 + $0x30] sm:$0xf]
      %v3190 = vld [vmem:[%s1903 + $0x34] sm:$0xf]
      %v3191 = vld [vmem:[%s1903 + $0x38] sm:$0x1]
      %v3192 = vld [vmem:[%s1903 + $0x3c] sm:$0xf]
      %v3193 = vld [vmem:[%s1903 + $0x40] sm:$0xf]
      %v3194 = vld [vmem:[%s1903 + $0x44] sm:$0x1]
      %v3195 = vld [vmem:[%s1903 + $0x48] sm:$0xf]
      %v3196 = vld [vmem:[%s1903 + $0x4c] sm:$0xf]
      %v3197 = vld [vmem:[%s1903 + $0x50] sm:$0x1]
      %v3198 = vld [vmem:[%s1903 + $0x54] sm:$0xf]
      %v3199 = vld [vmem:[%s1903 + $0x58] sm:$0xf]
      %v3200 = vld [vmem:[%s1903 + $0x5c] sm:$0x1]
      %v3201 = vunpack.c.l.bf16 %v3177
      %v3202 = vunpack.c.l.bf16 %v3178
      %v3203 = vunpack.c.l.bf16 %v3179
      %v3204 = vunpack.c.l.bf16 %v3180
      %v3205 = vunpack.c.l.bf16 %v3181
      %v3206 = vunpack.c.l.bf16 %v3182
      %v3207 = vunpack.c.l.bf16 %v3183
      %v3208 = vunpack.c.l.bf16 %v3184
      %v3209 = vunpack.c.l.bf16 %v3185
      %v3210 = vunpack.c.l.bf16 %v3186
      %v3211 = vunpack.c.l.bf16 %v3187
      %v3212 = vunpack.c.l.bf16 %v3188
      %v3213 = vunpack.c.l.bf16 %v3189
      %v3214 = vunpack.c.l.bf16 %v3190
      %v3215 = vunpack.c.l.bf16 %v3191
      %v3216 = vunpack.c.l.bf16 %v3192
      %v3217 = vunpack.c.l.bf16 %v3193
      %v3218 = vunpack.c.l.bf16 %v3194
      %v3219 = vunpack.c.l.bf16 %v3195
      %v3220 = vunpack.c.l.bf16 %v3196
      %v3221 = vunpack.c.l.bf16 %v3197
      %v3222 = vunpack.c.l.bf16 %v3198
      %v3223 = vunpack.c.l.bf16 %v3199
      %v3224 = vunpack.c.l.bf16 %v3200
      %v3225 = vld [vmem:[#allocation2] sm:$0xf]
      %v3226 = vld [vmem:[#allocation2 + $0x4] sm:$0xf]
      %v3227 = vld [vmem:[#allocation2 + $0xc] sm:$0xf]
      %v3228 = vld [vmem:[#allocation2 + $0x10] sm:$0xf]
      %v3229 = vld [vmem:[#allocation2 + $0x18] sm:$0xf]
      %v3230 = vld [vmem:[#allocation2 + $0x1c] sm:$0xf]
      %v3231 = vld [vmem:[#allocation2 + $0x24] sm:$0xf]
      %v3232 = vld [vmem:[#allocation2 + $0x28] sm:$0xf]
      %v3233 = vld [vmem:[#allocation2 + $0x30] sm:$0xf]
      %v3234 = vld [vmem:[#allocation2 + $0x34] sm:$0xf]
      %v3235 = vld [vmem:[#allocation2 + $0x3c] sm:$0xf]
      %v3236 = vld [vmem:[#allocation2 + $0x40] sm:$0xf]
      %v3237 = vld [vmem:[#allocation2 + $0x48] sm:$0xf]
      %v3238 = vld [vmem:[#allocation2 + $0x4c] sm:$0xf]
      %v3239 = vld [vmem:[#allocation2 + $0x54] sm:$0xf]
      %v3240 = vld [vmem:[#allocation2 + $0x58] sm:$0xf]
      %v3241 = vld [vmem:[%s2] sm:$0x3]
      %v3242 = vld [vmem:[#allocation2 + $0x8] sm:$0x1]
      %v3243 = vld [vmem:[#allocation2 + $0x14] sm:$0x1]
      %v3244 = vld [vmem:[#allocation2 + $0x20] sm:$0x1]
      %v3245 = vld [vmem:[#allocation2 + $0x2c] sm:$0x1]
      %v3246 = vld [vmem:[#allocation2 + $0x38] sm:$0x1]
      %v3247 = vld [vmem:[#allocation2 + $0x44] sm:$0x1]
      %v3248 = vld [vmem:[#allocation2 + $0x50] sm:$0x1]
      %v3249 = vld [vmem:[#allocation2 + $0x5c] sm:$0x1]
      %v3251 = vshrl.u32 %v3225, 16
      %v3253 = vrot.slane %v3251, 4
      %v3254 = vshll.u32 %v3225, 16
      %v3256 = vrot.slane %v3254, 5
      %v3257 = vor.u32 %v3253, %v3256
      %v3258 = vrot.slane %v3257, 4
      %v3260 = vshll.u32 %v3226, 16
      %v3262 = vrot.slane %v3260, 5
      %v3263 = vsel %vm288, %v3258, %v3262
      %v3264 = vshrl.u32 %v3226, 16
      %v3266 = vrot.slane %v3264, 4
      %v3267 = vor.u32 %v3266, %v3262
      %v3268 = vrot.slane %v3267, 4
      %v3270 = vshll.u32 %v3242, 16
      %v3272 = vrot.slane %v3270, 5
      %v3273 = vsel %vm288, %v3268, %v3272
      %v3275 = vshrl.u32 %v3227, 16
      %v3277 = vrot.slane %v3275, 4
      %v3278 = vshll.u32 %v3227, 16
      %v3280 = vrot.slane %v3278, 5
      %v3281 = vor.u32 %v3277, %v3280
      %v3282 = vrot.slane %v3281, 4
      %v3284 = vshll.u32 %v3228, 16
      %v3286 = vrot.slane %v3284, 5
      %v3287 = vsel %vm288, %v3282, %v3286
      %v3288 = vshrl.u32 %v3228, 16
      %v3290 = vrot.slane %v3288, 4
      %v3291 = vor.u32 %v3290, %v3286
      %v3292 = vrot.slane %v3291, 4
      %v3294 = vshll.u32 %v3243, 16
      %v3296 = vrot.slane %v3294, 5
      %v3297 = vsel %vm288, %v3292, %v3296
      %v3299 = vshrl.u32 %v3229, 16
      %v3301 = vrot.slane %v3299, 4
      %v3302 = vshll.u32 %v3229, 16
      %v3304 = vrot.slane %v3302, 5
      %v3305 = vor.u32 %v3301, %v3304
      %v3306 = vrot.slane %v3305, 4
      %v3308 = vshll.u32 %v3230, 16
      %v3310 = vrot.slane %v3308, 5
      %v3311 = vsel %vm288, %v3306, %v3310
      %v3312 = vshrl.u32 %v3230, 16
      %v3314 = vrot.slane %v3312, 4
      %v3315 = vor.u32 %v3314, %v3310
      %v3316 = vrot.slane %v3315, 4
      %v3318 = vshll.u32 %v3244, 16
      %v3320 = vrot.slane %v3318, 5
      %v3321 = vsel %vm288, %v3316, %v3320
      %v3323 = vshrl.u32 %v3231, 16
      %v3325 = vrot.slane %v3323, 4
      %v3326 = vshll.u32 %v3231, 16
      %v3328 = vrot.slane %v3326, 5
      %v3329 = vor.u32 %v3325, %v3328
      %v3330 = vrot.slane %v3329, 4
      %v3332 = vshll.u32 %v3232, 16
      %v3334 = vrot.slane %v3332, 5
      %v3335 = vsel %vm288, %v3330, %v3334
      %v3336 = vshrl.u32 %v3232, 16
      %v3338 = vrot.slane %v3336, 4
      %v3339 = vor.u32 %v3338, %v3334
      %v3340 = vrot.slane %v3339, 4
      %v3342 = vshll.u32 %v3245, 16
      %v3344 = vrot.slane %v3342, 5
      %v3345 = vsel %vm288, %v3340, %v3344
      %v3347 = vshrl.u32 %v3233, 16
      %v3349 = vrot.slane %v3347, 4
      %v3350 = vshll.u32 %v3233, 16
      %v3352 = vrot.slane %v3350, 5
      %v3353 = vor.u32 %v3349, %v3352
      %v3354 = vrot.slane %v3353, 4
      %v3356 = vshll.u32 %v3234, 16
      %v3358 = vrot.slane %v3356, 5
      %v3359 = vsel %vm288, %v3354, %v3358
      %v3360 = vshrl.u32 %v3234, 16
      %v3362 = vrot.slane %v3360, 4
      %v3363 = vor.u32 %v3362, %v3358
      %v3364 = vrot.slane %v3363, 4
      %v3366 = vshll.u32 %v3246, 16
      %v3368 = vrot.slane %v3366, 5
      %v3369 = vsel %vm288, %v3364, %v3368
      %v3371 = vshrl.u32 %v3235, 16
      %v3373 = vrot.slane %v3371, 4
      %v3374 = vshll.u32 %v3235, 16
      %v3376 = vrot.slane %v3374, 5
      %v3377 = vor.u32 %v3373, %v3376
      %v3378 = vrot.slane %v3377, 4
      %v3380 = vshll.u32 %v3236, 16
      %v3382 = vrot.slane %v3380, 5
      %v3383 = vsel %vm288, %v3378, %v3382
      %v3384 = vshrl.u32 %v3236, 16
      %v3386 = vrot.slane %v3384, 4
      %v3387 = vor.u32 %v3386, %v3382
      %v3388 = vrot.slane %v3387, 4
      %v3390 = vshll.u32 %v3247, 16
      %v3392 = vrot.slane %v3390, 5
      %v3393 = vsel %vm288, %v3388, %v3392
      %v3395 = vshrl.u32 %v3237, 16
      %v3397 = vrot.slane %v3395, 4
      %v3398 = vshll.u32 %v3237, 16
      %v3400 = vrot.slane %v3398, 5
      %v3401 = vor.u32 %v3397, %v3400
      %v3402 = vrot.slane %v3401, 4
      %v3404 = vshll.u32 %v3238, 16
      %v3406 = vrot.slane %v3404, 5
      %v3407 = vsel %vm288, %v3402, %v3406
      %v3408 = vshrl.u32 %v3238, 16
      %v3410 = vrot.slane %v3408, 4
      %v3411 = vor.u32 %v3410, %v3406
      %v3412 = vrot.slane %v3411, 4
      %v3414 = vshll.u32 %v3248, 16
      %v3416 = vrot.slane %v3414, 5
      %v3417 = vsel %vm288, %v3412, %v3416
      %v3419 = vshrl.u32 %v3239, 16
      %v3421 = vrot.slane %v3419, 4
      %v3422 = vshll.u32 %v3239, 16
      %v3424 = vrot.slane %v3422, 5
      %v3425 = vor.u32 %v3421, %v3424
      %v3426 = vrot.slane %v3425, 4
      %v3428 = vshll.u32 %v3240, 16
      %v3430 = vrot.slane %v3428, 5
      %v3431 = vsel %vm288, %v3426, %v3430
      %v3432 = vshrl.u32 %v3240, 16
      %v3434 = vrot.slane %v3432, 4
      %v3435 = vor.u32 %v3434, %v3430
      %v3436 = vrot.slane %v3435, 4
      %v3438 = vshll.u32 %v3249, 16
      %v3440 = vrot.slane %v3438, 5
      %v3441 = vsel %vm288, %v3436, %v3440
      %s3442 = scalar_lea.vmem %s2, 2
      %v3443 = vld [vmem:[%s3442] sm:$0x3]
      %v3444 = vunpack.c.l.b16 %v3263
      %v3445 = vunpack.c.l.b16 %v3273
      %v3446 = vunpack.c.l.b16 %v3287
      %v3447 = vunpack.c.l.b16 %v3297
      %v3448 = vunpack.c.l.b16 %v3311
      %v3449 = vunpack.c.l.b16 %v3321
      %v3450 = vunpack.c.l.b16 %v3335
      %v3451 = vunpack.c.l.b16 %v3345
      %v3452 = vunpack.c.l.b16 %v3359
      %v3453 = vunpack.c.l.b16 %v3369
      %v3454 = vunpack.c.l.b16 %v3383
      %v3455 = vunpack.c.l.b16 %v3393
      %v3456 = vunpack.c.l.b16 %v3407
      %v3457 = vunpack.c.l.b16 %v3417
      %v3458 = vunpack.c.l.b16 %v3431
      %v3459 = vunpack.c.l.b16 %v3441
      %v3460 = vpack.c.b16 %v3445, %v3444
      %v3461 = vpack.c.b16 %v3447, %v3446
      %v3462 = vpack.c.b16 %v3449, %v3448
      %v3463 = vpack.c.b16 %v3451, %v3450
      %v3464 = vpack.c.b16 %v3453, %v3452
      %v3465 = vpack.c.b16 %v3455, %v3454
      %v3466 = vpack.c.b16 %v3457, %v3456
      %v3467 = vpack.c.b16 %v3459, %v3458
      %v3469 = vsel %vm561, %v3460, 0
      %v3472 = vsel %vm561, %v3461, 0
      %v3475 = vsel %vm561, %v3462, 0
      %v3478 = vsel %vm561, %v3463, 0
      %v3481 = vsel %vm561, %v3464, 0
      %v3484 = vsel %vm561, %v3465, 0
      %v3487 = vsel %vm561, %v3466, 0
      %v3490 = vsel %vm561, %v3467, 0
      %v3493 = vsel %vm592, %v3443, 0
      %3495 = vmatpush.bf16.msra.mxu0 0
      %3496 = vmatpush.bf16.msra.mxu0 0
      %3497 = vmatpush.bf16.msra.mxu0 0
      %3498 = vmatpush.bf16.msra.mxu0 0
      %3499 = vmatpush.bf16.msra.mxu0 0
      %3500 = vmatpush.bf16.msra.mxu0 0
      %3501 = vmatpush.bf16.msra.mxu0 0
      %3502 = vmatpush.bf16.msra.mxu0 %v3493
      %3503 = vmatmul.bf16.gmra.mxu0 %v3469
      %v3504 = vpop.f32.mrf.mxu0
      %v3505 = vadd.f32 0.0, %v3504
      %v3506 = vpop.f32.mrf.mxu0
      %v3507 = vadd.f32 0.0, %v3506
      %3508 = vmatmul.bf16.gmra.mxu0 %v3472
      %v3509 = vpop.f32.mrf.mxu0
      %v3510 = vadd.f32 0.0, %v3509
      %v3511 = vpop.f32.mrf.mxu0
      %v3512 = vadd.f32 0.0, %v3511
      %3513 = vmatmul.bf16.gmra.mxu0 %v3475
      %v3514 = vpop.f32.mrf.mxu0
      %v3515 = vadd.f32 0.0, %v3514
      %v3516 = vpop.f32.mrf.mxu0
      %v3517 = vadd.f32 0.0, %v3516
      %3518 = vmatmul.bf16.gmra.mxu0 %v3478
      %v3519 = vpop.f32.mrf.mxu0
      %v3520 = vadd.f32 0.0, %v3519
      %v3521 = vpop.f32.mrf.mxu0
      %v3522 = vadd.f32 0.0, %v3521
      %3523 = vmatmul.bf16.gmra.mxu0 %v3481
      %v3524 = vpop.f32.mrf.mxu0
      %v3525 = vadd.f32 0.0, %v3524
      %v3526 = vpop.f32.mrf.mxu0
      %v3527 = vadd.f32 0.0, %v3526
      %3528 = vmatmul.bf16.gmra.mxu0 %v3484
      %v3529 = vpop.f32.mrf.mxu0
      %v3530 = vadd.f32 0.0, %v3529
      %v3531 = vpop.f32.mrf.mxu0
      %v3532 = vadd.f32 0.0, %v3531
      %3533 = vmatmul.bf16.gmra.mxu0 %v3487
      %v3534 = vpop.f32.mrf.mxu0
      %v3535 = vadd.f32 0.0, %v3534
      %v3536 = vpop.f32.mrf.mxu0
      %v3537 = vadd.f32 0.0, %v3536
      %3538 = vmatmul.bf16.gmra.mxu0 %v3490
      %v3539 = vpop.f32.mrf.mxu0
      %v3540 = vadd.f32 0.0, %v3539
      %v3541 = vpop.f32.mrf.mxu0
      %v3542 = vadd.f32 0.0, %v3541
      %3543 = vdwg.mxu0
      %v3560 = vunpack.c.l.b16 %v3225
      %v3561 = vunpack.c.l.b16 %v3226
      %v3562 = vunpack.c.l.b16 %v3227
      %v3563 = vunpack.c.l.b16 %v3228
      %v3564 = vunpack.c.l.b16 %v3229
      %v3565 = vunpack.c.l.b16 %v3230
      %v3566 = vunpack.c.l.b16 %v3231
      %v3567 = vunpack.c.l.b16 %v3232
      %v3568 = vunpack.c.l.b16 %v3233
      %v3569 = vunpack.c.l.b16 %v3234
      %v3570 = vunpack.c.l.b16 %v3235
      %v3571 = vunpack.c.l.b16 %v3236
      %v3572 = vunpack.c.l.b16 %v3237
      %v3573 = vunpack.c.l.b16 %v3238
      %v3574 = vunpack.c.l.b16 %v3239
      %v3575 = vunpack.c.l.b16 %v3240
      %v3576 = vpack.c.b16 %v3561, %v3560
      %v3577 = vpack.c.b16 %v3563, %v3562
      %v3578 = vpack.c.b16 %v3565, %v3564
      %v3579 = vpack.c.b16 %v3567, %v3566
      %v3580 = vpack.c.b16 %v3569, %v3568
      %v3581 = vpack.c.b16 %v3571, %v3570
      %v3582 = vpack.c.b16 %v3573, %v3572
      %v3583 = vpack.c.b16 %v3575, %v3574
      %v3585 = vsel %vm561, %v3576, 0
      %v3588 = vsel %vm561, %v3577, 0
      %v3591 = vsel %vm561, %v3578, 0
      %v3594 = vsel %vm561, %v3579, 0
      %v3597 = vsel %vm561, %v3580, 0
      %v3600 = vsel %vm561, %v3581, 0
      %v3603 = vsel %vm561, %v3582, 0
      %v3606 = vsel %vm561, %v3583, 0
      %v3609 = vsel %vm592, %v3241, 0
      %3611 = vmatpush.bf16.msra.mxu0 0
      %3612 = vmatpush.bf16.msra.mxu0 0
      %3613 = vmatpush.bf16.msra.mxu0 0
      %3614 = vmatpush.bf16.msra.mxu0 0
      %3615 = vmatpush.bf16.msra.mxu0 0
      %3616 = vmatpush.bf16.msra.mxu0 0
      %3617 = vmatpush.bf16.msra.mxu0 0
      %3618 = vmatpush.bf16.msra.mxu0 %v3609
      %3619 = vmatmul.bf16.gmra.mxu0 %v3585
      %v3620 = vpop.f32.mrf.mxu0
      %v3621 = vadd.f32 %v3505, %v3620
      %v3622 = vpop.f32.mrf.mxu0
      %v3623 = vadd.f32 %v3507, %v3622
      %3624 = vmatmul.bf16.gmra.mxu0 %v3588
      %v3625 = vpop.f32.mrf.mxu0
      %v3626 = vadd.f32 %v3510, %v3625
      %v3627 = vpop.f32.mrf.mxu0
      %v3628 = vadd.f32 %v3512, %v3627
      %3629 = vmatmul.bf16.gmra.mxu0 %v3591
      %v3630 = vpop.f32.mrf.mxu0
      %v3631 = vadd.f32 %v3515, %v3630
      %v3632 = vpop.f32.mrf.mxu0
      %v3633 = vadd.f32 %v3517, %v3632
      %3634 = vmatmul.bf16.gmra.mxu0 %v3594
      %v3635 = vpop.f32.mrf.mxu0
      %v3636 = vadd.f32 %v3520, %v3635
      %v3637 = vpop.f32.mrf.mxu0
      %v3638 = vadd.f32 %v3522, %v3637
      %3639 = vmatmul.bf16.gmra.mxu0 %v3597
      %v3640 = vpop.f32.mrf.mxu0
      %v3641 = vadd.f32 %v3525, %v3640
      %v3642 = vpop.f32.mrf.mxu0
      %v3643 = vadd.f32 %v3527, %v3642
      %3644 = vmatmul.bf16.gmra.mxu0 %v3600
      %v3645 = vpop.f32.mrf.mxu0
      %v3646 = vadd.f32 %v3530, %v3645
      %v3647 = vpop.f32.mrf.mxu0
      %v3648 = vadd.f32 %v3532, %v3647
      %3649 = vmatmul.bf16.gmra.mxu0 %v3603
      %v3650 = vpop.f32.mrf.mxu0
      %v3651 = vadd.f32 %v3535, %v3650
      %v3652 = vpop.f32.mrf.mxu0
      %v3653 = vadd.f32 %v3537, %v3652
      %3654 = vmatmul.bf16.gmra.mxu0 %v3606
      %v3655 = vpop.f32.mrf.mxu0
      %v3656 = vadd.f32 %v3540, %v3655
      %v3657 = vpop.f32.mrf.mxu0
      %v3658 = vadd.f32 %v3542, %v3657
      %3659 = vdwg.mxu0
      %v3660 = vld [vmem:[#allocation2] sm:$0xe]
      %v3661 = vld [vmem:[#allocation2 + $0xc] sm:$0xe]
      %v3662 = vld [vmem:[#allocation2 + $0x18] sm:$0xe]
      %v3663 = vld [vmem:[#allocation2 + $0x24] sm:$0xe]
      %v3664 = vld [vmem:[#allocation2 + $0x30] sm:$0xe]
      %v3665 = vld [vmem:[#allocation2 + $0x3c] sm:$0xe]
      %v3666 = vld [vmem:[#allocation2 + $0x48] sm:$0xe]
      %v3667 = vld [vmem:[#allocation2 + $0x54] sm:$0xe]
      %v3684 = vrot.slane %v3660, 5
      %v3685 = vrot.slane %v3684, 4
      %v3686 = vrot.slane %v3226, 5
      %v3687 = vsel %vm829, %v3685, %v3686
      %v3688 = vrot.slane %v3686, 4
      %v3689 = vrot.slane %v3242, 5
      %v3690 = vsel %vm829, %v3688, %v3689
      %v3691 = vrot.slane %v3661, 5
      %v3692 = vrot.slane %v3691, 4
      %v3693 = vrot.slane %v3228, 5
      %v3694 = vsel %vm829, %v3692, %v3693
      %v3695 = vrot.slane %v3693, 4
      %v3696 = vrot.slane %v3243, 5
      %v3697 = vsel %vm829, %v3695, %v3696
      %v3698 = vrot.slane %v3662, 5
      %v3699 = vrot.slane %v3698, 4
      %v3700 = vrot.slane %v3230, 5
      %v3701 = vsel %vm829, %v3699, %v3700
      %v3702 = vrot.slane %v3700, 4
      %v3703 = vrot.slane %v3244, 5
      %v3704 = vsel %vm829, %v3702, %v3703
      %v3705 = vrot.slane %v3663, 5
      %v3706 = vrot.slane %v3705, 4
      %v3707 = vrot.slane %v3232, 5
      %v3708 = vsel %vm829, %v3706, %v3707
      %v3709 = vrot.slane %v3707, 4
      %v3710 = vrot.slane %v3245, 5
      %v3711 = vsel %vm829, %v3709, %v3710
      %v3712 = vrot.slane %v3664, 5
      %v3713 = vrot.slane %v3712, 4
      %v3714 = vrot.slane %v3234, 5
      %v3715 = vsel %vm829, %v3713, %v3714
      %v3716 = vrot.slane %v3714, 4
      %v3717 = vrot.slane %v3246, 5
      %v3718 = vsel %vm829, %v3716, %v3717
      %v3719 = vrot.slane %v3665, 5
      %v3720 = vrot.slane %v3719, 4
      %v3721 = vrot.slane %v3236, 5
      %v3722 = vsel %vm829, %v3720, %v3721
      %v3723 = vrot.slane %v3721, 4
      %v3724 = vrot.slane %v3247, 5
      %v3725 = vsel %vm829, %v3723, %v3724
      %v3726 = vrot.slane %v3666, 5
      %v3727 = vrot.slane %v3726, 4
      %v3728 = vrot.slane %v3238, 5
      %v3729 = vsel %vm829, %v3727, %v3728
      %v3730 = vrot.slane %v3728, 4
      %v3731 = vrot.slane %v3248, 5
      %v3732 = vsel %vm829, %v3730, %v3731
      %v3733 = vrot.slane %v3667, 5
      %v3734 = vrot.slane %v3733, 4
      %v3735 = vrot.slane %v3240, 5
      %v3736 = vsel %vm829, %v3734, %v3735
      %v3737 = vrot.slane %v3735, 4
      %v3738 = vrot.slane %v3249, 5
      %v3739 = vsel %vm829, %v3737, %v3738
      %s3740 = scalar_lea.vmem %s2, 4
      %v3741 = vld [vmem:[%s3740] sm:$0x3]
      %v3742 = vunpack.c.l.b16 %v3687
      %v3743 = vunpack.c.l.b16 %v3690
      %v3744 = vunpack.c.l.b16 %v3694
      %v3745 = vunpack.c.l.b16 %v3697
      %v3746 = vunpack.c.l.b16 %v3701
      %v3747 = vunpack.c.l.b16 %v3704
      %v3748 = vunpack.c.l.b16 %v3708
      %v3749 = vunpack.c.l.b16 %v3711
      %v3750 = vunpack.c.l.b16 %v3715
      %v3751 = vunpack.c.l.b16 %v3718
      %v3752 = vunpack.c.l.b16 %v3722
      %v3753 = vunpack.c.l.b16 %v3725
      %v3754 = vunpack.c.l.b16 %v3729
      %v3755 = vunpack.c.l.b16 %v3732
      %v3756 = vunpack.c.l.b16 %v3736
      %v3757 = vunpack.c.l.b16 %v3739
      %v3758 = vpack.c.b16 %v3743, %v3742
      %v3759 = vpack.c.b16 %v3745, %v3744
      %v3760 = vpack.c.b16 %v3747, %v3746
      %v3761 = vpack.c.b16 %v3749, %v3748
      %v3762 = vpack.c.b16 %v3751, %v3750
      %v3763 = vpack.c.b16 %v3753, %v3752
      %v3764 = vpack.c.b16 %v3755, %v3754
      %v3765 = vpack.c.b16 %v3757, %v3756
      %v3767 = vsel %vm561, %v3758, 0
      %v3770 = vsel %vm561, %v3759, 0
      %v3773 = vsel %vm561, %v3760, 0
      %v3776 = vsel %vm561, %v3761, 0
      %v3779 = vsel %vm561, %v3762, 0
      %v3782 = vsel %vm561, %v3763, 0
      %v3785 = vsel %vm561, %v3764, 0
      %v3788 = vsel %vm561, %v3765, 0
      %v3791 = vsel %vm592, %v3741, 0
      %3793 = vmatpush.bf16.msra.mxu0 0
      %3794 = vmatpush.bf16.msra.mxu0 0
      %3795 = vmatpush.bf16.msra.mxu0 0
      %3796 = vmatpush.bf16.msra.mxu0 0
      %3797 = vmatpush.bf16.msra.mxu0 0
      %3798 = vmatpush.bf16.msra.mxu0 0
      %3799 = vmatpush.bf16.msra.mxu0 0
      %3800 = vmatpush.bf16.msra.mxu0 %v3791
      %3801 = vmatmul.bf16.gmra.mxu0 %v3767
      %v3802 = vpop.f32.mrf.mxu0
      %v3803 = vadd.f32 0.0, %v3802
      %v3804 = vpop.f32.mrf.mxu0
      %v3805 = vadd.f32 0.0, %v3804
      %3806 = vmatmul.bf16.gmra.mxu0 %v3770
      %v3807 = vpop.f32.mrf.mxu0
      %v3808 = vadd.f32 0.0, %v3807
      %v3809 = vpop.f32.mrf.mxu0
      %v3810 = vadd.f32 0.0, %v3809
      %3811 = vmatmul.bf16.gmra.mxu0 %v3773
      %v3812 = vpop.f32.mrf.mxu0
      %v3813 = vadd.f32 0.0, %v3812
      %v3814 = vpop.f32.mrf.mxu0
      %v3815 = vadd.f32 0.0, %v3814
      %3816 = vmatmul.bf16.gmra.mxu0 %v3776
      %v3817 = vpop.f32.mrf.mxu0
      %v3818 = vadd.f32 0.0, %v3817
      %v3819 = vpop.f32.mrf.mxu0
      %v3820 = vadd.f32 0.0, %v3819
      %3821 = vmatmul.bf16.gmra.mxu0 %v3779
      %v3822 = vpop.f32.mrf.mxu0
      %v3823 = vadd.f32 0.0, %v3822
      %v3824 = vpop.f32.mrf.mxu0
      %v3825 = vadd.f32 0.0, %v3824
      %3826 = vmatmul.bf16.gmra.mxu0 %v3782
      %v3827 = vpop.f32.mrf.mxu0
      %v3828 = vadd.f32 0.0, %v3827
      %v3829 = vpop.f32.mrf.mxu0
      %v3830 = vadd.f32 0.0, %v3829
      %3831 = vmatmul.bf16.gmra.mxu0 %v3785
      %v3832 = vpop.f32.mrf.mxu0
      %v3833 = vadd.f32 0.0, %v3832
      %v3834 = vpop.f32.mrf.mxu0
      %v3835 = vadd.f32 0.0, %v3834
      %3836 = vmatmul.bf16.gmra.mxu0 %v3788
      %v3837 = vpop.f32.mrf.mxu0
      %v3838 = vadd.f32 0.0, %v3837
      %v3839 = vpop.f32.mrf.mxu0
      %v3840 = vadd.f32 0.0, %v3839
      %3841 = vdwg.mxu0
      %v3842 = vadd.f32 %v3621, %v3803
      %v3843 = vadd.f32 %v3623, %v3805
      %v3844 = vadd.f32 %v3626, %v3808
      %v3845 = vadd.f32 %v3628, %v3810
      %v3846 = vadd.f32 %v3631, %v3813
      %v3847 = vadd.f32 %v3633, %v3815
      %v3848 = vadd.f32 %v3636, %v3818
      %v3849 = vadd.f32 %v3638, %v3820
      %v3850 = vadd.f32 %v3641, %v3823
      %v3851 = vadd.f32 %v3643, %v3825
      %v3852 = vadd.f32 %v3646, %v3828
      %v3853 = vadd.f32 %v3648, %v3830
      %v3854 = vadd.f32 %v3651, %v3833
      %v3855 = vadd.f32 %v3653, %v3835
      %v3856 = vadd.f32 %v3656, %v3838
      %v3857 = vadd.f32 %v3658, %v3840
      %s3858 = scalar_lea.vmem [#allocation2], 12
      %v3859 = vld [vmem:[%s3858] sm:$0xf]
      %v3860 = vld [vmem:[%s3858 + $0x4] sm:$0xf]
      %v3861 = vld [vmem:[%s3858 + $0xc] sm:$0xf]
      %v3862 = vld [vmem:[%s3858 + $0x10] sm:$0xf]
      %v3863 = vld [vmem:[%s3858 + $0x18] sm:$0xf]
      %v3864 = vld [vmem:[%s3858 + $0x1c] sm:$0xf]
      %v3865 = vld [vmem:[%s3858 + $0x24] sm:$0xf]
      %v3866 = vld [vmem:[%s3858 + $0x28] sm:$0xf]
      %v3867 = vld [vmem:[%s3858 + $0x30] sm:$0xf]
      %v3868 = vld [vmem:[%s3858 + $0x34] sm:$0xf]
      %v3869 = vld [vmem:[%s3858 + $0x3c] sm:$0xf]
      %v3870 = vld [vmem:[%s3858 + $0x40] sm:$0xf]
      %v3871 = vld [vmem:[%s3858 + $0x48] sm:$0xf]
      %v3872 = vld [vmem:[%s3858 + $0x4c] sm:$0xf]
      %v3873 = vld [vmem:[%s3858 + $0x54] sm:$0xf]
      %v3874 = vld [vmem:[%s3858 + $0x58] sm:$0xf]
      %s3875 = scalar_lea.vmem %s2, 6
      %v3876 = vld [vmem:[%s3875] sm:$0x3]
      %v3893 = vunpack.c.l.b16 %v3859
      %v3894 = vunpack.c.l.b16 %v3860
      %v3895 = vunpack.c.l.b16 %v3861
      %v3896 = vunpack.c.l.b16 %v3862
      %v3897 = vunpack.c.l.b16 %v3863
      %v3898 = vunpack.c.l.b16 %v3864
      %v3899 = vunpack.c.l.b16 %v3865
      %v3900 = vunpack.c.l.b16 %v3866
      %v3901 = vunpack.c.l.b16 %v3867
      %v3902 = vunpack.c.l.b16 %v3868
      %v3903 = vunpack.c.l.b16 %v3869
      %v3904 = vunpack.c.l.b16 %v3870
      %v3905 = vunpack.c.l.b16 %v3871
      %v3906 = vunpack.c.l.b16 %v3872
      %v3907 = vunpack.c.l.b16 %v3873
      %v3908 = vunpack.c.l.b16 %v3874
      %v3909 = vpack.c.b16 %v3894, %v3893
      %v3910 = vpack.c.b16 %v3896, %v3895
      %v3911 = vpack.c.b16 %v3898, %v3897
      %v3912 = vpack.c.b16 %v3900, %v3899
      %v3913 = vpack.c.b16 %v3902, %v3901
      %v3914 = vpack.c.b16 %v3904, %v3903
      %v3915 = vpack.c.b16 %v3906, %v3905
      %v3916 = vpack.c.b16 %v3908, %v3907
      %v3918 = vsel %vm561, %v3909, 0
      %v3921 = vsel %vm561, %v3910, 0
      %v3924 = vsel %vm561, %v3911, 0
      %v3927 = vsel %vm561, %v3912, 0
      %v3930 = vsel %vm561, %v3913, 0
      %v3933 = vsel %vm561, %v3914, 0
      %v3936 = vsel %vm561, %v3915, 0
      %v3939 = vsel %vm561, %v3916, 0
      %v3942 = vsel %vm592, %v3876, 0
      %3944 = vmatpush.bf16.msra.mxu0 0
      %3945 = vmatpush.bf16.msra.mxu0 0
      %3946 = vmatpush.bf16.msra.mxu0 0
      %3947 = vmatpush.bf16.msra.mxu0 0
      %3948 = vmatpush.bf16.msra.mxu0 0
      %3949 = vmatpush.bf16.msra.mxu0 0
      %3950 = vmatpush.bf16.msra.mxu0 0
      %3951 = vmatpush.bf16.msra.mxu0 %v3942
      %3952 = vmatmul.bf16.gmra.mxu0 %v3918
      %v3953 = vpop.f32.mrf.mxu0
      %v3954 = vadd.f32 0.0, %v3953
      %v3955 = vpop.f32.mrf.mxu0
      %v3956 = vadd.f32 0.0, %v3955
      %3957 = vmatmul.bf16.gmra.mxu0 %v3921
      %v3958 = vpop.f32.mrf.mxu0
      %v3959 = vadd.f32 0.0, %v3958
      %v3960 = vpop.f32.mrf.mxu0
      %v3961 = vadd.f32 0.0, %v3960
      %3962 = vmatmul.bf16.gmra.mxu0 %v3924
      %v3963 = vpop.f32.mrf.mxu0
      %v3964 = vadd.f32 0.0, %v3963
      %v3965 = vpop.f32.mrf.mxu0
      %v3966 = vadd.f32 0.0, %v3965
      %3967 = vmatmul.bf16.gmra.mxu0 %v3927
      %v3968 = vpop.f32.mrf.mxu0
      %v3969 = vadd.f32 0.0, %v3968
      %v3970 = vpop.f32.mrf.mxu0
      %v3971 = vadd.f32 0.0, %v3970
      %3972 = vmatmul.bf16.gmra.mxu0 %v3930
      %v3973 = vpop.f32.mrf.mxu0
      %v3974 = vadd.f32 0.0, %v3973
      %v3975 = vpop.f32.mrf.mxu0
      %v3976 = vadd.f32 0.0, %v3975
      %3977 = vmatmul.bf16.gmra.mxu0 %v3933
      %v3978 = vpop.f32.mrf.mxu0
      %v3979 = vadd.f32 0.0, %v3978
      %v3980 = vpop.f32.mrf.mxu0
      %v3981 = vadd.f32 0.0, %v3980
      %3982 = vmatmul.bf16.gmra.mxu0 %v3936
      %v3983 = vpop.f32.mrf.mxu0
      %v3984 = vadd.f32 0.0, %v3983
      %v3985 = vpop.f32.mrf.mxu0
      %v3986 = vadd.f32 0.0, %v3985
      %3987 = vmatmul.bf16.gmra.mxu0 %v3939
      %v3988 = vpop.f32.mrf.mxu0
      %v3989 = vadd.f32 0.0, %v3988
      %v3990 = vpop.f32.mrf.mxu0
      %v3991 = vadd.f32 0.0, %v3990
      %3992 = vdwg.mxu0
      %v3993 = vadd.f32 %v3842, %v3954
      %v3994 = vadd.f32 %v3843, %v3956
      %v3995 = vadd.f32 %v3844, %v3959
      %v3996 = vadd.f32 %v3845, %v3961
      %v3997 = vadd.f32 %v3846, %v3964
      %v3998 = vadd.f32 %v3847, %v3966
      %v3999 = vadd.f32 %v3848, %v3969
      %v4000 = vadd.f32 %v3849, %v3971
      %v4001 = vadd.f32 %v3850, %v3974
      %v4002 = vadd.f32 %v3851, %v3976
      %v4003 = vadd.f32 %v3852, %v3979
      %v4004 = vadd.f32 %v3853, %v3981
      %v4005 = vadd.f32 %v3854, %v3984
      %v4006 = vadd.f32 %v3855, %v3986
      %v4007 = vadd.f32 %v3856, %v3989
      %v4008 = vadd.f32 %v3857, %v3991
      %v4009 = vld [vmem:[%s3858] sm:$0xf]
      %v4010 = vld [vmem:[%s3858 + $0x4] sm:$0xf]
      %v4011 = vld [vmem:[%s3858 + $0x8] sm:$0x1]
      %v4012 = vld [vmem:[%s3858 + $0xc] sm:$0xf]
      %v4013 = vld [vmem:[%s3858 + $0x10] sm:$0xf]
      %v4014 = vld [vmem:[%s3858 + $0x14] sm:$0x1]
      %v4015 = vld [vmem:[%s3858 + $0x18] sm:$0xf]
      %v4016 = vld [vmem:[%s3858 + $0x1c] sm:$0xf]
      %v4017 = vld [vmem:[%s3858 + $0x20] sm:$0x1]
      %v4018 = vld [vmem:[%s3858 + $0x24] sm:$0xf]
      %v4019 = vld [vmem:[%s3858 + $0x28] sm:$0xf]
      %v4020 = vld [vmem:[%s3858 + $0x2c] sm:$0x1]
      %v4021 = vld [vmem:[%s3858 + $0x30] sm:$0xf]
      %v4022 = vld [vmem:[%s3858 + $0x34] sm:$0xf]
      %v4023 = vld [vmem:[%s3858 + $0x38] sm:$0x1]
      %v4024 = vld [vmem:[%s3858 + $0x3c] sm:$0xf]
      %v4025 = vld [vmem:[%s3858 + $0x40] sm:$0xf]
      %v4026 = vld [vmem:[%s3858 + $0x44] sm:$0x1]
      %v4027 = vld [vmem:[%s3858 + $0x48] sm:$0xf]
      %v4028 = vld [vmem:[%s3858 + $0x4c] sm:$0xf]
      %v4029 = vld [vmem:[%s3858 + $0x50] sm:$0x1]
      %v4030 = vld [vmem:[%s3858 + $0x54] sm:$0xf]
      %v4031 = vld [vmem:[%s3858 + $0x58] sm:$0xf]
      %v4032 = vld [vmem:[%s3858 + $0x5c] sm:$0x1]
      %v4034 = vshrl.u32 %v4009, 16
      %v4036 = vrot.slane %v4034, 4
      %v4037 = vshll.u32 %v4009, 16
      %v4039 = vrot.slane %v4037, 5
      %v4040 = vor.u32 %v4036, %v4039
      %v4041 = vrot.slane %v4040, 4
      %v4043 = vshll.u32 %v4010, 16
      %v4045 = vrot.slane %v4043, 5
      %v4046 = vsel %vm288, %v4041, %v4045
      %v4047 = vshrl.u32 %v4010, 16
      %v4049 = vrot.slane %v4047, 4
      %v4050 = vor.u32 %v4049, %v4045
      %v4051 = vrot.slane %v4050, 4
      %v4053 = vshll.u32 %v4011, 16
      %v4055 = vrot.slane %v4053, 5
      %v4056 = vsel %vm288, %v4051, %v4055
      %v4058 = vshrl.u32 %v4012, 16
      %v4060 = vrot.slane %v4058, 4
      %v4061 = vshll.u32 %v4012, 16
      %v4063 = vrot.slane %v4061, 5
      %v4064 = vor.u32 %v4060, %v4063
      %v4065 = vrot.slane %v4064, 4
      %v4067 = vshll.u32 %v4013, 16
      %v4069 = vrot.slane %v4067, 5
      %v4070 = vsel %vm288, %v4065, %v4069
      %v4071 = vshrl.u32 %v4013, 16
      %v4073 = vrot.slane %v4071, 4
      %v4074 = vor.u32 %v4073, %v4069
      %v4075 = vrot.slane %v4074, 4
      %v4077 = vshll.u32 %v4014, 16
      %v4079 = vrot.slane %v4077, 5
      %v4080 = vsel %vm288, %v4075, %v4079
      %v4082 = vshrl.u32 %v4015, 16
      %v4084 = vrot.slane %v4082, 4
      %v4085 = vshll.u32 %v4015, 16
      %v4087 = vrot.slane %v4085, 5
      %v4088 = vor.u32 %v4084, %v4087
      %v4089 = vrot.slane %v4088, 4
      %v4091 = vshll.u32 %v4016, 16
      %v4093 = vrot.slane %v4091, 5
      %v4094 = vsel %vm288, %v4089, %v4093
      %v4095 = vshrl.u32 %v4016, 16
      %v4097 = vrot.slane %v4095, 4
      %v4098 = vor.u32 %v4097, %v4093
      %v4099 = vrot.slane %v4098, 4
      %v4101 = vshll.u32 %v4017, 16
      %v4103 = vrot.slane %v4101, 5
      %v4104 = vsel %vm288, %v4099, %v4103
      %v4106 = vshrl.u32 %v4018, 16
      %v4108 = vrot.slane %v4106, 4
      %v4109 = vshll.u32 %v4018, 16
      %v4111 = vrot.slane %v4109, 5
      %v4112 = vor.u32 %v4108, %v4111
      %v4113 = vrot.slane %v4112, 4
      %v4115 = vshll.u32 %v4019, 16
      %v4117 = vrot.slane %v4115, 5
      %v4118 = vsel %vm288, %v4113, %v4117
      %v4119 = vshrl.u32 %v4019, 16
      %v4121 = vrot.slane %v4119, 4
      %v4122 = vor.u32 %v4121, %v4117
      %v4123 = vrot.slane %v4122, 4
      %v4125 = vshll.u32 %v4020, 16
      %v4127 = vrot.slane %v4125, 5
      %v4128 = vsel %vm288, %v4123, %v4127
      %v4130 = vshrl.u32 %v4021, 16
      %v4132 = vrot.slane %v4130, 4
      %v4133 = vshll.u32 %v4021, 16
      %v4135 = vrot.slane %v4133, 5
      %v4136 = vor.u32 %v4132, %v4135
      %v4137 = vrot.slane %v4136, 4
      %v4139 = vshll.u32 %v4022, 16
      %v4141 = vrot.slane %v4139, 5
      %v4142 = vsel %vm288, %v4137, %v4141
      %v4143 = vshrl.u32 %v4022, 16
      %v4145 = vrot.slane %v4143, 4
      %v4146 = vor.u32 %v4145, %v4141
      %v4147 = vrot.slane %v4146, 4
      %v4149 = vshll.u32 %v4023, 16
      %v4151 = vrot.slane %v4149, 5
      %v4152 = vsel %vm288, %v4147, %v4151
      %v4154 = vshrl.u32 %v4024, 16
      %v4156 = vrot.slane %v4154, 4
      %v4157 = vshll.u32 %v4024, 16
      %v4159 = vrot.slane %v4157, 5
      %v4160 = vor.u32 %v4156, %v4159
      %v4161 = vrot.slane %v4160, 4
      %v4163 = vshll.u32 %v4025, 16
      %v4165 = vrot.slane %v4163, 5
      %v4166 = vsel %vm288, %v4161, %v4165
      %v4167 = vshrl.u32 %v4025, 16
      %v4169 = vrot.slane %v4167, 4
      %v4170 = vor.u32 %v4169, %v4165
      %v4171 = vrot.slane %v4170, 4
      %v4173 = vshll.u32 %v4026, 16
      %v4175 = vrot.slane %v4173, 5
      %v4176 = vsel %vm288, %v4171, %v4175
      %v4178 = vshrl.u32 %v4027, 16
      %v4180 = vrot.slane %v4178, 4
      %v4181 = vshll.u32 %v4027, 16
      %v4183 = vrot.slane %v4181, 5
      %v4184 = vor.u32 %v4180, %v4183
      %v4185 = vrot.slane %v4184, 4
      %v4187 = vshll.u32 %v4028, 16
      %v4189 = vrot.slane %v4187, 5
      %v4190 = vsel %vm288, %v4185, %v4189
      %v4191 = vshrl.u32 %v4028, 16
      %v4193 = vrot.slane %v4191, 4
      %v4194 = vor.u32 %v4193, %v4189
      %v4195 = vrot.slane %v4194, 4
      %v4197 = vshll.u32 %v4029, 16
      %v4199 = vrot.slane %v4197, 5
      %v4200 = vsel %vm288, %v4195, %v4199
      %v4202 = vshrl.u32 %v4030, 16
      %v4204 = vrot.slane %v4202, 4
      %v4205 = vshll.u32 %v4030, 16
      %v4207 = vrot.slane %v4205, 5
      %v4208 = vor.u32 %v4204, %v4207
      %v4209 = vrot.slane %v4208, 4
      %v4211 = vshll.u32 %v4031, 16
      %v4213 = vrot.slane %v4211, 5
      %v4214 = vsel %vm288, %v4209, %v4213
      %v4215 = vshrl.u32 %v4031, 16
      %v4217 = vrot.slane %v4215, 4
      %v4218 = vor.u32 %v4217, %v4213
      %v4219 = vrot.slane %v4218, 4
      %v4221 = vshll.u32 %v4032, 16
      %v4223 = vrot.slane %v4221, 5
      %v4224 = vsel %vm288, %v4219, %v4223
      %s4225 = scalar_lea.vmem %s2, 8
      %v4226 = vld [vmem:[%s4225] sm:$0x3]
      %v4227 = vunpack.c.l.b16 %v4046
      %v4228 = vunpack.c.l.b16 %v4056
      %v4229 = vunpack.c.l.b16 %v4070
      %v4230 = vunpack.c.l.b16 %v4080
      %v4231 = vunpack.c.l.b16 %v4094
      %v4232 = vunpack.c.l.b16 %v4104
      %v4233 = vunpack.c.l.b16 %v4118
      %v4234 = vunpack.c.l.b16 %v4128
      %v4235 = vunpack.c.l.b16 %v4142
      %v4236 = vunpack.c.l.b16 %v4152
      %v4237 = vunpack.c.l.b16 %v4166
      %v4238 = vunpack.c.l.b16 %v4176
      %v4239 = vunpack.c.l.b16 %v4190
      %v4240 = vunpack.c.l.b16 %v4200
      %v4241 = vunpack.c.l.b16 %v4214
      %v4242 = vunpack.c.l.b16 %v4224
      %v4243 = vpack.c.b16 %v4228, %v4227
      %v4244 = vpack.c.b16 %v4230, %v4229
      %v4245 = vpack.c.b16 %v4232, %v4231
      %v4246 = vpack.c.b16 %v4234, %v4233
      %v4247 = vpack.c.b16 %v4236, %v4235
      %v4248 = vpack.c.b16 %v4238, %v4237
      %v4249 = vpack.c.b16 %v4240, %v4239
      %v4250 = vpack.c.b16 %v4242, %v4241
      %v4252 = vsel %vm561, %v4243, 0
      %v4255 = vsel %vm561, %v4244, 0
      %v4258 = vsel %vm561, %v4245, 0
      %v4261 = vsel %vm561, %v4246, 0
      %v4264 = vsel %vm561, %v4247, 0
      %v4267 = vsel %vm561, %v4248, 0
      %v4270 = vsel %vm561, %v4249, 0
      %v4273 = vsel %vm561, %v4250, 0
      %v4276 = vsel %vm592, %v4226, 0
      %4278 = vmatpush.bf16.msra.mxu0 0
      %4279 = vmatpush.bf16.msra.mxu0 0
      %4280 = vmatpush.bf16.msra.mxu0 0
      %4281 = vmatpush.bf16.msra.mxu0 0
      %4282 = vmatpush.bf16.msra.mxu0 0
      %4283 = vmatpush.bf16.msra.mxu0 0
      %4284 = vmatpush.bf16.msra.mxu0 0
      %4285 = vmatpush.bf16.msra.mxu0 %v4276
      %4286 = vmatmul.bf16.gmra.mxu0 %v4252
      %v4287 = vpop.f32.mrf.mxu0
      %v4288 = vadd.f32 0.0, %v4287
      %v4289 = vpop.f32.mrf.mxu0
      %v4290 = vadd.f32 0.0, %v4289
      %4291 = vmatmul.bf16.gmra.mxu0 %v4255
      %v4292 = vpop.f32.mrf.mxu0
      %v4293 = vadd.f32 0.0, %v4292
      %v4294 = vpop.f32.mrf.mxu0
      %v4295 = vadd.f32 0.0, %v4294
      %4296 = vmatmul.bf16.gmra.mxu0 %v4258
      %v4297 = vpop.f32.mrf.mxu0
      %v4298 = vadd.f32 0.0, %v4297
      %v4299 = vpop.f32.mrf.mxu0
      %v4300 = vadd.f32 0.0, %v4299
      %4301 = vmatmul.bf16.gmra.mxu0 %v4261
      %v4302 = vpop.f32.mrf.mxu0
      %v4303 = vadd.f32 0.0, %v4302
      %v4304 = vpop.f32.mrf.mxu0
      %v4305 = vadd.f32 0.0, %v4304
      %4306 = vmatmul.bf16.gmra.mxu0 %v4264
      %v4307 = vpop.f32.mrf.mxu0
      %v4308 = vadd.f32 0.0, %v4307
      %v4309 = vpop.f32.mrf.mxu0
      %v4310 = vadd.f32 0.0, %v4309
      %4311 = vmatmul.bf16.gmra.mxu0 %v4267
      %v4312 = vpop.f32.mrf.mxu0
      %v4313 = vadd.f32 0.0, %v4312
      %v4314 = vpop.f32.mrf.mxu0
      %v4315 = vadd.f32 0.0, %v4314
      %4316 = vmatmul.bf16.gmra.mxu0 %v4270
      %v4317 = vpop.f32.mrf.mxu0
      %v4318 = vadd.f32 0.0, %v4317
      %v4319 = vpop.f32.mrf.mxu0
      %v4320 = vadd.f32 0.0, %v4319
      %4321 = vmatmul.bf16.gmra.mxu0 %v4273
      %v4322 = vpop.f32.mrf.mxu0
      %v4323 = vadd.f32 0.0, %v4322
      %v4324 = vpop.f32.mrf.mxu0
      %v4325 = vadd.f32 0.0, %v4324
      %4326 = vdwg.mxu0
      %v4327 = vadd.f32 %v3993, %v4288
      %v4328 = vadd.f32 %v3994, %v4290
      %v4329 = vadd.f32 %v3995, %v4293
      %v4330 = vadd.f32 %v3996, %v4295
      %v4331 = vadd.f32 %v3997, %v4298
      %v4332 = vadd.f32 %v3998, %v4300
      %v4333 = vadd.f32 %v3999, %v4303
      %v4334 = vadd.f32 %v4000, %v4305
      %v4335 = vadd.f32 %v4001, %v4308
      %v4336 = vadd.f32 %v4002, %v4310
      %v4337 = vadd.f32 %v4003, %v4313
      %v4338 = vadd.f32 %v4004, %v4315
      %v4339 = vadd.f32 %v4005, %v4318
      %v4340 = vadd.f32 %v4006, %v4320
      %v4341 = vadd.f32 %v4007, %v4323
      %v4342 = vadd.f32 %v4008, %v4325
      %v4343 = vld [vmem:[%s3858] sm:$0xe]
      %v4344 = vld [vmem:[%s3858 + $0xc] sm:$0xe]
      %v4345 = vld [vmem:[%s3858 + $0x18] sm:$0xe]
      %v4346 = vld [vmem:[%s3858 + $0x24] sm:$0xe]
      %v4347 = vld [vmem:[%s3858 + $0x30] sm:$0xe]
      %v4348 = vld [vmem:[%s3858 + $0x3c] sm:$0xe]
      %v4349 = vld [vmem:[%s3858 + $0x48] sm:$0xe]
      %v4350 = vld [vmem:[%s3858 + $0x54] sm:$0xe]
      %v4375 = vrot.slane %v4343, 5
      %v4376 = vrot.slane %v4375, 4
      %v4377 = vrot.slane %v4010, 5
      %v4378 = vsel %vm829, %v4376, %v4377
      %v4379 = vrot.slane %v4377, 4
      %v4380 = vrot.slane %v4011, 5
      %v4381 = vsel %vm829, %v4379, %v4380
      %v4382 = vrot.slane %v4344, 5
      %v4383 = vrot.slane %v4382, 4
      %v4384 = vrot.slane %v4013, 5
      %v4385 = vsel %vm829, %v4383, %v4384
      %v4386 = vrot.slane %v4384, 4
      %v4387 = vrot.slane %v4014, 5
      %v4388 = vsel %vm829, %v4386, %v4387
      %v4389 = vrot.slane %v4345, 5
      %v4390 = vrot.slane %v4389, 4
      %v4391 = vrot.slane %v4016, 5
      %v4392 = vsel %vm829, %v4390, %v4391
      %v4393 = vrot.slane %v4391, 4
      %v4394 = vrot.slane %v4017, 5
      %v4395 = vsel %vm829, %v4393, %v4394
      %v4396 = vrot.slane %v4346, 5
      %v4397 = vrot.slane %v4396, 4
      %v4398 = vrot.slane %v4019, 5
      %v4399 = vsel %vm829, %v4397, %v4398
      %v4400 = vrot.slane %v4398, 4
      %v4401 = vrot.slane %v4020, 5
      %v4402 = vsel %vm829, %v4400, %v4401
      %v4403 = vrot.slane %v4347, 5
      %v4404 = vrot.slane %v4403, 4
      %v4405 = vrot.slane %v4022, 5
      %v4406 = vsel %vm829, %v4404, %v4405
      %v4407 = vrot.slane %v4405, 4
      %v4408 = vrot.slane %v4023, 5
      %v4409 = vsel %vm829, %v4407, %v4408
      %v4410 = vrot.slane %v4348, 5
      %v4411 = vrot.slane %v4410, 4
      %v4412 = vrot.slane %v4025, 5
      %v4413 = vsel %vm829, %v4411, %v4412
      %v4414 = vrot.slane %v4412, 4
      %v4415 = vrot.slane %v4026, 5
      %v4416 = vsel %vm829, %v4414, %v4415
      %v4417 = vrot.slane %v4349, 5
      %v4418 = vrot.slane %v4417, 4
      %v4419 = vrot.slane %v4028, 5
      %v4420 = vsel %vm829, %v4418, %v4419
      %v4421 = vrot.slane %v4419, 4
      %v4422 = vrot.slane %v4029, 5
      %v4423 = vsel %vm829, %v4421, %v4422
      %v4424 = vrot.slane %v4350, 5
      %v4425 = vrot.slane %v4424, 4
      %v4426 = vrot.slane %v4031, 5
      %v4427 = vsel %vm829, %v4425, %v4426
      %v4428 = vrot.slane %v4426, 4
      %v4429 = vrot.slane %v4032, 5
      %v4430 = vsel %vm829, %v4428, %v4429
      %s4431 = scalar_lea.vmem %s2, 10
      %v4432 = vld [vmem:[%s4431] sm:$0x3]
      %v4433 = vunpack.c.l.b16 %v4378
      %v4434 = vunpack.c.l.b16 %v4381
      %v4435 = vunpack.c.l.b16 %v4385
      %v4436 = vunpack.c.l.b16 %v4388
      %v4437 = vunpack.c.l.b16 %v4392
      %v4438 = vunpack.c.l.b16 %v4395
      %v4439 = vunpack.c.l.b16 %v4399
      %v4440 = vunpack.c.l.b16 %v4402
      %v4441 = vunpack.c.l.b16 %v4406
      %v4442 = vunpack.c.l.b16 %v4409
      %v4443 = vunpack.c.l.b16 %v4413
      %v4444 = vunpack.c.l.b16 %v4416
      %v4445 = vunpack.c.l.b16 %v4420
      %v4446 = vunpack.c.l.b16 %v4423
      %v4447 = vunpack.c.l.b16 %v4427
      %v4448 = vunpack.c.l.b16 %v4430
      %v4449 = vpack.c.b16 %v4434, %v4433
      %v4450 = vpack.c.b16 %v4436, %v4435
      %v4451 = vpack.c.b16 %v4438, %v4437
      %v4452 = vpack.c.b16 %v4440, %v4439
      %v4453 = vpack.c.b16 %v4442, %v4441
      %v4454 = vpack.c.b16 %v4444, %v4443
      %v4455 = vpack.c.b16 %v4446, %v4445
      %v4456 = vpack.c.b16 %v4448, %v4447
      %v4458 = vsel %vm561, %v4449, 0
      %v4461 = vsel %vm561, %v4450, 0
      %v4464 = vsel %vm561, %v4451, 0
      %v4467 = vsel %vm561, %v4452, 0
      %v4470 = vsel %vm561, %v4453, 0
      %v4473 = vsel %vm561, %v4454, 0
      %v4476 = vsel %vm561, %v4455, 0
      %v4479 = vsel %vm561, %v4456, 0
      %v4482 = vsel %vm592, %v4432, 0
      %4484 = vmatpush.bf16.msra.mxu0 0
      %4485 = vmatpush.bf16.msra.mxu0 0
      %4486 = vmatpush.bf16.msra.mxu0 0
      %4487 = vmatpush.bf16.msra.mxu0 0
      %4488 = vmatpush.bf16.msra.mxu0 0
      %4489 = vmatpush.bf16.msra.mxu0 0
      %4490 = vmatpush.bf16.msra.mxu0 0
      %4491 = vmatpush.bf16.msra.mxu0 %v4482
      %4492 = vmatmul.bf16.gmra.mxu0 %v4458
      %v4493 = vpop.f32.mrf.mxu0
      %v4494 = vadd.f32 0.0, %v4493
      %v4495 = vpop.f32.mrf.mxu0
      %v4496 = vadd.f32 0.0, %v4495
      %4497 = vmatmul.bf16.gmra.mxu0 %v4461
      %v4498 = vpop.f32.mrf.mxu0
      %v4499 = vadd.f32 0.0, %v4498
      %v4500 = vpop.f32.mrf.mxu0
      %v4501 = vadd.f32 0.0, %v4500
      %4502 = vmatmul.bf16.gmra.mxu0 %v4464
      %v4503 = vpop.f32.mrf.mxu0
      %v4504 = vadd.f32 0.0, %v4503
      %v4505 = vpop.f32.mrf.mxu0
      %v4506 = vadd.f32 0.0, %v4505
      %4507 = vmatmul.bf16.gmra.mxu0 %v4467
      %v4508 = vpop.f32.mrf.mxu0
      %v4509 = vadd.f32 0.0, %v4508
      %v4510 = vpop.f32.mrf.mxu0
      %v4511 = vadd.f32 0.0, %v4510
      %4512 = vmatmul.bf16.gmra.mxu0 %v4470
      %v4513 = vpop.f32.mrf.mxu0
      %v4514 = vadd.f32 0.0, %v4513
      %v4515 = vpop.f32.mrf.mxu0
      %v4516 = vadd.f32 0.0, %v4515
      %4517 = vmatmul.bf16.gmra.mxu0 %v4473
      %v4518 = vpop.f32.mrf.mxu0
      %v4519 = vadd.f32 0.0, %v4518
      %v4520 = vpop.f32.mrf.mxu0
      %v4521 = vadd.f32 0.0, %v4520
      %4522 = vmatmul.bf16.gmra.mxu0 %v4476
      %v4523 = vpop.f32.mrf.mxu0
      %v4524 = vadd.f32 0.0, %v4523
      %v4525 = vpop.f32.mrf.mxu0
      %v4526 = vadd.f32 0.0, %v4525
      %4527 = vmatmul.bf16.gmra.mxu0 %v4479
      %v4528 = vpop.f32.mrf.mxu0
      %v4529 = vadd.f32 0.0, %v4528
      %v4530 = vpop.f32.mrf.mxu0
      %v4531 = vadd.f32 0.0, %v4530
      %4532 = vdwg.mxu0
      %v4533 = vadd.f32 %v4327, %v4494
      %v4534 = vadd.f32 %v4328, %v4496
      %v4535 = vadd.f32 %v4329, %v4499
      %v4536 = vadd.f32 %v4330, %v4501
      %v4537 = vadd.f32 %v4331, %v4504
      %v4538 = vadd.f32 %v4332, %v4506
      %v4539 = vadd.f32 %v4333, %v4509
      %v4540 = vadd.f32 %v4334, %v4511
      %v4541 = vadd.f32 %v4335, %v4514
      %v4542 = vadd.f32 %v4336, %v4516
      %v4543 = vadd.f32 %v4337, %v4519
      %v4544 = vadd.f32 %v4338, %v4521
      %v4545 = vadd.f32 %v4339, %v4524
      %v4546 = vadd.f32 %v4340, %v4526
      %v4547 = vadd.f32 %v4341, %v4529
      %v4548 = vadd.f32 %v4342, %v4531
      %s4549 = scalar_lea.vmem [#allocation2], 24
      %v4550 = vld [vmem:[%s4549] sm:$0xf]
      %v4551 = vld [vmem:[%s4549 + $0x4] sm:$0xf]
      %v4552 = vld [vmem:[%s4549 + $0xc] sm:$0xf]
      %v4553 = vld [vmem:[%s4549 + $0x10] sm:$0xf]
      %v4554 = vld [vmem:[%s4549 + $0x18] sm:$0xf]
      %v4555 = vld [vmem:[%s4549 + $0x1c] sm:$0xf]
      %v4556 = vld [vmem:[%s4549 + $0x24] sm:$0xf]
      %v4557 = vld [vmem:[%s4549 + $0x28] sm:$0xf]
      %v4558 = vld [vmem:[%s4549 + $0x30] sm:$0xf]
      %v4559 = vld [vmem:[%s4549 + $0x34] sm:$0xf]
      %v4560 = vld [vmem:[%s4549 + $0x3c] sm:$0xf]
      %v4561 = vld [vmem:[%s4549 + $0x40] sm:$0xf]
      %v4562 = vld [vmem:[%s4549 + $0x48] sm:$0xf]
      %v4563 = vld [vmem:[%s4549 + $0x4c] sm:$0xf]
      %v4564 = vld [vmem:[%s4549 + $0x54] sm:$0xf]
      %v4565 = vld [vmem:[%s4549 + $0x58] sm:$0xf]
      %s4566 = scalar_lea.vmem %s2, 12
      %v4567 = vld [vmem:[%s4566] sm:$0x3]
      %v4584 = vunpack.c.l.b16 %v4550
      %v4585 = vunpack.c.l.b16 %v4551
      %v4586 = vunpack.c.l.b16 %v4552
      %v4587 = vunpack.c.l.b16 %v4553
      %v4588 = vunpack.c.l.b16 %v4554
      %v4589 = vunpack.c.l.b16 %v4555
      %v4590 = vunpack.c.l.b16 %v4556
      %v4591 = vunpack.c.l.b16 %v4557
      %v4592 = vunpack.c.l.b16 %v4558
      %v4593 = vunpack.c.l.b16 %v4559
      %v4594 = vunpack.c.l.b16 %v4560
      %v4595 = vunpack.c.l.b16 %v4561
      %v4596 = vunpack.c.l.b16 %v4562
      %v4597 = vunpack.c.l.b16 %v4563
      %v4598 = vunpack.c.l.b16 %v4564
      %v4599 = vunpack.c.l.b16 %v4565
      %v4600 = vpack.c.b16 %v4585, %v4584
      %v4601 = vpack.c.b16 %v4587, %v4586
      %v4602 = vpack.c.b16 %v4589, %v4588
      %v4603 = vpack.c.b16 %v4591, %v4590
      %v4604 = vpack.c.b16 %v4593, %v4592
      %v4605 = vpack.c.b16 %v4595, %v4594
      %v4606 = vpack.c.b16 %v4597, %v4596
      %v4607 = vpack.c.b16 %v4599, %v4598
      %v4609 = vsel %vm561, %v4600, 0
      %v4612 = vsel %vm561, %v4601, 0
      %v4615 = vsel %vm561, %v4602, 0
      %v4618 = vsel %vm561, %v4603, 0
      %v4621 = vsel %vm561, %v4604, 0
      %v4624 = vsel %vm561, %v4605, 0
      %v4627 = vsel %vm561, %v4606, 0
      %v4630 = vsel %vm561, %v4607, 0
      %v4633 = vsel %vm592, %v4567, 0
      %4635 = vmatpush.bf16.msra.mxu0 0
      %4636 = vmatpush.bf16.msra.mxu0 0
      %4637 = vmatpush.bf16.msra.mxu0 0
      %4638 = vmatpush.bf16.msra.mxu0 0
      %4639 = vmatpush.bf16.msra.mxu0 0
      %4640 = vmatpush.bf16.msra.mxu0 0
      %4641 = vmatpush.bf16.msra.mxu0 0
      %4642 = vmatpush.bf16.msra.mxu0 %v4633
      %4643 = vmatmul.bf16.gmra.mxu0 %v4609
      %v4644 = vpop.f32.mrf.mxu0
      %v4645 = vadd.f32 0.0, %v4644
      %v4646 = vpop.f32.mrf.mxu0
      %v4647 = vadd.f32 0.0, %v4646
      %4648 = vmatmul.bf16.gmra.mxu0 %v4612
      %v4649 = vpop.f32.mrf.mxu0
      %v4650 = vadd.f32 0.0, %v4649
      %v4651 = vpop.f32.mrf.mxu0
      %v4652 = vadd.f32 0.0, %v4651
      %4653 = vmatmul.bf16.gmra.mxu0 %v4615
      %v4654 = vpop.f32.mrf.mxu0
      %v4655 = vadd.f32 0.0, %v4654
      %v4656 = vpop.f32.mrf.mxu0
      %v4657 = vadd.f32 0.0, %v4656
      %4658 = vmatmul.bf16.gmra.mxu0 %v4618
      %v4659 = vpop.f32.mrf.mxu0
      %v4660 = vadd.f32 0.0, %v4659
      %v4661 = vpop.f32.mrf.mxu0
      %v4662 = vadd.f32 0.0, %v4661
      %4663 = vmatmul.bf16.gmra.mxu0 %v4621
      %v4664 = vpop.f32.mrf.mxu0
      %v4665 = vadd.f32 0.0, %v4664
      %v4666 = vpop.f32.mrf.mxu0
      %v4667 = vadd.f32 0.0, %v4666
      %4668 = vmatmul.bf16.gmra.mxu0 %v4624
      %v4669 = vpop.f32.mrf.mxu0
      %v4670 = vadd.f32 0.0, %v4669
      %v4671 = vpop.f32.mrf.mxu0
      %v4672 = vadd.f32 0.0, %v4671
      %4673 = vmatmul.bf16.gmra.mxu0 %v4627
      %v4674 = vpop.f32.mrf.mxu0
      %v4675 = vadd.f32 0.0, %v4674
      %v4676 = vpop.f32.mrf.mxu0
      %v4677 = vadd.f32 0.0, %v4676
      %4678 = vmatmul.bf16.gmra.mxu0 %v4630
      %v4679 = vpop.f32.mrf.mxu0
      %v4680 = vadd.f32 0.0, %v4679
      %v4681 = vpop.f32.mrf.mxu0
      %v4682 = vadd.f32 0.0, %v4681
      %4683 = vdwg.mxu0
      %v4684 = vadd.f32 %v4533, %v4645
      %v4685 = vadd.f32 %v4534, %v4647
      %v4686 = vadd.f32 %v4535, %v4650
      %v4687 = vadd.f32 %v4536, %v4652
      %v4688 = vadd.f32 %v4537, %v4655
      %v4689 = vadd.f32 %v4538, %v4657
      %v4690 = vadd.f32 %v4539, %v4660
      %v4691 = vadd.f32 %v4540, %v4662
      %v4692 = vadd.f32 %v4541, %v4665
      %v4693 = vadd.f32 %v4542, %v4667
      %v4694 = vadd.f32 %v4543, %v4670
      %v4695 = vadd.f32 %v4544, %v4672
      %v4696 = vadd.f32 %v4545, %v4675
      %v4697 = vadd.f32 %v4546, %v4677
      %v4698 = vadd.f32 %v4547, %v4680
      %v4699 = vadd.f32 %v4548, %v4682
      %v4700 = vld [vmem:[%s4549] sm:$0xf]
      %v4701 = vld [vmem:[%s4549 + $0x4] sm:$0xf]
      %v4702 = vld [vmem:[%s4549 + $0x8] sm:$0x1]
      %v4703 = vld [vmem:[%s4549 + $0xc] sm:$0xf]
      %v4704 = vld [vmem:[%s4549 + $0x10] sm:$0xf]
      %v4705 = vld [vmem:[%s4549 + $0x14] sm:$0x1]
      %v4706 = vld [vmem:[%s4549 + $0x18] sm:$0xf]
      %v4707 = vld [vmem:[%s4549 + $0x1c] sm:$0xf]
      %v4708 = vld [vmem:[%s4549 + $0x20] sm:$0x1]
      %v4709 = vld [vmem:[%s4549 + $0x24] sm:$0xf]
      %v4710 = vld [vmem:[%s4549 + $0x28] sm:$0xf]
      %v4711 = vld [vmem:[%s4549 + $0x2c] sm:$0x1]
      %v4712 = vld [vmem:[%s4549 + $0x30] sm:$0xf]
      %v4713 = vld [vmem:[%s4549 + $0x34] sm:$0xf]
      %v4714 = vld [vmem:[%s4549 + $0x38] sm:$0x1]
      %v4715 = vld [vmem:[%s4549 + $0x3c] sm:$0xf]
      %v4716 = vld [vmem:[%s4549 + $0x40] sm:$0xf]
      %v4717 = vld [vmem:[%s4549 + $0x44] sm:$0x1]
      %v4718 = vld [vmem:[%s4549 + $0x48] sm:$0xf]
      %v4719 = vld [vmem:[%s4549 + $0x4c] sm:$0xf]
      %v4720 = vld [vmem:[%s4549 + $0x50] sm:$0x1]
      %v4721 = vld [vmem:[%s4549 + $0x54] sm:$0xf]
      %v4722 = vld [vmem:[%s4549 + $0x58] sm:$0xf]
      %v4723 = vld [vmem:[%s4549 + $0x5c] sm:$0x1]
      %v4725 = vshrl.u32 %v4700, 16
      %v4727 = vrot.slane %v4725, 4
      %v4728 = vshll.u32 %v4700, 16
      %v4730 = vrot.slane %v4728, 5
      %v4731 = vor.u32 %v4727, %v4730
      %v4732 = vrot.slane %v4731, 4
      %v4734 = vshll.u32 %v4701, 16
      %v4736 = vrot.slane %v4734, 5
      %v4737 = vsel %vm288, %v4732, %v4736
      %v4738 = vshrl.u32 %v4701, 16
      %v4740 = vrot.slane %v4738, 4
      %v4741 = vor.u32 %v4740, %v4736
      %v4742 = vrot.slane %v4741, 4
      %v4744 = vshll.u32 %v4702, 16
      %v4746 = vrot.slane %v4744, 5
      %v4747 = vsel %vm288, %v4742, %v4746
      %v4749 = vshrl.u32 %v4703, 16
      %v4751 = vrot.slane %v4749, 4
      %v4752 = vshll.u32 %v4703, 16
      %v4754 = vrot.slane %v4752, 5
      %v4755 = vor.u32 %v4751, %v4754
      %v4756 = vrot.slane %v4755, 4
      %v4758 = vshll.u32 %v4704, 16
      %v4760 = vrot.slane %v4758, 5
      %v4761 = vsel %vm288, %v4756, %v4760
      %v4762 = vshrl.u32 %v4704, 16
      %v4764 = vrot.slane %v4762, 4
      %v4765 = vor.u32 %v4764, %v4760
      %v4766 = vrot.slane %v4765, 4
      %v4768 = vshll.u32 %v4705, 16
      %v4770 = vrot.slane %v4768, 5
      %v4771 = vsel %vm288, %v4766, %v4770
      %v4773 = vshrl.u32 %v4706, 16
      %v4775 = vrot.slane %v4773, 4
      %v4776 = vshll.u32 %v4706, 16
      %v4778 = vrot.slane %v4776, 5
      %v4779 = vor.u32 %v4775, %v4778
      %v4780 = vrot.slane %v4779, 4
      %v4782 = vshll.u32 %v4707, 16
      %v4784 = vrot.slane %v4782, 5
      %v4785 = vsel %vm288, %v4780, %v4784
      %v4786 = vshrl.u32 %v4707, 16
      %v4788 = vrot.slane %v4786, 4
      %v4789 = vor.u32 %v4788, %v4784
      %v4790 = vrot.slane %v4789, 4
      %v4792 = vshll.u32 %v4708, 16
      %v4794 = vrot.slane %v4792, 5
      %v4795 = vsel %vm288, %v4790, %v4794
      %v4797 = vshrl.u32 %v4709, 16
      %v4799 = vrot.slane %v4797, 4
      %v4800 = vshll.u32 %v4709, 16
      %v4802 = vrot.slane %v4800, 5
      %v4803 = vor.u32 %v4799, %v4802
      %v4804 = vrot.slane %v4803, 4
      %v4806 = vshll.u32 %v4710, 16
      %v4808 = vrot.slane %v4806, 5
      %v4809 = vsel %vm288, %v4804, %v4808
      %v4810 = vshrl.u32 %v4710, 16
      %v4812 = vrot.slane %v4810, 4
      %v4813 = vor.u32 %v4812, %v4808
      %v4814 = vrot.slane %v4813, 4
      %v4816 = vshll.u32 %v4711, 16
      %v4818 = vrot.slane %v4816, 5
      %v4819 = vsel %vm288, %v4814, %v4818
      %v4821 = vshrl.u32 %v4712, 16
      %v4823 = vrot.slane %v4821, 4
      %v4824 = vshll.u32 %v4712, 16
      %v4826 = vrot.slane %v4824, 5
      %v4827 = vor.u32 %v4823, %v4826
      %v4828 = vrot.slane %v4827, 4
      %v4830 = vshll.u32 %v4713, 16
      %v4832 = vrot.slane %v4830, 5
      %v4833 = vsel %vm288, %v4828, %v4832
      %v4834 = vshrl.u32 %v4713, 16
      %v4836 = vrot.slane %v4834, 4
      %v4837 = vor.u32 %v4836, %v4832
      %v4838 = vrot.slane %v4837, 4
      %v4840 = vshll.u32 %v4714, 16
      %v4842 = vrot.slane %v4840, 5
      %v4843 = vsel %vm288, %v4838, %v4842
      %v4845 = vshrl.u32 %v4715, 16
      %v4847 = vrot.slane %v4845, 4
      %v4848 = vshll.u32 %v4715, 16
      %v4850 = vrot.slane %v4848, 5
      %v4851 = vor.u32 %v4847, %v4850
      %v4852 = vrot.slane %v4851, 4
      %v4854 = vshll.u32 %v4716, 16
      %v4856 = vrot.slane %v4854, 5
      %v4857 = vsel %vm288, %v4852, %v4856
      %v4858 = vshrl.u32 %v4716, 16
      %v4860 = vrot.slane %v4858, 4
      %v4861 = vor.u32 %v4860, %v4856
      %v4862 = vrot.slane %v4861, 4
      %v4864 = vshll.u32 %v4717, 16
      %v4866 = vrot.slane %v4864, 5
      %v4867 = vsel %vm288, %v4862, %v4866
      %v4869 = vshrl.u32 %v4718, 16
      %v4871 = vrot.slane %v4869, 4
      %v4872 = vshll.u32 %v4718, 16
      %v4874 = vrot.slane %v4872, 5
      %v4875 = vor.u32 %v4871, %v4874
      %v4876 = vrot.slane %v4875, 4
      %v4878 = vshll.u32 %v4719, 16
      %v4880 = vrot.slane %v4878, 5
      %v4881 = vsel %vm288, %v4876, %v4880
      %v4882 = vshrl.u32 %v4719, 16
      %v4884 = vrot.slane %v4882, 4
      %v4885 = vor.u32 %v4884, %v4880
      %v4886 = vrot.slane %v4885, 4
      %v4888 = vshll.u32 %v4720, 16
      %v4890 = vrot.slane %v4888, 5
      %v4891 = vsel %vm288, %v4886, %v4890
      %v4893 = vshrl.u32 %v4721, 16
      %v4895 = vrot.slane %v4893, 4
      %v4896 = vshll.u32 %v4721, 16
      %v4898 = vrot.slane %v4896, 5
      %v4899 = vor.u32 %v4895, %v4898
      %v4900 = vrot.slane %v4899, 4
      %v4902 = vshll.u32 %v4722, 16
      %v4904 = vrot.slane %v4902, 5
      %v4905 = vsel %vm288, %v4900, %v4904
      %v4906 = vshrl.u32 %v4722, 16
      %v4908 = vrot.slane %v4906, 4
      %v4909 = vor.u32 %v4908, %v4904
      %v4910 = vrot.slane %v4909, 4
      %v4912 = vshll.u32 %v4723, 16
      %v4914 = vrot.slane %v4912, 5
      %v4915 = vsel %vm288, %v4910, %v4914
      %s4916 = scalar_lea.vmem %s2, 14
      %v4917 = vld [vmem:[%s4916] sm:$0x3]
      %v4918 = vunpack.c.l.b16 %v4737
      %v4919 = vunpack.c.l.b16 %v4747
      %v4920 = vunpack.c.l.b16 %v4761
      %v4921 = vunpack.c.l.b16 %v4771
      %v4922 = vunpack.c.l.b16 %v4785
      %v4923 = vunpack.c.l.b16 %v4795
      %v4924 = vunpack.c.l.b16 %v4809
      %v4925 = vunpack.c.l.b16 %v4819
      %v4926 = vunpack.c.l.b16 %v4833
      %v4927 = vunpack.c.l.b16 %v4843
      %v4928 = vunpack.c.l.b16 %v4857
      %v4929 = vunpack.c.l.b16 %v4867
      %v4930 = vunpack.c.l.b16 %v4881
      %v4931 = vunpack.c.l.b16 %v4891
      %v4932 = vunpack.c.l.b16 %v4905
      %v4933 = vunpack.c.l.b16 %v4915
      %v4934 = vpack.c.b16 %v4919, %v4918
      %v4935 = vpack.c.b16 %v4921, %v4920
      %v4936 = vpack.c.b16 %v4923, %v4922
      %v4937 = vpack.c.b16 %v4925, %v4924
      %v4938 = vpack.c.b16 %v4927, %v4926
      %v4939 = vpack.c.b16 %v4929, %v4928
      %v4940 = vpack.c.b16 %v4931, %v4930
      %v4941 = vpack.c.b16 %v4933, %v4932
      %v4943 = vsel %vm561, %v4934, 0
      %v4946 = vsel %vm561, %v4935, 0
      %v4949 = vsel %vm561, %v4936, 0
      %v4952 = vsel %vm561, %v4937, 0
      %v4955 = vsel %vm561, %v4938, 0
      %v4958 = vsel %vm561, %v4939, 0
      %v4961 = vsel %vm561, %v4940, 0
      %v4964 = vsel %vm561, %v4941, 0
      %v4967 = vsel %vm592, %v4917, 0
      %4969 = vmatpush.bf16.msra.mxu0 0
      %4970 = vmatpush.bf16.msra.mxu0 0
      %4971 = vmatpush.bf16.msra.mxu0 0
      %4972 = vmatpush.bf16.msra.mxu0 0
      %4973 = vmatpush.bf16.msra.mxu0 0
      %4974 = vmatpush.bf16.msra.mxu0 0
      %4975 = vmatpush.bf16.msra.mxu0 0
      %4976 = vmatpush.bf16.msra.mxu0 %v4967
      %4977 = vmatmul.bf16.gmra.mxu0 %v4943
      %v4978 = vpop.f32.mrf.mxu0
      %v4979 = vadd.f32 0.0, %v4978
      %v4980 = vpop.f32.mrf.mxu0
      %v4981 = vadd.f32 0.0, %v4980
      %4982 = vmatmul.bf16.gmra.mxu0 %v4946
      %v4983 = vpop.f32.mrf.mxu0
      %v4984 = vadd.f32 0.0, %v4983
      %v4985 = vpop.f32.mrf.mxu0
      %v4986 = vadd.f32 0.0, %v4985
      %4987 = vmatmul.bf16.gmra.mxu0 %v4949
      %v4988 = vpop.f32.mrf.mxu0
      %v4989 = vadd.f32 0.0, %v4988
      %v4990 = vpop.f32.mrf.mxu0
      %v4991 = vadd.f32 0.0, %v4990
      %4992 = vmatmul.bf16.gmra.mxu0 %v4952
      %v4993 = vpop.f32.mrf.mxu0
      %v4994 = vadd.f32 0.0, %v4993
      %v4995 = vpop.f32.mrf.mxu0
      %v4996 = vadd.f32 0.0, %v4995
      %4997 = vmatmul.bf16.gmra.mxu0 %v4955
      %v4998 = vpop.f32.mrf.mxu0
      %v4999 = vadd.f32 0.0, %v4998
      %v5000 = vpop.f32.mrf.mxu0
      %v5001 = vadd.f32 0.0, %v5000
      %5002 = vmatmul.bf16.gmra.mxu0 %v4958
      %v5003 = vpop.f32.mrf.mxu0
      %v5004 = vadd.f32 0.0, %v5003
      %v5005 = vpop.f32.mrf.mxu0
      %v5006 = vadd.f32 0.0, %v5005
      %5007 = vmatmul.bf16.gmra.mxu0 %v4961
      %v5008 = vpop.f32.mrf.mxu0
      %v5009 = vadd.f32 0.0, %v5008
      %v5010 = vpop.f32.mrf.mxu0
      %v5011 = vadd.f32 0.0, %v5010
      %5012 = vmatmul.bf16.gmra.mxu0 %v4964
      %v5013 = vpop.f32.mrf.mxu0
      %v5014 = vadd.f32 0.0, %v5013
      %v5015 = vpop.f32.mrf.mxu0
      %v5016 = vadd.f32 0.0, %v5015
      %5017 = vdwg.mxu0
      %v5018 = vadd.f32 %v4684, %v4979
      %v5019 = vadd.f32 %v4685, %v4981
      %v5020 = vadd.f32 %v4686, %v4984
      %v5021 = vadd.f32 %v4687, %v4986
      %v5022 = vadd.f32 %v4688, %v4989
      %v5023 = vadd.f32 %v4689, %v4991
      %v5024 = vadd.f32 %v4690, %v4994
      %v5025 = vadd.f32 %v4691, %v4996
      %v5026 = vadd.f32 %v4692, %v4999
      %v5027 = vadd.f32 %v4693, %v5001
      %v5028 = vadd.f32 %v4694, %v5004
      %v5029 = vadd.f32 %v4695, %v5006
      %v5030 = vadd.f32 %v4696, %v5009
      %v5031 = vadd.f32 %v4697, %v5011
      %v5032 = vadd.f32 %v4698, %v5014
      %v5033 = vadd.f32 %v4699, %v5016
      %v5034 = vld [vmem:[%s4549] sm:$0xe]
      %v5035 = vld [vmem:[%s4549 + $0xc] sm:$0xe]
      %v5036 = vld [vmem:[%s4549 + $0x18] sm:$0xe]
      %v5037 = vld [vmem:[%s4549 + $0x24] sm:$0xe]
      %v5038 = vld [vmem:[%s4549 + $0x30] sm:$0xe]
      %v5039 = vld [vmem:[%s4549 + $0x3c] sm:$0xe]
      %v5040 = vld [vmem:[%s4549 + $0x48] sm:$0xe]
      %v5041 = vld [vmem:[%s4549 + $0x54] sm:$0xe]
      %v5066 = vrot.slane %v5034, 5
      %v5067 = vrot.slane %v5066, 4
      %v5068 = vrot.slane %v4701, 5
      %v5069 = vsel %vm829, %v5067, %v5068
      %v5070 = vrot.slane %v5068, 4
      %v5071 = vrot.slane %v4702, 5
      %v5072 = vsel %vm829, %v5070, %v5071
      %v5073 = vrot.slane %v5035, 5
      %v5074 = vrot.slane %v5073, 4
      %v5075 = vrot.slane %v4704, 5
      %v5076 = vsel %vm829, %v5074, %v5075
      %v5077 = vrot.slane %v5075, 4
      %v5078 = vrot.slane %v4705, 5
      %v5079 = vsel %vm829, %v5077, %v5078
      %v5080 = vrot.slane %v5036, 5
      %v5081 = vrot.slane %v5080, 4
      %v5082 = vrot.slane %v4707, 5
      %v5083 = vsel %vm829, %v5081, %v5082
      %v5084 = vrot.slane %v5082, 4
      %v5085 = vrot.slane %v4708, 5
      %v5086 = vsel %vm829, %v5084, %v5085
      %v5087 = vrot.slane %v5037, 5
      %v5088 = vrot.slane %v5087, 4
      %v5089 = vrot.slane %v4710, 5
      %v5090 = vsel %vm829, %v5088, %v5089
      %v5091 = vrot.slane %v5089, 4
      %v5092 = vrot.slane %v4711, 5
      %v5093 = vsel %vm829, %v5091, %v5092
      %v5094 = vrot.slane %v5038, 5
      %v5095 = vrot.slane %v5094, 4
      %v5096 = vrot.slane %v4713, 5
      %v5097 = vsel %vm829, %v5095, %v5096
      %v5098 = vrot.slane %v5096, 4
      %v5099 = vrot.slane %v4714, 5
      %v5100 = vsel %vm829, %v5098, %v5099
      %v5101 = vrot.slane %v5039, 5
      %v5102 = vrot.slane %v5101, 4
      %v5103 = vrot.slane %v4716, 5
      %v5104 = vsel %vm829, %v5102, %v5103
      %v5105 = vrot.slane %v5103, 4
      %v5106 = vrot.slane %v4717, 5
      %v5107 = vsel %vm829, %v5105, %v5106
      %v5108 = vrot.slane %v5040, 5
      %v5109 = vrot.slane %v5108, 4
      %v5110 = vrot.slane %v4719, 5
      %v5111 = vsel %vm829, %v5109, %v5110
      %v5112 = vrot.slane %v5110, 4
      %v5113 = vrot.slane %v4720, 5
      %v5114 = vsel %vm829, %v5112, %v5113
      %v5115 = vrot.slane %v5041, 5
      %v5116 = vrot.slane %v5115, 4
      %v5117 = vrot.slane %v4722, 5
      %v5118 = vsel %vm829, %v5116, %v5117
      %v5119 = vrot.slane %v5117, 4
      %v5120 = vrot.slane %v4723, 5
      %v5121 = vsel %vm829, %v5119, %v5120
      %s5122 = scalar_lea.vmem %s2, 16
      %v5123 = vld [vmem:[%s5122] sm:$0x3]
      %v5124 = vunpack.c.l.b16 %v5069
      %v5125 = vunpack.c.l.b16 %v5072
      %v5126 = vunpack.c.l.b16 %v5076
      %v5127 = vunpack.c.l.b16 %v5079
      %v5128 = vunpack.c.l.b16 %v5083
      %v5129 = vunpack.c.l.b16 %v5086
      %v5130 = vunpack.c.l.b16 %v5090
      %v5131 = vunpack.c.l.b16 %v5093
      %v5132 = vunpack.c.l.b16 %v5097
      %v5133 = vunpack.c.l.b16 %v5100
      %v5134 = vunpack.c.l.b16 %v5104
      %v5135 = vunpack.c.l.b16 %v5107
      %v5136 = vunpack.c.l.b16 %v5111
      %v5137 = vunpack.c.l.b16 %v5114
      %v5138 = vunpack.c.l.b16 %v5118
      %v5139 = vunpack.c.l.b16 %v5121
      %v5140 = vpack.c.b16 %v5125, %v5124
      %v5141 = vpack.c.b16 %v5127, %v5126
      %v5142 = vpack.c.b16 %v5129, %v5128
      %v5143 = vpack.c.b16 %v5131, %v5130
      %v5144 = vpack.c.b16 %v5133, %v5132
      %v5145 = vpack.c.b16 %v5135, %v5134
      %v5146 = vpack.c.b16 %v5137, %v5136
      %v5147 = vpack.c.b16 %v5139, %v5138
      %v5149 = vsel %vm561, %v5140, 0
      %v5152 = vsel %vm561, %v5141, 0
      %v5155 = vsel %vm561, %v5142, 0
      %v5158 = vsel %vm561, %v5143, 0
      %v5161 = vsel %vm561, %v5144, 0
      %v5164 = vsel %vm561, %v5145, 0
      %v5167 = vsel %vm561, %v5146, 0
      %v5170 = vsel %vm561, %v5147, 0
      %v5173 = vsel %vm592, %v5123, 0
      %5175 = vmatpush.bf16.msra.mxu0 0
      %5176 = vmatpush.bf16.msra.mxu0 0
      %5177 = vmatpush.bf16.msra.mxu0 0
      %5178 = vmatpush.bf16.msra.mxu0 0
      %5179 = vmatpush.bf16.msra.mxu0 0
      %5180 = vmatpush.bf16.msra.mxu0 0
      %5181 = vmatpush.bf16.msra.mxu0 0
      %5182 = vmatpush.bf16.msra.mxu0 %v5173
      %5183 = vmatmul.bf16.gmra.mxu0 %v5149
      %v5184 = vpop.f32.mrf.mxu0
      %v5185 = vadd.f32 0.0, %v5184
      %v5186 = vpop.f32.mrf.mxu0
      %v5187 = vadd.f32 0.0, %v5186
      %5188 = vmatmul.bf16.gmra.mxu0 %v5152
      %v5189 = vpop.f32.mrf.mxu0
      %v5190 = vadd.f32 0.0, %v5189
      %v5191 = vpop.f32.mrf.mxu0
      %v5192 = vadd.f32 0.0, %v5191
      %5193 = vmatmul.bf16.gmra.mxu0 %v5155
      %v5194 = vpop.f32.mrf.mxu0
      %v5195 = vadd.f32 0.0, %v5194
      %v5196 = vpop.f32.mrf.mxu0
      %v5197 = vadd.f32 0.0, %v5196
      %5198 = vmatmul.bf16.gmra.mxu0 %v5158
      %v5199 = vpop.f32.mrf.mxu0
      %v5200 = vadd.f32 0.0, %v5199
      %v5201 = vpop.f32.mrf.mxu0
      %v5202 = vadd.f32 0.0, %v5201
      %5203 = vmatmul.bf16.gmra.mxu0 %v5161
      %v5204 = vpop.f32.mrf.mxu0
      %v5205 = vadd.f32 0.0, %v5204
      %v5206 = vpop.f32.mrf.mxu0
      %v5207 = vadd.f32 0.0, %v5206
      %5208 = vmatmul.bf16.gmra.mxu0 %v5164
      %v5209 = vpop.f32.mrf.mxu0
      %v5210 = vadd.f32 0.0, %v5209
      %v5211 = vpop.f32.mrf.mxu0
      %v5212 = vadd.f32 0.0, %v5211
      %5213 = vmatmul.bf16.gmra.mxu0 %v5167
      %v5214 = vpop.f32.mrf.mxu0
      %v5215 = vadd.f32 0.0, %v5214
      %v5216 = vpop.f32.mrf.mxu0
      %v5217 = vadd.f32 0.0, %v5216
      %5218 = vmatmul.bf16.gmra.mxu0 %v5170
      %v5219 = vpop.f32.mrf.mxu0
      %v5220 = vadd.f32 0.0, %v5219
      %v5221 = vpop.f32.mrf.mxu0
      %v5222 = vadd.f32 0.0, %v5221
      %5223 = vdwg.mxu0
      %v5224 = vadd.f32 %v5018, %v5185
      %v5225 = vadd.f32 %v5019, %v5187
      %v5226 = vadd.f32 %v5020, %v5190
      %v5227 = vadd.f32 %v5021, %v5192
      %v5228 = vadd.f32 %v5022, %v5195
      %v5229 = vadd.f32 %v5023, %v5197
      %v5230 = vadd.f32 %v5024, %v5200
      %v5231 = vadd.f32 %v5025, %v5202
      %v5232 = vadd.f32 %v5026, %v5205
      %v5233 = vadd.f32 %v5027, %v5207
      %v5234 = vadd.f32 %v5028, %v5210
      %v5235 = vadd.f32 %v5029, %v5212
      %v5236 = vadd.f32 %v5030, %v5215
      %v5237 = vadd.f32 %v5031, %v5217
      %v5238 = vadd.f32 %v5032, %v5220
      %v5239 = vadd.f32 %v5033, %v5222
      %v5240 = vld [vmem:[%s4] sm:$0x1]
      %v5242 = vperm.slane %v5240, 0
      %v5244 = vadd.f32 %v5224, %v5242
      %v5245 = vadd.f32 %v5225, %v5242
      %v5246 = vadd.f32 %v5226, %v5242
      %v5247 = vadd.f32 %v5227, %v5242
      %v5248 = vadd.f32 %v5228, %v5242
      %v5249 = vadd.f32 %v5229, %v5242
      %v5250 = vadd.f32 %v5230, %v5242
      %v5251 = vadd.f32 %v5231, %v5242
      %v5252 = vadd.f32 %v5232, %v5242
      %v5253 = vadd.f32 %v5233, %v5242
      %v5254 = vadd.f32 %v5234, %v5242
      %v5255 = vadd.f32 %v5235, %v5242
      %v5256 = vadd.f32 %v5236, %v5242
      %v5257 = vadd.f32 %v5237, %v5242
      %v5258 = vadd.f32 %v5238, %v5242
      %v5259 = vadd.f32 %v5239, %v5242
      %vm5284 = vcmask 1046528
      %v5285 = vrot.slane %v3201, 1
      %v5286 = vrot.slane %v3202, 1
      %v5287 = vsel %vm5284, %v5285, %v5286
      %v5288 = vrot.slane %v3203, 1
      %v5289 = vsel %vm5284, %v5286, %v5288
      %v5290 = vrot.slane %v3204, 1
      %v5291 = vrot.slane %v3205, 1
      %v5292 = vsel %vm5284, %v5290, %v5291
      %v5293 = vrot.slane %v3206, 1
      %v5294 = vsel %vm5284, %v5291, %v5293
      %v5295 = vrot.slane %v3207, 1
      %v5296 = vrot.slane %v3208, 1
      %v5297 = vsel %vm5284, %v5295, %v5296
      %v5298 = vrot.slane %v3209, 1
      %v5299 = vsel %vm5284, %v5296, %v5298
      %v5300 = vrot.slane %v3210, 1
      %v5301 = vrot.slane %v3211, 1
      %v5302 = vsel %vm5284, %v5300, %v5301
      %v5303 = vrot.slane %v3212, 1
      %v5304 = vsel %vm5284, %v5301, %v5303
      %v5305 = vrot.slane %v3213, 1
      %v5306 = vrot.slane %v3214, 1
      %v5307 = vsel %vm5284, %v5305, %v5306
      %v5308 = vrot.slane %v3215, 1
      %v5309 = vsel %vm5284, %v5306, %v5308
      %v5310 = vrot.slane %v3216, 1
      %v5311 = vrot.slane %v3217, 1
      %v5312 = vsel %vm5284, %v5310, %v5311
      %v5313 = vrot.slane %v3218, 1
      %v5314 = vsel %vm5284, %v5311, %v5313
      %v5315 = vrot.slane %v3219, 1
      %v5316 = vrot.slane %v3220, 1
      %v5317 = vsel %vm5284, %v5315, %v5316
      %v5318 = vrot.slane %v3221, 1
      %v5319 = vsel %vm5284, %v5316, %v5318
      %v5320 = vrot.slane %v3222, 1
      %v5321 = vrot.slane %v3223, 1
      %v5322 = vsel %vm5284, %v5320, %v5321
      %v5323 = vrot.slane %v3224, 1
      %v5324 = vsel %vm5284, %v5321, %v5323
      %v5341 = vadd.f32 %v5244, %v5287
      %v5342 = vadd.f32 %v5245, %v5289
      %v5343 = vadd.f32 %v5246, %v5292
      %v5344 = vadd.f32 %v5247, %v5294
      %v5345 = vadd.f32 %v5248, %v5297
      %v5346 = vadd.f32 %v5249, %v5299
      %v5347 = vadd.f32 %v5250, %v5302
      %v5348 = vadd.f32 %v5251, %v5304
      %v5349 = vadd.f32 %v5252, %v5307
      %v5350 = vadd.f32 %v5253, %v5309
      %v5351 = vadd.f32 %v5254, %v5312
      %v5352 = vadd.f32 %v5255, %v5314
      %v5353 = vadd.f32 %v5256, %v5317
      %v5354 = vadd.f32 %v5257, %v5319
      %v5355 = vadd.f32 %v5258, %v5322
      %v5356 = vadd.f32 %v5259, %v5324
      %v5357 = vmax.f32 %v5341, 0.0
      %v5358 = vmax.f32 %v5342, 0.0
      %v5359 = vmax.f32 %v5343, 0.0
      %v5360 = vmax.f32 %v5344, 0.0
      %v5361 = vmax.f32 %v5345, 0.0
      %v5362 = vmax.f32 %v5346, 0.0
      %v5363 = vmax.f32 %v5347, 0.0
      %v5364 = vmax.f32 %v5348, 0.0
      %v5365 = vmax.f32 %v5349, 0.0
      %v5366 = vmax.f32 %v5350, 0.0
      %v5367 = vmax.f32 %v5351, 0.0
      %v5368 = vmax.f32 %v5352, 0.0
      %v5369 = vmax.f32 %v5353, 0.0
      %v5370 = vmax.f32 %v5354, 0.0
      %v5371 = vmax.f32 %v5355, 0.0
      %v5372 = vmax.f32 %v5356, 0.0
      %5373 = vst.msk [vmem:[%s248] sm:$0xff] %vm561, %v5357
      %5374 = vst.msk [vmem:[%s248 + $0x8] sm:$0xff] %vm561, %v5358
      %5375 = vst.msk [vmem:[%s248 + $0x10] sm:$0xff] %vm561, %v5359
      %5376 = vst.msk [vmem:[%s248 + $0x18] sm:$0xff] %vm561, %v5360
      %5377 = vst.msk [vmem:[%s248 + $0x20] sm:$0xff] %vm561, %v5361
      %5378 = vst.msk [vmem:[%s248 + $0x28] sm:$0xff] %vm561, %v5362
      %5379 = vst.msk [vmem:[%s248 + $0x30] sm:$0xff] %vm561, %v5363
      %5380 = vst.msk [vmem:[%s248 + $0x38] sm:$0xff] %vm561, %v5364
      %5381 = vst.msk [vmem:[%s248 + $0x40] sm:$0xff] %vm561, %v5365
      %5382 = vst.msk [vmem:[%s248 + $0x48] sm:$0xff] %vm561, %v5366
      %5383 = vst.msk [vmem:[%s248 + $0x50] sm:$0xff] %vm561, %v5367
      %5384 = vst.msk [vmem:[%s248 + $0x58] sm:$0xff] %vm561, %v5368
      %5385 = vst.msk [vmem:[%s248 + $0x60] sm:$0xff] %vm561, %v5369
      %5386 = vst.msk [vmem:[%s248 + $0x68] sm:$0xff] %vm561, %v5370
      %5387 = vst.msk [vmem:[%s248 + $0x70] sm:$0xff] %vm561, %v5371
      %5388 = vst.msk [vmem:[%s248 + $0x78] sm:$0xff] %vm561, %v5372
      %s5389 = smul.u32 8, %s21
      %p5390 = scmp.lt.s32.totalorder %s20, 1
      %s5391 = scalar_select %p5390, %s20, 1
      %p5392 = scmp.lt.s32.totalorder %s5389, 15
      %s5393 = scalar_select %p5392, %s5389, 15
      %s5394 = smul.addr %s5393, 2
      %s5395 = smul.addr %s5391, 32
      %s5396 = sadd.s32 %s5394, %s5395
      %s5397 = smul.addr %s5396, 8
      %s5398 = scalar_lea.vmem %s5, %s5397
      // Predicated region
      $region49: #{tpu_custom_call.1} parent=39 // pred_check
        %p5399 = pneg %p158
      $region50: #{tpu_custom_call.1} parent=39 // pred_check_branch
        %5401 = sbr.rel (%p5399) target = $region52
      $region51: #{tpu_custom_call.1} parent=39 // pred_region
        %s5402 = smul.u32 8, %s21
      $region52: #{tpu_custom_call.1} parent=39 // pred_fallthru
        _
    $region40: #{tpu_custom_call.1} parent=5 // pred_fallthru
      _
    %p5403 = scmp.le.s32.totalorder 2, %s11
    // Predicated region
    $region53: #{tpu_custom_call.1} parent=5 // pred_check
      %p5404 = pneg %p5403
    $region54: #{tpu_custom_call.1} parent=5 // pred_check_branch
      %5406 = sbr.rel (%p5404) target = $region56
    $region55: #{tpu_custom_call.1} parent=5 // pred_region
      %s5407 = ssub.s32 %s11, 2
      // Predicated region
      $region57: #{tpu_custom_call.1} parent=55 // pred_check
        %p5408 = pneg %p164
      $region58: #{tpu_custom_call.1} parent=55 // pred_check_branch
        %5410 = sbr.rel (%p5408) target = $region60
      $region59: #{tpu_custom_call.1} parent=55 // pred_region
        %s5411 = smul.u32 8, %s23
        %p5412 = scmp.lt.s32.totalorder %s22, 1
        %s5413 = scalar_select %p5412, %s22, 1
        %p5414 = scmp.lt.s32.totalorder %s5411, 15
        %s5415 = scalar_select %p5414, %s5411, 15
        %s5416 = smul.addr %s5415, 2
        %s5417 = smul.addr %s5413, 32
        %s5418 = sadd.s32 %s5416, %s5417
        %s5419 = smul.addr %s5418, 8
        %s5420 = scalar_lea.vmem %s5, %s5419
      $region60: #{tpu_custom_call.1} parent=55 // pred_fallthru
        _
    $region56: #{tpu_custom_call.1} parent=5 // pred_fallthru
      _
  $region6: #{tpu_custom_call.1} parent=0 // loop_footer
    %s15 = sadd.s32 1, %s11
  $region7: #{tpu_custom_call.1} parent=0 // loop_footer_branch
    %10 = sbr.rel target = $region3
  $region8: #{tpu_custom_call.1} parent=0 // loop_exit
    _

</llo_original>
